<compile_context>
chip_gen: v7x
topology: tpu7x:2x2x1
jax: 0.10.0
libtpu: 0.0.40
codegen_flags: <defaults>
</compile_context>

<pallas_src>
import jax
import jax.numpy as jnp
import numpy as np
from jax import lax
from jax.experimental import pallas as pl
from jax.experimental.pallas import tpu as pltpu

LANE = 128


def _round_up(x, m):
    return ((x + m - 1) // m) * m


def conv_out_dims(H, W):
    h1, w1 = (H - 8) // 4 + 1, (W - 8) // 4 + 1
    h2, w2 = (h1 - 4) // 2 + 1, (w1 - 4) // 2 + 1
    h3, w3 = h2 - 2, w2 - 2
    return (h1, w1), (h2, w2), (h3, w3)


# ----------------------------------------------------------------------------
# Tiled (training-batch) path: im2col + Pallas matmul kernels
# ----------------------------------------------------------------------------
def _matmul_bias_relu_kernel(x_ref, w_ref, b_ref, o_ref):
    acc = jnp.dot(x_ref[...], w_ref[...], preferred_element_type=jnp.float32)
    o_ref[...] = jnp.maximum(acc + b_ref[...], 0.0).astype(o_ref.dtype)


def _pick_tile_m(M, tile_m):
    """Big tiles to amortize per-step overhead; split M in two when it would
    otherwise collapse to a single grid step (so "parallel" can use both
    TensorCores on v7x)."""
    if M > tile_m:
        return tile_m
    if M >= 512:
        half = _round_up((M + 1) // 2, 8)
        return min(half, M)
    return M


def matmul_bias_relu(x, w, b, *, tile_m=2048, out_dtype=jnp.bfloat16):
    """relu(x @ w + b); x:[M,K] bf16, w:[K,N] bf16, b:[1,N] f32 -> [M,N]."""
    M, K = x.shape
    _, N = w.shape
    tm = _pick_tile_m(M, tile_m)
    grid_m = pl.cdiv(M, tm)
    flops = 2 * M * K * N
    bytes_accessed = (M * K + K * N + M * N) * 2 + N * 4
    return pl.pallas_call(
        _matmul_bias_relu_kernel,
        out_shape=jax.ShapeDtypeStruct((M, N), out_dtype),
        grid=(grid_m,),
        in_specs=[
            pl.BlockSpec((tm, K), lambda i: (i, 0)),
            pl.BlockSpec((K, N), lambda i: (0, 0)),
            pl.BlockSpec((1, N), lambda i: (0, 0)),
        ],
        out_specs=pl.BlockSpec((tm, N), lambda i: (i, 0)),
        compiler_params=pltpu.CompilerParams(
            dimension_semantics=("parallel",),
            vmem_limit_bytes=32 * 1024 * 1024),
        cost_estimate=pl.CostEstimate(
            flops=flops, transcendentals=0, bytes_accessed=bytes_accessed),
    )(x, w, b)


def _head_kernel(x_ref, w1_ref, b1_ref, w2_ref, b2_ref, o_ref):
    h = jnp.dot(x_ref[...], w1_ref[...], preferred_element_type=jnp.float32)
    h = jnp.maximum(h + b1_ref[...], 0.0)            # hidden stays f32
    q = jnp.dot(h, w2_ref[...].astype(jnp.float32),
                preferred_element_type=jnp.float32)
    o_ref[...] = (q + b2_ref[...]).astype(o_ref.dtype)


def dqn_head(x, w1, b1, w2, b2, *, tile_b=2048):
    """q = relu(x @ w1 + b1) @ w2 + b2; fc2 already padded to 128 lanes."""
    B, F = x.shape
    H = w1.shape[1]
    Ap = w2.shape[1]
    tb = _pick_tile_m(B, tile_b)
    grid_b = pl.cdiv(B, tb)
    flops = 2 * B * F * H + 2 * B * H * Ap
    bytes_accessed = (B * F + F * H + H * Ap) * 2 + (H + Ap) * 4 + B * Ap * 4
    return pl.pallas_call(
        _head_kernel,
        out_shape=jax.ShapeDtypeStruct((B, Ap), jnp.float32),
        grid=(grid_b,),
        in_specs=[
            pl.BlockSpec((tb, F), lambda i: (i, 0)),
            pl.BlockSpec((F, H), lambda i: (0, 0)),
            pl.BlockSpec((1, H), lambda i: (0, 0)),
            pl.BlockSpec((H, Ap), lambda i: (0, 0)),
            pl.BlockSpec((1, Ap), lambda i: (0, 0)),
        ],
        out_specs=pl.BlockSpec((tb, Ap), lambda i: (i, 0)),
        compiler_params=pltpu.CompilerParams(
            dimension_semantics=("parallel",),
            vmem_limit_bytes=32 * 1024 * 1024),
        cost_estimate=pl.CostEstimate(
            flops=flops, transcendentals=0, bytes_accessed=bytes_accessed),
    )(x, w1, b1, w2, b2)


def im2col_nhwc(x, k, s):
    """VALID kxk patches, stride s, NHWC. Feature order = (kh, kw, c)."""
    B, H, W, C = x.shape
    OH = (H - k) // s + 1
    OW = (W - k) // s + 1
    cols = []
    for kh in range(k):
        for kw in range(k):
            cols.append(x[:, kh:kh + s * OH:s, kw:kw + s * OW:s, :])
    patches = jnp.concatenate(cols, axis=-1)
    return patches.reshape(B * OH * OW, k * k * C), OH, OW


def dqn_forward_tiled(fast, state_nchw, n_actions):
    B = state_nchw.shape[0]
    x = state_nchw.transpose(0, 2, 3, 1).astype(jnp.bfloat16)
    p1, oh1, ow1 = im2col_nhwc(x, 8, 4)
    a1 = matmul_bias_relu(p1, fast['w1m'], fast['b1']).reshape(B, oh1, ow1, -1)
    p2, oh2, ow2 = im2col_nhwc(a1, 4, 2)
    a2 = matmul_bias_relu(p2, fast['w2m'], fast['b2']).reshape(B, oh2, ow2, -1)
    p3, oh3, ow3 = im2col_nhwc(a2, 3, 1)
    a3 = matmul_bias_relu(p3, fast['w3m'], fast['b3']).reshape(B, oh3, ow3, -1)
    flat = a3.reshape(B, -1)                     # NHWC flatten (fc1 rows permuted)
    q = dqn_head(flat, fast['fc1_w'], fast['fc1_b'],
                 fast['fc2_w'], fast['fc2_b'])
    return q[:, :n_actions]


# ----------------------------------------------------------------------------
# Fused (inference-batch) path: whole forward in one pallas_call over batch
# ----------------------------------------------------------------------------
def _make_fused_kernel(conv_cfg):
    """conv_cfg: tuple of (kernel, stride, out_rows) per conv layer."""

    def kernel(x_ref, w1_ref, b1_ref, w2_ref, b2_ref, w3_ref, b3_ref,
               f1_ref, f1b_ref, f2_ref, f2b_ref, o_ref):

        def conv(x2d, w_r, b_r, k, s, oh):
            # x2d: [H_in, W_in*C_in]; w_r: [k, W_in*C_in, OW*OC] (W-unfold
            # baked into the weight); b_r: [1, OW*OC].
            n_out = w_r.shape[2]
            hs = x2d.shape[0] - k + 1           # stride-1-in-H output rows
            acc = jnp.zeros((hs, n_out), jnp.float32)
            for kh in range(k):
                acc = acc + jnp.dot(x2d[kh:kh + hs, :], w_r[kh],
                                    preferred_element_type=jnp.float32)
            if s > 1:                           # keep rows 0, s, 2s, ...
                acc = jnp.concatenate(
                    [acc[i * s:i * s + 1, :] for i in range(oh)], axis=0)
            return jnp.maximum(acc + b_r[...], 0.0).astype(jnp.bfloat16)

        a = x_ref[0]                            # [H, W*C] bf16, one image
        for (k, s, oh), w_r, b_r in zip(conv_cfg,
                                        (w1_ref, w2_ref, w3_ref),
                                        (b1_ref, b2_ref, b3_ref)):
            a = conv(a, w_r, b_r, k, s, oh)

        # fc1 as a sum of per-output-row dots (no in-kernel reshape), f32 hidden.
        h = jnp.zeros((1, f1_ref.shape[2]), jnp.float32)
        for r in range(f1_ref.shape[0]):
            h = h + jnp.dot(a[r:r + 1, :], f1_ref[r],
                            preferred_element_type=jnp.float32)
        h = jnp.maximum(h + f1b_ref[...], 0.0)
        q = jnp.dot(h, f2_ref[...].astype(jnp.float32),
                    preferred_element_type=jnp.float32) + f2b_ref[...]
        o_ref[0, :, :] = q.astype(o_ref.dtype)

    return kernel


def dqn_forward_fused(fast, state_nchw, n_actions):
    B, C, H, W = state_nchw.shape
    (oh1, _), (oh2, _), (oh3, _) = conv_out_dims(H, W)
    # TODO(synk): fold this transpose + cast into the kernel's input DMA.
    x2d = state_nchw.transpose(0, 2, 3, 1).reshape(B, H, W * C)
    x2d = x2d.astype(jnp.bfloat16)

    conv_cfg = ((8, 4, oh1), (4, 2, oh2), (3, 1, oh3))
    kernel = _make_fused_kernel(conv_cfg)
    Ap = fast['f_fc2_w'].shape[1]

    def mm_flops(m, k, n):
        return 2 * m * k * n

    n1, n2, n3 = (fast['f_w1'].shape[2], fast['f_w2'].shape[2],
                  fast['f_w3'].shape[2])
    flops_img = (8 * mm_flops(H - 7, W * C, n1)
                 + 4 * mm_flops(oh1 - 3, n1, n2)
                 + 3 * mm_flops(oh2 - 2, n2, n3)
                 + oh3 * mm_flops(1, fast['f_fc1_w'].shape[1], 512)
                 + mm_flops(1, 512, Ap))
    weight_bytes = sum(int(np.prod(fast[k].shape)) * 2 for k in
                       ('f_w1', 'f_w2', 'f_w3', 'f_fc1_w', 'f_fc2_w'))
    cost = pl.CostEstimate(
        flops=int(B * flops_img), transcendentals=0,
        bytes_accessed=int(B * (H * W * C * 2 + Ap * 4) + weight_bytes))

    c3 = lambda b: (0, 0, 0)
    c2 = lambda b: (0, 0)
    q = pl.pallas_call(
        kernel,
        out_shape=jax.ShapeDtypeStruct((B, 1, Ap), jnp.float32),
        grid=(B,),
        in_specs=[
            pl.BlockSpec((1, H, W * C), lambda b: (b, 0, 0)),
            pl.BlockSpec(fast['f_w1'].shape, c3),
            pl.BlockSpec(fast['f_b1'].shape, c2),
            pl.BlockSpec(fast['f_w2'].shape, c3),
            pl.BlockSpec(fast['f_b2'].shape, c2),
            pl.BlockSpec(fast['f_w3'].shape, c3),
            pl.BlockSpec(fast['f_b3'].shape, c2),
            pl.BlockSpec(fast['f_fc1_w'].shape, c3),
            pl.BlockSpec(fast['f_fc1_b'].shape, c2),
            pl.BlockSpec(fast['f_fc2_w'].shape, c2),
            pl.BlockSpec(fast['f_fc2_b'].shape, c2),
        ],
        out_specs=pl.BlockSpec((1, 1, Ap), lambda b: (b, 0, 0)),
        compiler_params=pltpu.CompilerParams(
            dimension_semantics=("parallel",)),
        cost_estimate=cost,
    )(x2d, fast['f_w1'], fast['f_b1'], fast['f_w2'], fast['f_b2'],
      fast['f_w3'], fast['f_b3'], fast['f_fc1_w'], fast['f_fc1_b'],
      fast['f_fc2_w'], fast['f_fc2_b'])
    return q[:, 0, :n_actions]


def dqn_forward(fast, state_nchw, n_actions, fuse_batch_threshold=64):
    """forward(state) -> action values, matching the PyTorch module."""
    if state_nchw.shape[0] <= fuse_batch_threshold:
        return dqn_forward_fused(fast, state_nchw, n_actions)
    return dqn_forward_tiled(fast, state_nchw, n_actions)


# ----------------------------------------------------------------------------
# Parameters (torch layout), kernel-ready params, f32 reference
# ----------------------------------------------------------------------------
def init_params(key, input_dims, n_actions):
    C, H, W = input_dims

    def uni(key, fan_in, shape):
        bound = 1.0 / np.sqrt(fan_in)
        return jax.random.uniform(key, shape, jnp.float32, -bound, bound)

    keys = jax.random.split(key, 10)
    p = {}
    p['w1'] = uni(keys[0], C * 8 * 8, (32, C, 8, 8))
    p['b1'] = uni(keys[1], C * 8 * 8, (32,))
    p['w2'] = uni(keys[2], 32 * 4 * 4, (64, 32, 4, 4))
    p['b2'] = uni(keys[3], 32 * 4 * 4, (64,))
    p['w3'] = uni(keys[4], 64 * 3 * 3, (64, 64, 3, 3))
    p['b3'] = uni(keys[5], 64 * 3 * 3, (64,))
    (_, _), (_, _), (h3, w3) = conv_out_dims(H, W)
    fc_in = 64 * h3 * w3
    p['fc1_w'] = uni(keys[6], fc_in, (fc_in, 512))
    p['fc1_b'] = uni(keys[7], fc_in, (512,))
    p['fc2_w'] = uni(keys[8], 512, (512, n_actions))
    p['fc2_b'] = uni(keys[9], 512, (n_actions,))
    return p


def prepare_fast_params(params, input_dims):
    """One-time host-side prep of kernel-ready (bf16, matmul-layout) params."""
    C, H, W = input_dims
    (oh1, ow1), (oh2, ow2), (oh3, ow3) = conv_out_dims(H, W)
    bf, f32 = jnp.bfloat16, jnp.float32
    fast = {}

    # ---- tiled path: im2col weights (rows in (kh, kw, c) order) ----
    def conv_mat(w_oihw):
        KH, KW = w_oihw.shape[2], w_oihw.shape[3]
        return jnp.transpose(w_oihw, (2, 3, 1, 0)).reshape(
            KH * KW * w_oihw.shape[1], w_oihw.shape[0])

    fast['w1m'] = conv_mat(params['w1']).astype(bf)
    fast['b1'] = params['b1'].reshape(1, -1).astype(f32)
    fast['w2m'] = conv_mat(params['w2']).astype(bf)
    fast['b2'] = params['b2'].reshape(1, -1).astype(f32)
    fast['w3m'] = conv_mat(params['w3']).astype(bf)
    fast['b3'] = params['b3'].reshape(1, -1).astype(f32)

    # fc1 rows: torch NCHW-flatten order -> NHWC-flatten order.
    fc1_w = params['fc1_w'].reshape(64, oh3, ow3, 512)
    fc1_w = jnp.transpose(fc1_w, (1, 2, 0, 3)).reshape(oh3 * ow3 * 64, 512)
    fast['fc1_w'] = fc1_w.astype(bf)
    fast['fc1_b'] = params['fc1_b'].reshape(1, -1).astype(f32)

    # fc2 zero-padded to 128 output lanes (unmasked final store).
    n_actions = params['fc2_w'].shape[1]
    a_pad = _round_up(max(n_actions, LANE), LANE)
    fc2_w = jnp.zeros((512, a_pad), f32).at[:, :n_actions].set(params['fc2_w'])
    fc2_b = jnp.zeros((1, a_pad), f32).at[0, :n_actions].set(params['fc2_b'])
    fast['fc2_w'] = fc2_w.astype(bf)
    fast['fc2_b'] = fc2_b

    # ---- fused path: conv weights with the W-unfold baked in -----------
    # Wbig[kh][w*ic + c, ow*oc + o] = w_torch[o, c, kh, w - ow*s] (else 0).
    def conv_unfold_w(w_oihw, w_in, s, ow):
        oc, ic, nkh, nkw = w_oihw.shape
        w_np = np.asarray(w_oihw, dtype=np.float32)
        wb = np.zeros((nkh, w_in * ic, ow * oc), np.float32)
        for kh in range(nkh):
            for o in range(ow):
                for kw in range(nkw):
                    wpos = o * s + kw
                    wb[kh, wpos * ic:(wpos + 1) * ic,
                       o * oc:(o + 1) * oc] = w_np[:, :, kh, kw].T
        return jnp.asarray(wb, dtype=bf)

    def tile_bias(b, ow):
        return jnp.asarray(np.tile(np.asarray(b, np.float32), ow)
                           ).reshape(1, -1).astype(f32)

    fast['f_w1'] = conv_unfold_w(params['w1'], W, 4, ow1)
    fast['f_b1'] = tile_bias(params['b1'], ow1)
    fast['f_w2'] = conv_unfold_w(params['w2'], ow1, 2, ow2)
    fast['f_b2'] = tile_bias(params['b2'], ow2)
    fast['f_w3'] = conv_unfold_w(params['w3'], ow2, 1, ow3)
    fast['f_b3'] = tile_bias(params['b3'], ow3)
    fast['f_fc1_w'] = fc1_w.reshape(oh3, ow3 * 64, 512).astype(bf)
    fast['f_fc1_b'] = fast['fc1_b']
    fast['f_fc2_w'] = fast['fc2_w']
    fast['f_fc2_b'] = fast['fc2_b']
    return fast


def reference_forward(params, x):
    """Pure-JAX f32 reference with torch-exact semantics."""
    def conv(x, w, b, s):
        y = lax.conv_general_dilated(x, w, (s, s), 'VALID',
                                     dimension_numbers=('NCHW', 'OIHW', 'NCHW'))
        return jnp.maximum(y + b.reshape(1, -1, 1, 1), 0.0)

    out = conv(x, params['w1'], params['b1'], 4)
    out = conv(out, params['w2'], params['b2'], 2)
    out = conv(out, params['w3'], params['b3'], 1)
    flat = out.reshape(x.shape[0], -1)                 # torch .view(-1, fc_in)
    h = jnp.maximum(flat @ params['fc1_w'] + params['fc1_b'], 0.0)
    return h @ params['fc2_w'] + params['fc2_b']


if __name__ == "__main__":
    key = jax.random.PRNGKey(0)
    k_param, k_x = jax.random.split(key)

    input_dims = (4, 44, 44)        # small Atari-like frame stack
    n_actions = 6
    batch = 2

    params = init_params(k_param, input_dims, n_actions)
    fast = prepare_fast_params(params, input_dims)
    x = jax.random.normal(k_x, (batch,) + input_dims, dtype=jnp.float32)

    q_ref = np.asarray(reference_forward(params, x))

    # Fully-fused single-kernel path (small batch -> default dispatch).
    fwd = jax.jit(dqn_forward, static_argnums=(2,))
    q_fused = jax.block_until_ready(fwd(fast, x, n_actions))
    np.testing.assert_allclose(np.asarray(q_fused, np.float32), q_ref,
                               rtol=2e-2, atol=2e-2)

    # Tiled im2col + matmul path (training-batch path), exercised explicitly.
    fwd_tiled = jax.jit(dqn_forward_tiled, static_argnums=(2,))
    q_tiled = jax.block_until_ready(fwd_tiled(fast, x, n_actions))
    np.testing.assert_allclose(np.asarray(q_tiled, np.float32), q_ref,
                               rtol=2e-2, atol=2e-2)

    print("KERNEL_OK")
</pallas_src>

<mosaic_0001>
module attributes {stable_mosaic.version = 11 : i64} {
  func.func @kernel(%arg0: i32, %arg1: memref<1x44x176xbf16, #tpu.memory_space<vmem>>, %arg2: memref<8x176x320xbf16, #tpu.memory_space<vmem>>, %arg3: memref<1x320xf32, #tpu.memory_space<vmem>>, %arg4: memref<4x320x256xbf16, #tpu.memory_space<vmem>>, %arg5: memref<1x256xf32, #tpu.memory_space<vmem>>, %arg6: memref<3x256x128xbf16, #tpu.memory_space<vmem>>, %arg7: memref<1x128xf32, #tpu.memory_space<vmem>>, %arg8: memref<2x128x512xbf16, #tpu.memory_space<vmem>>, %arg9: memref<1x512xf32, #tpu.memory_space<vmem>>, %arg10: memref<512x128xbf16, #tpu.memory_space<vmem>>, %arg11: memref<1x128xf32, #tpu.memory_space<vmem>>, %arg12: memref<1x1x128xf32, #tpu.memory_space<vmem>>) attributes {dimension_semantics = [#tpu.dimension_semantics<parallel>], iteration_bounds = array<i64: 2>, scalar_prefetch = 0 : i64, scratch_operands = 0 : i64, tpu.core_type = #tpu.core_type<tc>, window_params = [{transform_indices = @transform_0, window_bounds = array<i64: 1, 44, 176>}, {pipeline_mode = #tpu.pipeline_mode<synchronous>, transform_indices = @transform_1, window_bounds = array<i64: 8, 176, 320>}, {pipeline_mode = #tpu.pipeline_mode<synchronous>, transform_indices = @transform_2, window_bounds = array<i64: 1, 320>}, {pipeline_mode = #tpu.pipeline_mode<synchronous>, transform_indices = @transform_3, window_bounds = array<i64: 4, 320, 256>}, {pipeline_mode = #tpu.pipeline_mode<synchronous>, transform_indices = @transform_4, window_bounds = array<i64: 1, 256>}, {pipeline_mode = #tpu.pipeline_mode<synchronous>, transform_indices = @transform_5, window_bounds = array<i64: 3, 256, 128>}, {pipeline_mode = #tpu.pipeline_mode<synchronous>, transform_indices = @transform_6, window_bounds = array<i64: 1, 128>}, {pipeline_mode = #tpu.pipeline_mode<synchronous>, transform_indices = @transform_7, window_bounds = array<i64: 2, 128, 512>}, {pipeline_mode = #tpu.pipeline_mode<synchronous>, transform_indices = @transform_8, window_bounds = array<i64: 1, 512>}, {pipeline_mode = #tpu.pipeline_mode<synchronous>, transform_indices = @transform_9, window_bounds = array<i64: 512, 128>}, {pipeline_mode = #tpu.pipeline_mode<synchronous>, transform_indices = @transform_10, window_bounds = array<i64: 1, 128>}, {transform_indices = @transform_11, window_bounds = array<i64: 1, 1, 128>}]} {
    %c0 = arith.constant 0 : index
    %c0_0 = arith.constant 0 : index
    %c0_1 = arith.constant 0 : index
    %0 = vector.load %arg1[%c0, %c0_0, %c0_1] : memref<1x44x176xbf16, #tpu.memory_space<vmem>>, vector<1x44x176xbf16>
    %1 = vector.shape_cast %0 : vector<1x44x176xbf16> to vector<44x176xbf16>
    %cst = arith.constant 0.000000e+00 : f32
    %2 = vector.broadcast %cst : f32 to vector<37x320xf32>
    %3 = vector.extract_strided_slice %1 {offsets = [0, 0], sizes = [37, 176], strides = [1, 1]} : vector<44x176xbf16> to vector<37x176xbf16>
    %c0_2 = arith.constant 0 : index
    %c0_3 = arith.constant 0 : index
    %c0_4 = arith.constant 0 : index
    %4 = vector.load %arg2[%c0_2, %c0_3, %c0_4] : memref<8x176x320xbf16, #tpu.memory_space<vmem>>, vector<1x176x320xbf16>
    %5 = vector.shape_cast %4 : vector<1x176x320xbf16> to vector<176x320xbf16>
    %cst_5 = arith.constant dense<0.000000e+00> : vector<37x320xf32>
    %6 = tpu.matmul %3, %5, %cst_5 {dimension_numbers = #tpu.dot_dimension_numbers<[1], [0], [0], [1], [0, 0, 1, 1], [], []>} : vector<37x176xbf16>, vector<176x320xbf16>, vector<37x320xf32> -> vector<37x320xf32>
    %7 = arith.addf %2, %6 : vector<37x320xf32>
    %8 = vector.extract_strided_slice %1 {offsets = [1, 0], sizes = [37, 176], strides = [1, 1]} : vector<44x176xbf16> to vector<37x176xbf16>
    %c1 = arith.constant 1 : index
    %c0_6 = arith.constant 0 : index
    %c0_7 = arith.constant 0 : index
    %9 = vector.load %arg2[%c1, %c0_6, %c0_7] : memref<8x176x320xbf16, #tpu.memory_space<vmem>>, vector<1x176x320xbf16>
    %10 = vector.shape_cast %9 : vector<1x176x320xbf16> to vector<176x320xbf16>
    %cst_8 = arith.constant dense<0.000000e+00> : vector<37x320xf32>
    %11 = tpu.matmul %8, %10, %cst_8 {dimension_numbers = #tpu.dot_dimension_numbers<[1], [0], [0], [1], [0, 0, 1, 1], [], []>} : vector<37x176xbf16>, vector<176x320xbf16>, vector<37x320xf32> -> vector<37x320xf32>
    %12 = arith.addf %7, %11 : vector<37x320xf32>
    %13 = vector.extract_strided_slice %1 {offsets = [2, 0], sizes = [37, 176], strides = [1, 1]} : vector<44x176xbf16> to vector<37x176xbf16>
    %c2 = arith.constant 2 : index
    %c0_9 = arith.constant 0 : index
    %c0_10 = arith.constant 0 : index
    %14 = vector.load %arg2[%c2, %c0_9, %c0_10] : memref<8x176x320xbf16, #tpu.memory_space<vmem>>, vector<1x176x320xbf16>
    %15 = vector.shape_cast %14 : vector<1x176x320xbf16> to vector<176x320xbf16>
    %cst_11 = arith.constant dense<0.000000e+00> : vector<37x320xf32>
    %16 = tpu.matmul %13, %15, %cst_11 {dimension_numbers = #tpu.dot_dimension_numbers<[1], [0], [0], [1], [0, 0, 1, 1], [], []>} : vector<37x176xbf16>, vector<176x320xbf16>, vector<37x320xf32> -> vector<37x320xf32>
    %17 = arith.addf %12, %16 : vector<37x320xf32>
    %18 = vector.extract_strided_slice %1 {offsets = [3, 0], sizes = [37, 176], strides = [1, 1]} : vector<44x176xbf16> to vector<37x176xbf16>
    %c3 = arith.constant 3 : index
    %c0_12 = arith.constant 0 : index
    %c0_13 = arith.constant 0 : index
    %19 = vector.load %arg2[%c3, %c0_12, %c0_13] : memref<8x176x320xbf16, #tpu.memory_space<vmem>>, vector<1x176x320xbf16>
    %20 = vector.shape_cast %19 : vector<1x176x320xbf16> to vector<176x320xbf16>
    %cst_14 = arith.constant dense<0.000000e+00> : vector<37x320xf32>
    %21 = tpu.matmul %18, %20, %cst_14 {dimension_numbers = #tpu.dot_dimension_numbers<[1], [0], [0], [1], [0, 0, 1, 1], [], []>} : vector<37x176xbf16>, vector<176x320xbf16>, vector<37x320xf32> -> vector<37x320xf32>
    %22 = arith.addf %17, %21 : vector<37x320xf32>
    %23 = vector.extract_strided_slice %1 {offsets = [4, 0], sizes = [37, 176], strides = [1, 1]} : vector<44x176xbf16> to vector<37x176xbf16>
    %c4 = arith.constant 4 : index
    %c0_15 = arith.constant 0 : index
    %c0_16 = arith.constant 0 : index
    %24 = vector.load %arg2[%c4, %c0_15, %c0_16] : memref<8x176x320xbf16, #tpu.memory_space<vmem>>, vector<1x176x320xbf16>
    %25 = vector.shape_cast %24 : vector<1x176x320xbf16> to vector<176x320xbf16>
    %cst_17 = arith.constant dense<0.000000e+00> : vector<37x320xf32>
    %26 = tpu.matmul %23, %25, %cst_17 {dimension_numbers = #tpu.dot_dimension_numbers<[1], [0], [0], [1], [0, 0, 1, 1], [], []>} : vector<37x176xbf16>, vector<176x320xbf16>, vector<37x320xf32> -> vector<37x320xf32>
    %27 = arith.addf %22, %26 : vector<37x320xf32>
    %28 = vector.extract_strided_slice %1 {offsets = [5, 0], sizes = [37, 176], strides = [1, 1]} : vector<44x176xbf16> to vector<37x176xbf16>
    %c5 = arith.constant 5 : index
    %c0_18 = arith.constant 0 : index
    %c0_19 = arith.constant 0 : index
    %29 = vector.load %arg2[%c5, %c0_18, %c0_19] : memref<8x176x320xbf16, #tpu.memory_space<vmem>>, vector<1x176x320xbf16>
    %30 = vector.shape_cast %29 : vector<1x176x320xbf16> to vector<176x320xbf16>
    %cst_20 = arith.constant dense<0.000000e+00> : vector<37x320xf32>
    %31 = tpu.matmul %28, %30, %cst_20 {dimension_numbers = #tpu.dot_dimension_numbers<[1], [0], [0], [1], [0, 0, 1, 1], [], []>} : vector<37x176xbf16>, vector<176x320xbf16>, vector<37x320xf32> -> vector<37x320xf32>
    %32 = arith.addf %27, %31 : vector<37x320xf32>
    %33 = vector.extract_strided_slice %1 {offsets = [6, 0], sizes = [37, 176], strides = [1, 1]} : vector<44x176xbf16> to vector<37x176xbf16>
    %c6 = arith.constant 6 : index
    %c0_21 = arith.constant 0 : index
    %c0_22 = arith.constant 0 : index
    %34 = vector.load %arg2[%c6, %c0_21, %c0_22] : memref<8x176x320xbf16, #tpu.memory_space<vmem>>, vector<1x176x320xbf16>
    %35 = vector.shape_cast %34 : vector<1x176x320xbf16> to vector<176x320xbf16>
    %cst_23 = arith.constant dense<0.000000e+00> : vector<37x320xf32>
    %36 = tpu.matmul %33, %35, %cst_23 {dimension_numbers = #tpu.dot_dimension_numbers<[1], [0], [0], [1], [0, 0, 1, 1], [], []>} : vector<37x176xbf16>, vector<176x320xbf16>, vector<37x320xf32> -> vector<37x320xf32>
    %37 = arith.addf %32, %36 : vector<37x320xf32>
    %38 = vector.extract_strided_slice %1 {offsets = [7, 0], sizes = [37, 176], strides = [1, 1]} : vector<44x176xbf16> to vector<37x176xbf16>
    %c7 = arith.constant 7 : index
    %c0_24 = arith.constant 0 : index
    %c0_25 = arith.constant 0 : index
    %39 = vector.load %arg2[%c7, %c0_24, %c0_25] : memref<8x176x320xbf16, #tpu.memory_space<vmem>>, vector<1x176x320xbf16>
    %40 = vector.shape_cast %39 : vector<1x176x320xbf16> to vector<176x320xbf16>
    %cst_26 = arith.constant dense<0.000000e+00> : vector<37x320xf32>
    %41 = tpu.matmul %38, %40, %cst_26 {dimension_numbers = #tpu.dot_dimension_numbers<[1], [0], [0], [1], [0, 0, 1, 1], [], []>} : vector<37x176xbf16>, vector<176x320xbf16>, vector<37x320xf32> -> vector<37x320xf32>
    %42 = arith.addf %37, %41 : vector<37x320xf32>
    %43 = vector.extract_strided_slice %42 {offsets = [0, 0], sizes = [1, 320], strides = [1, 1]} : vector<37x320xf32> to vector<1x320xf32>
    %44 = vector.extract_strided_slice %42 {offsets = [4, 0], sizes = [1, 320], strides = [1, 1]} : vector<37x320xf32> to vector<1x320xf32>
    %45 = vector.extract_strided_slice %42 {offsets = [8, 0], sizes = [1, 320], strides = [1, 1]} : vector<37x320xf32> to vector<1x320xf32>
    %46 = vector.extract_strided_slice %42 {offsets = [12, 0], sizes = [1, 320], strides = [1, 1]} : vector<37x320xf32> to vector<1x320xf32>
    %47 = vector.extract_strided_slice %42 {offsets = [16, 0], sizes = [1, 320], strides = [1, 1]} : vector<37x320xf32> to vector<1x320xf32>
    %48 = vector.extract_strided_slice %42 {offsets = [20, 0], sizes = [1, 320], strides = [1, 1]} : vector<37x320xf32> to vector<1x320xf32>
    %49 = vector.extract_strided_slice %42 {offsets = [24, 0], sizes = [1, 320], strides = [1, 1]} : vector<37x320xf32> to vector<1x320xf32>
    %50 = vector.extract_strided_slice %42 {offsets = [28, 0], sizes = [1, 320], strides = [1, 1]} : vector<37x320xf32> to vector<1x320xf32>
    %51 = vector.extract_strided_slice %42 {offsets = [32, 0], sizes = [1, 320], strides = [1, 1]} : vector<37x320xf32> to vector<1x320xf32>
    %52 = vector.extract_strided_slice %42 {offsets = [36, 0], sizes = [1, 320], strides = [1, 1]} : vector<37x320xf32> to vector<1x320xf32>
    %53 = tpu.concatenate %43, %44, %45, %46, %47, %48, %49, %50, %51, %52 in 0 : vector<1x320xf32>, vector<1x320xf32>, vector<1x320xf32>, vector<1x320xf32>, vector<1x320xf32>, vector<1x320xf32>, vector<1x320xf32>, vector<1x320xf32>, vector<1x320xf32>, vector<1x320xf32> -> vector<10x320xf32>
    %c0_27 = arith.constant 0 : index
    %c0_28 = arith.constant 0 : index
    %54 = vector.load %arg3[%c0_27, %c0_28] : memref<1x320xf32, #tpu.memory_space<vmem>>, vector<1x320xf32>
    %55 = vector.broadcast %54 : vector<1x320xf32> to vector<10x320xf32>
    %56 = arith.addf %53, %55 : vector<10x320xf32>
    %cst_29 = arith.constant 0.000000e+00 : f32
    %57 = vector.broadcast %cst_29 : f32 to vector<10x320xf32>
    %58 = arith.maximumf %56, %57 : vector<10x320xf32>
    %59 = arith.truncf %58 : vector<10x320xf32> to vector<10x320xbf16>
    %cst_30 = arith.constant 0.000000e+00 : f32
    %60 = vector.broadcast %cst_30 : f32 to vector<7x256xf32>
    %61 = vector.extract_strided_slice %59 {offsets = [0, 0], sizes = [7, 320], strides = [1, 1]} : vector<10x320xbf16> to vector<7x320xbf16>
    %c0_31 = arith.constant 0 : index
    %c0_32 = arith.constant 0 : index
    %c0_33 = arith.constant 0 : index
    %62 = vector.load %arg4[%c0_31, %c0_32, %c0_33] : memref<4x320x256xbf16, #tpu.memory_space<vmem>>, vector<1x320x256xbf16>
    %63 = vector.shape_cast %62 : vector<1x320x256xbf16> to vector<320x256xbf16>
    %cst_34 = arith.constant dense<0.000000e+00> : vector<7x256xf32>
    %64 = tpu.matmul %61, %63, %cst_34 {dimension_numbers = #tpu.dot_dimension_numbers<[1], [0], [0], [1], [0, 0, 1, 1], [], []>} : vector<7x320xbf16>, vector<320x256xbf16>, vector<7x256xf32> -> vector<7x256xf32>
    %65 = arith.addf %60, %64 : vector<7x256xf32>
    %66 = vector.extract_strided_slice %59 {offsets = [1, 0], sizes = [7, 320], strides = [1, 1]} : vector<10x320xbf16> to vector<7x320xbf16>
    %c1_35 = arith.constant 1 : index
    %c0_36 = arith.constant 0 : index
    %c0_37 = arith.constant 0 : index
    %67 = vector.load %arg4[%c1_35, %c0_36, %c0_37] : memref<4x320x256xbf16, #tpu.memory_space<vmem>>, vector<1x320x256xbf16>
    %68 = vector.shape_cast %67 : vector<1x320x256xbf16> to vector<320x256xbf16>
    %cst_38 = arith.constant dense<0.000000e+00> : vector<7x256xf32>
    %69 = tpu.matmul %66, %68, %cst_38 {dimension_numbers = #tpu.dot_dimension_numbers<[1], [0], [0], [1], [0, 0, 1, 1], [], []>} : vector<7x320xbf16>, vector<320x256xbf16>, vector<7x256xf32> -> vector<7x256xf32>
    %70 = arith.addf %65, %69 : vector<7x256xf32>
    %71 = vector.extract_strided_slice %59 {offsets = [2, 0], sizes = [7, 320], strides = [1, 1]} : vector<10x320xbf16> to vector<7x320xbf16>
    %c2_39 = arith.constant 2 : index
    %c0_40 = arith.constant 0 : index
    %c0_41 = arith.constant 0 : index
    %72 = vector.load %arg4[%c2_39, %c0_40, %c0_41] : memref<4x320x256xbf16, #tpu.memory_space<vmem>>, vector<1x320x256xbf16>
    %73 = vector.shape_cast %72 : vector<1x320x256xbf16> to vector<320x256xbf16>
    %cst_42 = arith.constant dense<0.000000e+00> : vector<7x256xf32>
    %74 = tpu.matmul %71, %73, %cst_42 {dimension_numbers = #tpu.dot_dimension_numbers<[1], [0], [0], [1], [0, 0, 1, 1], [], []>} : vector<7x320xbf16>, vector<320x256xbf16>, vector<7x256xf32> -> vector<7x256xf32>
    %75 = arith.addf %70, %74 : vector<7x256xf32>
    %76 = vector.extract_strided_slice %59 {offsets = [3, 0], sizes = [7, 320], strides = [1, 1]} : vector<10x320xbf16> to vector<7x320xbf16>
    %c3_43 = arith.constant 3 : index
    %c0_44 = arith.constant 0 : index
    %c0_45 = arith.constant 0 : index
    %77 = vector.load %arg4[%c3_43, %c0_44, %c0_45] : memref<4x320x256xbf16, #tpu.memory_space<vmem>>, vector<1x320x256xbf16>
    %78 = vector.shape_cast %77 : vector<1x320x256xbf16> to vector<320x256xbf16>
    %cst_46 = arith.constant dense<0.000000e+00> : vector<7x256xf32>
    %79 = tpu.matmul %76, %78, %cst_46 {dimension_numbers = #tpu.dot_dimension_numbers<[1], [0], [0], [1], [0, 0, 1, 1], [], []>} : vector<7x320xbf16>, vector<320x256xbf16>, vector<7x256xf32> -> vector<7x256xf32>
    %80 = arith.addf %75, %79 : vector<7x256xf32>
    %81 = vector.extract_strided_slice %80 {offsets = [0, 0], sizes = [1, 256], strides = [1, 1]} : vector<7x256xf32> to vector<1x256xf32>
    %82 = vector.extract_strided_slice %80 {offsets = [2, 0], sizes = [1, 256], strides = [1, 1]} : vector<7x256xf32> to vector<1x256xf32>
    %83 = vector.extract_strided_slice %80 {offsets = [4, 0], sizes = [1, 256], strides = [1, 1]} : vector<7x256xf32> to vector<1x256xf32>
    %84 = vector.extract_strided_slice %80 {offsets = [6, 0], sizes = [1, 256], strides = [1, 1]} : vector<7x256xf32> to vector<1x256xf32>
    %85 = tpu.concatenate %81, %82, %83, %84 in 0 : vector<1x256xf32>, vector<1x256xf32>, vector<1x256xf32>, vector<1x256xf32> -> vector<4x256xf32>
    %c0_47 = arith.constant 0 : index
    %c0_48 = arith.constant 0 : index
    %86 = vector.load %arg5[%c0_47, %c0_48] : memref<1x256xf32, #tpu.memory_space<vmem>>, vector<1x256xf32>
    %87 = vector.broadcast %86 : vector<1x256xf32> to vector<4x256xf32>
    %88 = arith.addf %85, %87 : vector<4x256xf32>
    %cst_49 = arith.constant 0.000000e+00 : f32
    %89 = vector.broadcast %cst_49 : f32 to vector<4x256xf32>
    %90 = arith.maximumf %88, %89 : vector<4x256xf32>
    %91 = arith.truncf %90 : vector<4x256xf32> to vector<4x256xbf16>
    %cst_50 = arith.constant 0.000000e+00 : f32
    %92 = vector.broadcast %cst_50 : f32 to vector<2x128xf32>
    %93 = vector.extract_strided_slice %91 {offsets = [0, 0], sizes = [2, 256], strides = [1, 1]} : vector<4x256xbf16> to vector<2x256xbf16>
    %c0_51 = arith.constant 0 : index
    %c0_52 = arith.constant 0 : index
    %c0_53 = arith.constant 0 : index
    %94 = vector.load %arg6[%c0_51, %c0_52, %c0_53] : memref<3x256x128xbf16, #tpu.memory_space<vmem>>, vector<1x256x128xbf16>
    %95 = vector.shape_cast %94 : vector<1x256x128xbf16> to vector<256x128xbf16>
    %cst_54 = arith.constant dense<0.000000e+00> : vector<2x128xf32>
    %96 = tpu.matmul %93, %95, %cst_54 {dimension_numbers = #tpu.dot_dimension_numbers<[1], [0], [0], [1], [0, 0, 1, 1], [], []>} : vector<2x256xbf16>, vector<256x128xbf16>, vector<2x128xf32> -> vector<2x128xf32>
    %97 = arith.addf %92, %96 : vector<2x128xf32>
    %98 = vector.extract_strided_slice %91 {offsets = [1, 0], sizes = [2, 256], strides = [1, 1]} : vector<4x256xbf16> to vector<2x256xbf16>
    %c1_55 = arith.constant 1 : index
    %c0_56 = arith.constant 0 : index
    %c0_57 = arith.constant 0 : index
    %99 = vector.load %arg6[%c1_55, %c0_56, %c0_57] : memref<3x256x128xbf16, #tpu.memory_space<vmem>>, vector<1x256x128xbf16>
    %100 = vector.shape_cast %99 : vector<1x256x128xbf16> to vector<256x128xbf16>
    %cst_58 = arith.constant dense<0.000000e+00> : vector<2x128xf32>
    %101 = tpu.matmul %98, %100, %cst_58 {dimension_numbers = #tpu.dot_dimension_numbers<[1], [0], [0], [1], [0, 0, 1, 1], [], []>} : vector<2x256xbf16>, vector<256x128xbf16>, vector<2x128xf32> -> vector<2x128xf32>
    %102 = arith.addf %97, %101 : vector<2x128xf32>
    %103 = vector.extract_strided_slice %91 {offsets = [2, 0], sizes = [2, 256], strides = [1, 1]} : vector<4x256xbf16> to vector<2x256xbf16>
    %c2_59 = arith.constant 2 : index
    %c0_60 = arith.constant 0 : index
    %c0_61 = arith.constant 0 : index
    %104 = vector.load %arg6[%c2_59, %c0_60, %c0_61] : memref<3x256x128xbf16, #tpu.memory_space<vmem>>, vector<1x256x128xbf16>
    %105 = vector.shape_cast %104 : vector<1x256x128xbf16> to vector<256x128xbf16>
    %cst_62 = arith.constant dense<0.000000e+00> : vector<2x128xf32>
    %106 = tpu.matmul %103, %105, %cst_62 {dimension_numbers = #tpu.dot_dimension_numbers<[1], [0], [0], [1], [0, 0, 1, 1], [], []>} : vector<2x256xbf16>, vector<256x128xbf16>, vector<2x128xf32> -> vector<2x128xf32>
    %107 = arith.addf %102, %106 : vector<2x128xf32>
    %c0_63 = arith.constant 0 : index
    %c0_64 = arith.constant 0 : index
    %108 = vector.load %arg7[%c0_63, %c0_64] : memref<1x128xf32, #tpu.memory_space<vmem>>, vector<1x128xf32>
    %109 = vector.broadcast %108 : vector<1x128xf32> to vector<2x128xf32>
    %110 = arith.addf %107, %109 : vector<2x128xf32>
    %cst_65 = arith.constant 0.000000e+00 : f32
    %111 = vector.broadcast %cst_65 : f32 to vector<2x128xf32>
    %112 = arith.maximumf %110, %111 : vector<2x128xf32>
    %113 = arith.truncf %112 : vector<2x128xf32> to vector<2x128xbf16>
    %cst_66 = arith.constant 0.000000e+00 : f32
    %114 = vector.broadcast %cst_66 : f32 to vector<1x512xf32>
    %115 = vector.extract_strided_slice %113 {offsets = [0, 0], sizes = [1, 128], strides = [1, 1]} : vector<2x128xbf16> to vector<1x128xbf16>
    %c0_67 = arith.constant 0 : index
    %c0_68 = arith.constant 0 : index
    %c0_69 = arith.constant 0 : index
    %116 = vector.load %arg8[%c0_67, %c0_68, %c0_69] : memref<2x128x512xbf16, #tpu.memory_space<vmem>>, vector<1x128x512xbf16>
    %117 = vector.shape_cast %116 : vector<1x128x512xbf16> to vector<128x512xbf16>
    %cst_70 = arith.constant dense<0.000000e+00> : vector<1x512xf32>
    %118 = tpu.matmul %115, %117, %cst_70 {dimension_numbers = #tpu.dot_dimension_numbers<[1], [0], [0], [1], [0, 0, 1, 1], [], []>} : vector<1x128xbf16>, vector<128x512xbf16>, vector<1x512xf32> -> vector<1x512xf32>
    %119 = arith.addf %114, %118 : vector<1x512xf32>
    %120 = vector.extract_strided_slice %113 {offsets = [1, 0], sizes = [1, 128], strides = [1, 1]} : vector<2x128xbf16> to vector<1x128xbf16>
    %c1_71 = arith.constant 1 : index
    %c0_72 = arith.constant 0 : index
    %c0_73 = arith.constant 0 : index
    %121 = vector.load %arg8[%c1_71, %c0_72, %c0_73] : memref<2x128x512xbf16, #tpu.memory_space<vmem>>, vector<1x128x512xbf16>
    %122 = vector.shape_cast %121 : vector<1x128x512xbf16> to vector<128x512xbf16>
    %cst_74 = arith.constant dense<0.000000e+00> : vector<1x512xf32>
    %123 = tpu.matmul %120, %122, %cst_74 {dimension_numbers = #tpu.dot_dimension_numbers<[1], [0], [0], [1], [0, 0, 1, 1], [], []>} : vector<1x128xbf16>, vector<128x512xbf16>, vector<1x512xf32> -> vector<1x512xf32>
    %124 = arith.addf %119, %123 : vector<1x512xf32>
    %c0_75 = arith.constant 0 : index
    %c0_76 = arith.constant 0 : index
    %125 = vector.load %arg9[%c0_75, %c0_76] : memref<1x512xf32, #tpu.memory_space<vmem>>, vector<1x512xf32>
    %126 = arith.addf %124, %125 : vector<1x512xf32>
    %cst_77 = arith.constant 0.000000e+00 : f32
    %127 = vector.broadcast %cst_77 : f32 to vector<1x512xf32>
    %128 = arith.maximumf %126, %127 : vector<1x512xf32>
    %c0_78 = arith.constant 0 : index
    %c0_79 = arith.constant 0 : index
    %129 = vector.load %arg10[%c0_78, %c0_79] : memref<512x128xbf16, #tpu.memory_space<vmem>>, vector<512x128xbf16>
    %130 = arith.extf %129 : vector<512x128xbf16> to vector<512x128xf32>
    %cst_80 = arith.constant dense<0.000000e+00> : vector<1x128xf32>
    %131 = tpu.matmul %128, %130, %cst_80 {dimension_numbers = #tpu.dot_dimension_numbers<[1], [0], [0], [1], [0, 0, 1, 1], [], []>} : vector<1x512xf32>, vector<512x128xf32>, vector<1x128xf32> -> vector<1x128xf32>
    %c0_81 = arith.constant 0 : index
    %c0_82 = arith.constant 0 : index
    %132 = vector.load %arg11[%c0_81, %c0_82] : memref<1x128xf32, #tpu.memory_space<vmem>>, vector<1x128xf32>
    %133 = arith.addf %131, %132 : vector<1x128xf32>
    %c0_83 = arith.constant 0 : index
    %c0_84 = arith.constant 0 : index
    %c0_85 = arith.constant 0 : index
    %134 = vector.load %arg12[%c0_83, %c0_84, %c0_85] : memref<1x1x128xf32, #tpu.memory_space<vmem>>, vector<1x1x128xf32>
    %135 = vector.shape_cast %134 : vector<1x1x128xf32> to vector<1x128xf32>
    %136 = vector.shape_cast %133 : vector<1x128xf32> to vector<1x1x128xf32>
    tpu.vector_store %arg12[%c0_83, %c0_84, %c0_85], %136 {strides = array<i32>} : memref<1x1x128xf32, #tpu.memory_space<vmem>>, vector<1x1x128xf32>,
    return
  }
  func.func @transform_0(%arg0: i32) -> (i32, i32, i32) {
    %c0_i32 = arith.constant 0 : i32
    %c0_i32_0 = arith.constant 0 : i32
    %c0_i32_1 = arith.constant 0 : i32
    return %arg0, %c0_i32, %c0_i32_0 : i32, i32, i32
  }
  func.func @transform_1(%arg0: i32) -> (i32, i32, i32) {
    %c0_i32 = arith.constant 0 : i32
    %c0_i32_0 = arith.constant 0 : i32
    %c0_i32_1 = arith.constant 0 : i32
    %c0_i32_2 = arith.constant 0 : i32
    return %c0_i32, %c0_i32_0, %c0_i32_1 : i32, i32, i32
  }
  func.func @transform_2(%arg0: i32) -> (i32, i32) {
    %c0_i32 = arith.constant 0 : i32
    %c0_i32_0 = arith.constant 0 : i32
    %c0_i32_1 = arith.constant 0 : i32
    return %c0_i32, %c0_i32_0 : i32, i32
  }
  func.func @transform_3(%arg0: i32) -> (i32, i32, i32) {
    %c0_i32 = arith.constant 0 : i32
    %c0_i32_0 = arith.constant 0 : i32
    %c0_i32_1 = arith.constant 0 : i32
    %c0_i32_2 = arith.constant 0 : i32
    return %c0_i32, %c0_i32_0, %c0_i32_1 : i32, i32, i32
  }
  func.func @transform_4(%arg0: i32) -> (i32, i32) {
    %c0_i32 = arith.constant 0 : i32
    %c0_i32_0 = arith.constant 0 : i32
    %c0_i32_1 = arith.constant 0 : i32
    return %c0_i32, %c0_i32_0 : i32, i32
  }
  func.func @transform_5(%arg0: i32) -> (i32, i32, i32) {
    %c0_i32 = arith.constant 0 : i32
    %c0_i32_0 = arith.constant 0 : i32
    %c0_i32_1 = arith.constant 0 : i32
    %c0_i32_2 = arith.constant 0 : i32
    return %c0_i32, %c0_i32_0, %c0_i32_1 : i32, i32, i32
  }
  func.func @transform_6(%arg0: i32) -> (i32, i32) {
    %c0_i32 = arith.constant 0 : i32
    %c0_i32_0 = arith.constant 0 : i32
    %c0_i32_1 = arith.constant 0 : i32
    return %c0_i32, %c0_i32_0 : i32, i32
  }
  func.func @transform_7(%arg0: i32) -> (i32, i32, i32) {
    %c0_i32 = arith.constant 0 : i32
    %c0_i32_0 = arith.constant 0 : i32
    %c0_i32_1 = arith.constant 0 : i32
    %c0_i32_2 = arith.constant 0 : i32
    return %c0_i32, %c0_i32_0, %c0_i32_1 : i32, i32, i32
  }
  func.func @transform_8(%arg0: i32) -> (i32, i32) {
    %c0_i32 = arith.constant 0 : i32
    %c0_i32_0 = arith.constant 0 : i32
    %c0_i32_1 = arith.constant 0 : i32
    return %c0_i32, %c0_i32_0 : i32, i32
  }
  func.func @transform_9(%arg0: i32) -> (i32, i32) {
    %c0_i32 = arith.constant 0 : i32
    %c0_i32_0 = arith.constant 0 : i32
    %c0_i32_1 = arith.constant 0 : i32
    return %c0_i32, %c0_i32_0 : i32, i32
  }
  func.func @transform_10(%arg0: i32) -> (i32, i32) {
    %c0_i32 = arith.constant 0 : i32
    %c0_i32_0 = arith.constant 0 : i32
    %c0_i32_1 = arith.constant 0 : i32
    return %c0_i32, %c0_i32_0 : i32, i32
  }
  func.func @transform_11(%arg0: i32) -> (i32, i32, i32) {
    %c0_i32 = arith.constant 0 : i32
    %c0_i32_0 = arith.constant 0 : i32
    %c0_i32_1 = arith.constant 0 : i32
    return %arg0, %c0_i32, %c0_i32_0 : i32, i32, i32
  }
}

</mosaic_0001>

<llo_original>
// kernel: dqn_forward.1
$region0: #{dqn_forward.1}
  #allocation0 [shape = 'u32[]', space=smem, size = 0x4, offset = 0x4, fixed_abs, tag = 'smem constant byte address 0x4 - core index']
  #allocation1 [shape = 'u32[144,128]{1,0:T(1,128)}', space=vmem, size = 0x12000, scoped, tag = 'internal scratch']
  %s0 = inlined_call_operand.vmem [shape: bf16[2,44,176], index: 0, kind: input, shape index: {}]
  %s1 = inlined_call_operand.hbm [shape: bf16[8,176,320], index: 1, kind: input, shape index: {}]
  %s2 = inlined_call_operand.hbm [shape: f32[1,320], index: 2, kind: input, shape index: {}]
  %s3 = inlined_call_operand.hbm [shape: bf16[4,320,256], index: 3, kind: input, shape index: {}]
  %s4 = inlined_call_operand.hbm [shape: f32[1,256], index: 4, kind: input, shape index: {}]
  %s5 = inlined_call_operand.hbm [shape: bf16[3,256,128], index: 5, kind: input, shape index: {}]
  %s6 = inlined_call_operand.hbm [shape: f32[1,128], index: 6, kind: input, shape index: {}]
  %s7 = inlined_call_operand.hbm [shape: bf16[2,128,512], index: 7, kind: input, shape index: {}]
  %s8 = inlined_call_operand.hbm [shape: f32[1,512], index: 8, kind: input, shape index: {}]
  %s9 = inlined_call_operand.hbm [shape: bf16[512,128], index: 9, kind: input, shape index: {}]
  %s10 = inlined_call_operand.hbm [shape: f32[1,128], index: 10, kind: input, shape index: {}]
  %s11 = inlined_call_operand.hbm [shape: f32[2,1,128], index: 11, kind: output, shape index: {}]
  %s12 = sld [smem:[#allocation0]]
  $region117: #{dqn_forward.1} parent=0
    _
  %s14 = ssub.s32 1, %s12
  %s15 = scalar_select 0, %s14, %s12
  $region1: #{dqn_forward.1} parent=0
    #allocation2 [shape = 'u8[1081344]{0}', space=vmem, size = 0x108000, scoped, tag = 'input window, operand 1, single buffered']
    #allocation3 [shape = 's32[2]{0}', space=sflag, size = 0x8, scoped, tag = 'scoped memory for dqn_forward.1']
    #allocation4 [shape = 's32[2]{0}', space=sflag, size = 0x8, scoped, tag = 'scoped memory for dqn_forward.1']
    #allocation5 [shape = 'u8[1536]{0}', space=vmem, size = 0x800, scoped, tag = 'input window, operand 2, single buffered']
    #allocation6 [shape = 's32[1]{0}', space=sflag, size = 0x4, scoped, tag = 'scoped memory for dqn_forward.1']
    #allocation7 [shape = 'u8[655360]{0}', space=vmem, size = 0xa0000, scoped, tag = 'input window, operand 3, single buffered']
    #allocation8 [shape = 'u8[1024]{0}', space=vmem, size = 0x400, scoped, tag = 'input window, operand 4, single buffered']
    #allocation9 [shape = 's32[1]{0}', space=sflag, size = 0x4, scoped, tag = 'scoped memory for dqn_forward.1']
    #allocation10 [shape = 'u8[196608]{0}', space=vmem, size = 0x30000, scoped, tag = 'input window, operand 5, single buffered']
    #allocation11 [shape = 'u8[512]{0}', space=vmem, size = 0x400, scoped, tag = 'input window, operand 6, single buffered']
    #allocation12 [shape = 's32[1]{0}', space=sflag, size = 0x4, scoped, tag = 'scoped memory for dqn_forward.1']
    #allocation13 [shape = 'u8[262144]{0}', space=vmem, size = 0x40000, scoped, tag = 'input window, operand 7, single buffered']
    #allocation14 [shape = 'u8[2048]{0}', space=vmem, size = 0x800, scoped, tag = 'input window, operand 8, single buffered']
    #allocation15 [shape = 's32[1]{0}', space=sflag, size = 0x4, scoped, tag = 'scoped memory for dqn_forward.1']
    #allocation16 [shape = 'u8[131072]{0}', space=vmem, size = 0x20000, scoped, tag = 'input window, operand 9, single buffered']
    #allocation17 [shape = 'u8[512]{0}', space=vmem, size = 0x400, scoped, tag = 'input window, operand 10, single buffered']
    #allocation18 [shape = 's32[1]{0}', space=sflag, size = 0x4, scoped, tag = 'scoped memory for dqn_forward.1']
    #allocation19 [shape = 'u8[1024]{0}', space=vmem, size = 0x400, scoped, tag = 'output window, operand 0']
    %16 = vsyncpa [#allocation3], 0
    %17 = vsyncpa [#allocation6], 0
    %18 = vsyncpa [#allocation9], 0
    %19 = vsyncpa [#allocation12], 0
    %20 = vsyncpa [#allocation15], 0
    %21 = vsyncpa [#allocation18], 0
    %22 = vsyncpa [#allocation4], 0
    %s23 = scalar_lea.sflag [#allocation4], 1
    %24 = vsyncpa %s23, 0
    loop: start=0, step=1, limit=4
    $region2: #{dqn_forward.1} parent=1 // loop_pre_header
      _
    $region3: #{dqn_forward.1} parent=1 // loop_header
      %s26 = sphi 0, %s30
      %p27 = scmp.ge.s32.totalorder %s26, 4
      %s36 = sphi 0, %s38
      %s39 = sphi 0, %s36
      %s40 = sphi 0, %s39
      %s56 = sphi 0, %s40
      %s60 = sphi 0, %s60
      %s62 = sphi 0, %s60
      %s63 = sphi 0, %s62
      %s77 = sphi 0, %s63
      %s81 = sphi 0, %s81
      %s83 = sphi 0, %s81
      %s84 = sphi 0, %s83
      %s98 = sphi 0, %s84
      %s102 = sphi 0, %s102
      %s104 = sphi 0, %s102
      %s105 = sphi 0, %s104
      %s119 = sphi 0, %s105
      %s123 = sphi 0, %s123
      %s125 = sphi 0, %s123
      %s126 = sphi 0, %s125
      %s140 = sphi 0, %s126
      %s144 = sphi 0, %s144
      %s146 = sphi 0, %s144
      %s147 = sphi 0, %s146
      %s161 = sphi 0, %s147
      %s165 = sphi 0, %s165
      %s167 = sphi 0, %s165
      %s168 = sphi 0, %s167
      %s182 = sphi 0, %s168
      %s186 = sphi 0, %s186
      %s188 = sphi 0, %s186
      %s189 = sphi 0, %s188
      %s203 = sphi 0, %s189
      %s207 = sphi 0, %s207
      %s209 = sphi 0, %s207
      %s210 = sphi 0, %s209
      %s224 = sphi 0, %s210
      %s228 = sphi 0, %s228
      %s230 = sphi 0, %s228
      %s231 = sphi 0, %s230
      %s245 = sphi 0, %s231
      %s249 = sphi 0, %s249
      %s251 = sphi 0, %s249
      %s252 = sphi 0, %s251
      %s266 = sphi 0, %s252
      %s272 = sphi 0, %s274
      %s275 = sphi 0, %s272
      %s276 = sphi 0, %s275
      %s292 = sphi 0, %s276
    $region4: #{dqn_forward.1} parent=1 // loop_header_branch
      %29 = sbr.rel (%p27) target = $region8
    $region5: #{dqn_forward.1} parent=1 // loop_body
      %s31 = ssub.s32 %s26, 1
      %s32 = ssub.s32 %s26, 2
      %s33 = sadd.s32 %s26, 1
      %s34 = ssub.s32 %s26, %s33
      %p35 = scmp.eq.s32.totalorder %s34, 0
      %s37 = sadd.s32 %s36, 1
      %s38 = scalar_select %p35, %s36, %s37
      %p41 = pneg %p35
      %p42 = scmp.eq.s32.totalorder %s26, 1
      %p43 = por %p41, %p42
      %p44 = scmp.ne.s32.totalorder %s36, %s39
      %p45 = scmp.eq.s32.totalorder %s26, 0
      %p46 = por %p44, %p45
      %p47 = scmp.ne.s32.totalorder %s36, %s39
      %p48 = scmp.eq.s32.totalorder %s31, 1
      %p49 = por %p47, %p48
      %p50 = scmp.ne.s32.totalorder %s39, %s40
      %p51 = scmp.eq.s32.totalorder %s31, 0
      %p52 = por %p50, %p51
      %p53 = scmp.ne.s32.totalorder %s39, %s40
      %p54 = scmp.eq.s32.totalorder %s32, 1
      %p55 = por %p53, %p54
      %p57 = scmp.ne.s32.totalorder %s40, %s56
      %p58 = scmp.eq.s32.totalorder %s32, 0
      %p59 = por %p57, %p58
      %s61 = sadd.s32 %s60, 1
      %p64 = scmp.eq.s32.totalorder %s26, 1
      %p65 = scmp.ne.s32.totalorder %s60, %s62
      %p66 = scmp.eq.s32.totalorder %s26, 0
      %p67 = por %p65, %p66
      %p68 = scmp.ne.s32.totalorder %s60, %s62
      %p69 = scmp.eq.s32.totalorder %s31, 1
      %p70 = por %p68, %p69
      %p71 = scmp.ne.s32.totalorder %s62, %s63
      %p72 = scmp.eq.s32.totalorder %s31, 0
      %p73 = por %p71, %p72
      %p74 = scmp.ne.s32.totalorder %s62, %s63
      %p75 = scmp.eq.s32.totalorder %s32, 1
      %p76 = por %p74, %p75
      %p78 = scmp.ne.s32.totalorder %s63, %s77
      %p79 = scmp.eq.s32.totalorder %s32, 0
      %p80 = por %p78, %p79
      %s82 = sadd.s32 %s81, 1
      %p85 = scmp.eq.s32.totalorder %s26, 1
      %p86 = scmp.ne.s32.totalorder %s81, %s83
      %p87 = scmp.eq.s32.totalorder %s26, 0
      %p88 = por %p86, %p87
      %p89 = scmp.ne.s32.totalorder %s81, %s83
      %p90 = scmp.eq.s32.totalorder %s31, 1
      %p91 = por %p89, %p90
      %p92 = scmp.ne.s32.totalorder %s83, %s84
      %p93 = scmp.eq.s32.totalorder %s31, 0
      %p94 = por %p92, %p93
      %p95 = scmp.ne.s32.totalorder %s83, %s84
      %p96 = scmp.eq.s32.totalorder %s32, 1
      %p97 = por %p95, %p96
      %p99 = scmp.ne.s32.totalorder %s84, %s98
      %p100 = scmp.eq.s32.totalorder %s32, 0
      %p101 = por %p99, %p100
      %s103 = sadd.s32 %s102, 1
      %p106 = scmp.eq.s32.totalorder %s26, 1
      %p107 = scmp.ne.s32.totalorder %s102, %s104
      %p108 = scmp.eq.s32.totalorder %s26, 0
      %p109 = por %p107, %p108
      %p110 = scmp.ne.s32.totalorder %s102, %s104
      %p111 = scmp.eq.s32.totalorder %s31, 1
      %p112 = por %p110, %p111
      %p113 = scmp.ne.s32.totalorder %s104, %s105
      %p114 = scmp.eq.s32.totalorder %s31, 0
      %p115 = por %p113, %p114
      %p116 = scmp.ne.s32.totalorder %s104, %s105
      %p117 = scmp.eq.s32.totalorder %s32, 1
      %p118 = por %p116, %p117
      %p120 = scmp.ne.s32.totalorder %s105, %s119
      %p121 = scmp.eq.s32.totalorder %s32, 0
      %p122 = por %p120, %p121
      %s124 = sadd.s32 %s123, 1
      %p127 = scmp.eq.s32.totalorder %s26, 1
      %p128 = scmp.ne.s32.totalorder %s123, %s125
      %p129 = scmp.eq.s32.totalorder %s26, 0
      %p130 = por %p128, %p129
      %p131 = scmp.ne.s32.totalorder %s123, %s125
      %p132 = scmp.eq.s32.totalorder %s31, 1
      %p133 = por %p131, %p132
      %p134 = scmp.ne.s32.totalorder %s125, %s126
      %p135 = scmp.eq.s32.totalorder %s31, 0
      %p136 = por %p134, %p135
      %p137 = scmp.ne.s32.totalorder %s125, %s126
      %p138 = scmp.eq.s32.totalorder %s32, 1
      %p139 = por %p137, %p138
      %p141 = scmp.ne.s32.totalorder %s126, %s140
      %p142 = scmp.eq.s32.totalorder %s32, 0
      %p143 = por %p141, %p142
      %s145 = sadd.s32 %s144, 1
      %p148 = scmp.eq.s32.totalorder %s26, 1
      %p149 = scmp.ne.s32.totalorder %s144, %s146
      %p150 = scmp.eq.s32.totalorder %s26, 0
      %p151 = por %p149, %p150
      %p152 = scmp.ne.s32.totalorder %s144, %s146
      %p153 = scmp.eq.s32.totalorder %s31, 1
      %p154 = por %p152, %p153
      %p155 = scmp.ne.s32.totalorder %s146, %s147
      %p156 = scmp.eq.s32.totalorder %s31, 0
      %p157 = por %p155, %p156
      %p158 = scmp.ne.s32.totalorder %s146, %s147
      %p159 = scmp.eq.s32.totalorder %s32, 1
      %p160 = por %p158, %p159
      %p162 = scmp.ne.s32.totalorder %s147, %s161
      %p163 = scmp.eq.s32.totalorder %s32, 0
      %p164 = por %p162, %p163
      %s166 = sadd.s32 %s165, 1
      %p169 = scmp.eq.s32.totalorder %s26, 1
      %p170 = scmp.ne.s32.totalorder %s165, %s167
      %p171 = scmp.eq.s32.totalorder %s26, 0
      %p172 = por %p170, %p171
      %p173 = scmp.ne.s32.totalorder %s165, %s167
      %p174 = scmp.eq.s32.totalorder %s31, 1
      %p175 = por %p173, %p174
      %p176 = scmp.ne.s32.totalorder %s167, %s168
      %p177 = scmp.eq.s32.totalorder %s31, 0
      %p178 = por %p176, %p177
      %p179 = scmp.ne.s32.totalorder %s167, %s168
      %p180 = scmp.eq.s32.totalorder %s32, 1
      %p181 = por %p179, %p180
      %p183 = scmp.ne.s32.totalorder %s168, %s182
      %p184 = scmp.eq.s32.totalorder %s32, 0
      %p185 = por %p183, %p184
      %s187 = sadd.s32 %s186, 1
      %p190 = scmp.eq.s32.totalorder %s26, 1
      %p191 = scmp.ne.s32.totalorder %s186, %s188
      %p192 = scmp.eq.s32.totalorder %s26, 0
      %p193 = por %p191, %p192
      %p194 = scmp.ne.s32.totalorder %s186, %s188
      %p195 = scmp.eq.s32.totalorder %s31, 1
      %p196 = por %p194, %p195
      %p197 = scmp.ne.s32.totalorder %s188, %s189
      %p198 = scmp.eq.s32.totalorder %s31, 0
      %p199 = por %p197, %p198
      %p200 = scmp.ne.s32.totalorder %s188, %s189
      %p201 = scmp.eq.s32.totalorder %s32, 1
      %p202 = por %p200, %p201
      %p204 = scmp.ne.s32.totalorder %s189, %s203
      %p205 = scmp.eq.s32.totalorder %s32, 0
      %p206 = por %p204, %p205
      %s208 = sadd.s32 %s207, 1
      %p211 = scmp.eq.s32.totalorder %s26, 1
      %p212 = scmp.ne.s32.totalorder %s207, %s209
      %p213 = scmp.eq.s32.totalorder %s26, 0
      %p214 = por %p212, %p213
      %p215 = scmp.ne.s32.totalorder %s207, %s209
      %p216 = scmp.eq.s32.totalorder %s31, 1
      %p217 = por %p215, %p216
      %p218 = scmp.ne.s32.totalorder %s209, %s210
      %p219 = scmp.eq.s32.totalorder %s31, 0
      %p220 = por %p218, %p219
      %p221 = scmp.ne.s32.totalorder %s209, %s210
      %p222 = scmp.eq.s32.totalorder %s32, 1
      %p223 = por %p221, %p222
      %p225 = scmp.ne.s32.totalorder %s210, %s224
      %p226 = scmp.eq.s32.totalorder %s32, 0
      %p227 = por %p225, %p226
      %s229 = sadd.s32 %s228, 1
      %p232 = scmp.eq.s32.totalorder %s26, 1
      %p233 = scmp.ne.s32.totalorder %s228, %s230
      %p234 = scmp.eq.s32.totalorder %s26, 0
      %p235 = por %p233, %p234
      %p236 = scmp.ne.s32.totalorder %s228, %s230
      %p237 = scmp.eq.s32.totalorder %s31, 1
      %p238 = por %p236, %p237
      %p239 = scmp.ne.s32.totalorder %s230, %s231
      %p240 = scmp.eq.s32.totalorder %s31, 0
      %p241 = por %p239, %p240
      %p242 = scmp.ne.s32.totalorder %s230, %s231
      %p243 = scmp.eq.s32.totalorder %s32, 1
      %p244 = por %p242, %p243
      %p246 = scmp.ne.s32.totalorder %s231, %s245
      %p247 = scmp.eq.s32.totalorder %s32, 0
      %p248 = por %p246, %p247
      %s250 = sadd.s32 %s249, 1
      %p253 = scmp.eq.s32.totalorder %s26, 1
      %p254 = scmp.ne.s32.totalorder %s249, %s251
      %p255 = scmp.eq.s32.totalorder %s26, 0
      %p256 = por %p254, %p255
      %p257 = scmp.ne.s32.totalorder %s249, %s251
      %p258 = scmp.eq.s32.totalorder %s31, 1
      %p259 = por %p257, %p258
      %p260 = scmp.ne.s32.totalorder %s251, %s252
      %p261 = scmp.eq.s32.totalorder %s31, 0
      %p262 = por %p260, %p261
      %p263 = scmp.ne.s32.totalorder %s251, %s252
      %p264 = scmp.eq.s32.totalorder %s32, 1
      %p265 = por %p263, %p264
      %p267 = scmp.ne.s32.totalorder %s252, %s266
      %p268 = scmp.eq.s32.totalorder %s32, 0
      %p269 = por %p267, %p268
      %s270 = ssub.s32 %s26, %s33
      %p271 = scmp.eq.s32.totalorder %s270, 0
      %s273 = sadd.s32 %s272, 1
      %s274 = scalar_select %p271, %s272, %s273
      %p277 = pneg %p271
      %p278 = scmp.eq.s32.totalorder %s26, 1
      %p279 = por %p277, %p278
      %p280 = scmp.ne.s32.totalorder %s272, %s275
      %p281 = scmp.eq.s32.totalorder %s26, 0
      %p282 = por %p280, %p281
      %p283 = scmp.ne.s32.totalorder %s272, %s275
      %p284 = scmp.eq.s32.totalorder %s31, 1
      %p285 = por %p283, %p284
      %p286 = scmp.ne.s32.totalorder %s275, %s276
      %p287 = scmp.eq.s32.totalorder %s31, 0
      %p288 = por %p286, %p287
      %p289 = scmp.ne.s32.totalorder %s275, %s276
      %p290 = scmp.eq.s32.totalorder %s32, 1
      %p291 = por %p289, %p290
      %p293 = scmp.ne.s32.totalorder %s276, %s292
      %p294 = scmp.eq.s32.totalorder %s32, 0
      %p295 = por %p293, %p294
      %p296 = scmp.le.s32.totalorder 1, %s26
      %p297 = scmp.lt.s32.totalorder %s26, 3
      %p298 = pnand %p296, %p297
      %p299 = pneg %p298
      // Predicated region
      $region9: #{dqn_forward.1} parent=5 // pred_check
        _
      $region10: #{dqn_forward.1} parent=5 // pred_check_branch
        %301 = sbr.rel (%p298) target = $region12
      $region11: #{dqn_forward.1} parent=5 // pred_region
        %s302 = ssub.s32 %s26, 1
        // Predicated region
        $region13: #{dqn_forward.1} parent=11 // pred_check
          %p303 = pneg %p73
        $region14: #{dqn_forward.1} parent=11 // pred_check_branch
          %305 = sbr.rel (%p303) target = $region16
        $region15: #{dqn_forward.1} parent=11 // pred_region
          %s307 = ssub.s32 33792, 33792
          %308 = vsyncadd [#allocation3], %s307
          %s309 = sshll.u32 [#allocation2], 4
          %s310 = int_to_ptr.vmem [resolvable:$true] %s309
          %315 = dma.hbm_to_vmem [thread:$0]  %s1, 33792, %s310, [#allocation3], 192, 192, 12
        $region16: #{dqn_forward.1} parent=11 // pred_fallthru
          _
        // Predicated region
        $region17: #{dqn_forward.1} parent=11 // pred_check
          %p316 = pneg %p94
        $region18: #{dqn_forward.1} parent=11 // pred_check_branch
          %318 = sbr.rel (%p316) target = $region20
        $region19: #{dqn_forward.1} parent=11 // pred_region
          %s320 = ssub.s32 48, 48
          %321 = vsyncadd [#allocation6], %s320
          %s323 = sshll.u32 [#allocation5], 4
          %s324 = int_to_ptr.vmem [resolvable:$true] %s323
          %326 = dma.hbm_to_vmem [thread:$0]  %s2, 48, %s324, [#allocation6]
        $region20: #{dqn_forward.1} parent=11 // pred_fallthru
          _
        // Predicated region
        $region21: #{dqn_forward.1} parent=11 // pred_check
          %p327 = pneg %p115
        $region22: #{dqn_forward.1} parent=11 // pred_check_branch
          %329 = sbr.rel (%p327) target = $region24
        $region23: #{dqn_forward.1} parent=11 // pred_region
          %s331 = ssub.s32 20480, 20480
          %332 = vsyncadd [#allocation6], %s331
          %s333 = sshll.u32 [#allocation7], 4
          %s334 = int_to_ptr.vmem [resolvable:$true] %s333
          %339 = dma.hbm_to_vmem [thread:$0]  %s3, 20480, %s334, [#allocation6], 128, 128, 8
        $region24: #{dqn_forward.1} parent=11 // pred_fallthru
          _
        // Predicated region
        $region25: #{dqn_forward.1} parent=11 // pred_check
          %p340 = pneg %p136
        $region26: #{dqn_forward.1} parent=11 // pred_check_branch
          %342 = sbr.rel (%p340) target = $region28
        $region27: #{dqn_forward.1} parent=11 // pred_region
          %s344 = ssub.s32 32, 32
          %345 = vsyncadd [#allocation9], %s344
          %s347 = sshll.u32 [#allocation8], 4
          %s348 = int_to_ptr.vmem [resolvable:$true] %s347
          %350 = dma.hbm_to_vmem [thread:$0]  %s4, 32, %s348, [#allocation9]
        $region28: #{dqn_forward.1} parent=11 // pred_fallthru
          _
        // Predicated region
        $region29: #{dqn_forward.1} parent=11 // pred_check
          %p351 = pneg %p157
        $region30: #{dqn_forward.1} parent=11 // pred_check_branch
          %353 = sbr.rel (%p351) target = $region32
        $region31: #{dqn_forward.1} parent=11 // pred_region
          %s355 = ssub.s32 6144, 6144
          %356 = vsyncadd [#allocation9], %s355
          %s357 = sshll.u32 [#allocation10], 4
          %s358 = int_to_ptr.vmem [resolvable:$true] %s357
          %363 = dma.hbm_to_vmem [thread:$0]  %s5, 6144, %s358, [#allocation9], 64, 64, 4
        $region32: #{dqn_forward.1} parent=11 // pred_fallthru
          _
        // Predicated region
        $region33: #{dqn_forward.1} parent=11 // pred_check
          %p364 = pneg %p178
        $region34: #{dqn_forward.1} parent=11 // pred_check_branch
          %366 = sbr.rel (%p364) target = $region36
        $region35: #{dqn_forward.1} parent=11 // pred_region
          %s368 = ssub.s32 16, 16
          %369 = vsyncadd [#allocation12], %s368
          %s371 = sshll.u32 [#allocation11], 4
          %s372 = int_to_ptr.vmem [resolvable:$true] %s371
          %374 = dma.hbm_to_vmem [thread:$0]  %s6, 16, %s372, [#allocation12]
        $region36: #{dqn_forward.1} parent=11 // pred_fallthru
          _
        // Predicated region
        $region37: #{dqn_forward.1} parent=11 // pred_check
          %p375 = pneg %p199
        $region38: #{dqn_forward.1} parent=11 // pred_check_branch
          %377 = sbr.rel (%p375) target = $region40
        $region39: #{dqn_forward.1} parent=11 // pred_region
          %s379 = ssub.s32 8192, 8192
          %380 = vsyncadd [#allocation12], %s379
          %s381 = sshll.u32 [#allocation13], 4
          %s382 = int_to_ptr.vmem [resolvable:$true] %s381
          %387 = dma.hbm_to_vmem [thread:$0]  %s7, 8192, %s382, [#allocation12], 256, 256, 16
        $region40: #{dqn_forward.1} parent=11 // pred_fallthru
          _
        // Predicated region
        $region41: #{dqn_forward.1} parent=11 // pred_check
          %p388 = pneg %p220
        $region42: #{dqn_forward.1} parent=11 // pred_check_branch
          %390 = sbr.rel (%p388) target = $region44
        $region43: #{dqn_forward.1} parent=11 // pred_region
          %s392 = ssub.s32 64, 64
          %393 = vsyncadd [#allocation15], %s392
          %s395 = sshll.u32 [#allocation14], 4
          %s396 = int_to_ptr.vmem [resolvable:$true] %s395
          %398 = dma.hbm_to_vmem [thread:$0]  %s8, 64, %s396, [#allocation15]
        $region44: #{dqn_forward.1} parent=11 // pred_fallthru
          _
        // Predicated region
        $region45: #{dqn_forward.1} parent=11 // pred_check
          %p399 = pneg %p241
        $region46: #{dqn_forward.1} parent=11 // pred_check_branch
          %401 = sbr.rel (%p399) target = $region48
        $region47: #{dqn_forward.1} parent=11 // pred_region
          %s403 = ssub.s32 4096, 4096
          %404 = vsyncadd [#allocation15], %s403
          %s405 = sshll.u32 [#allocation16], 4
          %s406 = int_to_ptr.vmem [resolvable:$true] %s405
          %411 = dma.hbm_to_vmem [thread:$0]  %s9, 4096, %s406, [#allocation15], 64, 64, 4
        $region48: #{dqn_forward.1} parent=11 // pred_fallthru
          _
        // Predicated region
        $region49: #{dqn_forward.1} parent=11 // pred_check
          %p412 = pneg %p262
        $region50: #{dqn_forward.1} parent=11 // pred_check_branch
          %414 = sbr.rel (%p412) target = $region52
        $region51: #{dqn_forward.1} parent=11 // pred_region
          %s416 = ssub.s32 16, 16
          %417 = vsyncadd [#allocation18], %s416
          %s419 = sshll.u32 [#allocation17], 4
          %s420 = int_to_ptr.vmem [resolvable:$true] %s419
          %422 = dma.hbm_to_vmem [thread:$0]  %s10, 16, %s420, [#allocation18]
        $region52: #{dqn_forward.1} parent=11 // pred_fallthru
          _
      $region12: #{dqn_forward.1} parent=5 // pred_fallthru
        _
      %p423 = scmp.lt.s32.totalorder %s26, 2
      // Predicated region
      $region53: #{dqn_forward.1} parent=5 // pred_check
        %p424 = pneg %p423
      $region54: #{dqn_forward.1} parent=5 // pred_check_branch
        %426 = sbr.rel (%p424) target = $region56
      $region55: #{dqn_forward.1} parent=5 // pred_region
        // Predicated region
        $region57: #{dqn_forward.1} parent=55 // pred_check
          %p427 = pneg %p46
        $region58: #{dqn_forward.1} parent=55 // pred_check_branch
          %429 = sbr.rel (%p427) target = $region60
        $region59: #{dqn_forward.1} parent=55 // pred_region
          %p430 = scmp.lt.s32.totalorder %s26, 1
          %s431 = scalar_select %p430, %s26, 1
          %s432 = smul.addr %s431, 12
          %s433 = smul.addr %s432, 4
          %s434 = scalar_lea.vmem %s0, %s433
        $region60: #{dqn_forward.1} parent=55 // pred_fallthru
          _
      $region56: #{dqn_forward.1} parent=5 // pred_fallthru
        _
      %p435 = scmp.le.s32.totalorder 1, %s26
      %p436 = scmp.lt.s32.totalorder %s26, 3
      %p437 = pnand %p435, %p436
      %p438 = pneg %p437
      // Predicated region
      $region61: #{dqn_forward.1} parent=5 // pred_check
        _
      $region62: #{dqn_forward.1} parent=5 // pred_check_branch
        %440 = sbr.rel (%p437) target = $region64
      $region63: #{dqn_forward.1} parent=5 // pred_region
        %s441 = ssub.s32 %s26, 1
        // Predicated region
        $region65: #{dqn_forward.1} parent=63 // pred_check
          %p442 = pneg %p73
        $region66: #{dqn_forward.1} parent=63 // pred_check_branch
          %444 = sbr.rel (%p442) target = $region68
        $region67: #{dqn_forward.1} parent=63 // pred_region
          %445 = dma.done [#allocation3], 33792
        $region68: #{dqn_forward.1} parent=63 // pred_fallthru
          _
        // Predicated region
        $region69: #{dqn_forward.1} parent=63 // pred_check
          %p446 = pneg %p94
        $region70: #{dqn_forward.1} parent=63 // pred_check_branch
          %448 = sbr.rel (%p446) target = $region72
        $region71: #{dqn_forward.1} parent=63 // pred_region
          %449 = dma.done [#allocation6], 48
        $region72: #{dqn_forward.1} parent=63 // pred_fallthru
          _
        // Predicated region
        $region73: #{dqn_forward.1} parent=63 // pred_check
          %p450 = pneg %p115
        $region74: #{dqn_forward.1} parent=63 // pred_check_branch
          %452 = sbr.rel (%p450) target = $region76
        $region75: #{dqn_forward.1} parent=63 // pred_region
          %453 = dma.done [#allocation6], 20480
        $region76: #{dqn_forward.1} parent=63 // pred_fallthru
          _
        // Predicated region
        $region77: #{dqn_forward.1} parent=63 // pred_check
          %p454 = pneg %p136
        $region78: #{dqn_forward.1} parent=63 // pred_check_branch
          %456 = sbr.rel (%p454) target = $region80
        $region79: #{dqn_forward.1} parent=63 // pred_region
          %457 = dma.done [#allocation9], 32
        $region80: #{dqn_forward.1} parent=63 // pred_fallthru
          _
        // Predicated region
        $region81: #{dqn_forward.1} parent=63 // pred_check
          %p458 = pneg %p157
        $region82: #{dqn_forward.1} parent=63 // pred_check_branch
          %460 = sbr.rel (%p458) target = $region84
        $region83: #{dqn_forward.1} parent=63 // pred_region
          %461 = dma.done [#allocation9], 6144
        $region84: #{dqn_forward.1} parent=63 // pred_fallthru
          _
        // Predicated region
        $region85: #{dqn_forward.1} parent=63 // pred_check
          %p462 = pneg %p178
        $region86: #{dqn_forward.1} parent=63 // pred_check_branch
          %464 = sbr.rel (%p462) target = $region88
        $region87: #{dqn_forward.1} parent=63 // pred_region
          %465 = dma.done [#allocation12], 16
        $region88: #{dqn_forward.1} parent=63 // pred_fallthru
          _
        // Predicated region
        $region89: #{dqn_forward.1} parent=63 // pred_check
          %p466 = pneg %p199
        $region90: #{dqn_forward.1} parent=63 // pred_check_branch
          %468 = sbr.rel (%p466) target = $region92
        $region91: #{dqn_forward.1} parent=63 // pred_region
          %469 = dma.done [#allocation12], 8192
        $region92: #{dqn_forward.1} parent=63 // pred_fallthru
          _
        // Predicated region
        $region93: #{dqn_forward.1} parent=63 // pred_check
          %p470 = pneg %p220
        $region94: #{dqn_forward.1} parent=63 // pred_check_branch
          %472 = sbr.rel (%p470) target = $region96
        $region95: #{dqn_forward.1} parent=63 // pred_region
          %473 = dma.done [#allocation15], 64
        $region96: #{dqn_forward.1} parent=63 // pred_fallthru
          _
        // Predicated region
        $region97: #{dqn_forward.1} parent=63 // pred_check
          %p474 = pneg %p241
        $region98: #{dqn_forward.1} parent=63 // pred_check_branch
          %476 = sbr.rel (%p474) target = $region100
        $region99: #{dqn_forward.1} parent=63 // pred_region
          %477 = dma.done [#allocation15], 4096
        $region100: #{dqn_forward.1} parent=63 // pred_fallthru
          _
        // Predicated region
        $region101: #{dqn_forward.1} parent=63 // pred_check
          %p478 = pneg %p262
        $region102: #{dqn_forward.1} parent=63 // pred_check_branch
          %480 = sbr.rel (%p478) target = $region104
        $region103: #{dqn_forward.1} parent=63 // pred_region
          %481 = dma.done [#allocation18], 16
        $region104: #{dqn_forward.1} parent=63 // pred_fallthru
          _
        %p482 = scmp.lt.s32.totalorder %s31, 1
        %s483 = scalar_select %p482, %s31, 1
        %s484 = smul.addr %s483, 12
        %s485 = smul.addr %s484, 4
        %s486 = scalar_lea.vmem %s0, %s485
        %p487 = pneg %p52
        %p488 = pneg %p49
        %p489 = pneg %p73
        %p490 = pneg %p70
        %p491 = pneg %p94
        %p492 = pneg %p91
        %p493 = pneg %p115
        %p494 = pneg %p112
        %p495 = pneg %p136
        %p496 = pneg %p133
        %p497 = pneg %p157
        %p498 = pneg %p154
        %p499 = pneg %p178
        %p500 = pneg %p175
        %p501 = pneg %p199
        %p502 = pneg %p196
        %p503 = pneg %p220
        %p504 = pneg %p217
        %p505 = pneg %p241
        %p506 = pneg %p238
        %p507 = pneg %p262
        %p508 = pneg %p259
        %p509 = pneg %p288
        %p510 = pneg %p285
        %s511 = sand.u32 %s275, 1
        %s512 = scalar_lea.sflag [#allocation4], %s511
        %s513 = sand.u32 %s275, 1
        %s514 = scalar_lea.vmem [#allocation19], %s513
        %p515 = scmp.lt.s32.totalorder %s31, 1
        %s516 = scalar_select %p515, %s31, 1
        %s517 = smul.addr %s516, 12
        %s518 = smul.addr %s517, 4
        %s519 = scalar_lea.vmem %s0, %s518
        %v521 = vld [vmem:[%s519] sm:$0xff]
        %v522 = vld [vmem:[%s519 + $0x8] sm:$0xff]
        %v523 = vld [vmem:[%s519 + $0x10] sm:$0xff]
        %v524 = vld [vmem:[%s519 + $0x18] sm:$0xff]
        %v525 = vld [vmem:[%s519 + $0x20] sm:$0xff]
        %v526 = vld [vmem:[%s519 + $0x28] sm:$0x33]
        %v527 = vld [vmem:[#allocation2] sm:$0xff]
        %v528 = vld [vmem:[#allocation2 + $0x8] sm:$0xf]
        %v529 = vld [vmem:[#allocation2 + $0xc] sm:$0xff]
        %v530 = vld [vmem:[#allocation2 + $0x14] sm:$0xf]
        %v531 = vld [vmem:[#allocation2 + $0x18] sm:$0xff]
        %v532 = vld [vmem:[#allocation2 + $0x20] sm:$0xf]
        %v533 = vld [vmem:[#allocation2 + $0x24] sm:$0xff]
        %v534 = vld [vmem:[#allocation2 + $0x2c] sm:$0xf]
        %v535 = vld [vmem:[#allocation2 + $0x30] sm:$0xff]
        %v536 = vld [vmem:[#allocation2 + $0x38] sm:$0xf]
        %v537 = vld [vmem:[#allocation2 + $0x3c] sm:$0xff]
        %v538 = vld [vmem:[#allocation2 + $0x44] sm:$0xf]
        %v539 = vld [vmem:[#allocation2 + $0x48] sm:$0xff]
        %v540 = vld [vmem:[#allocation2 + $0x50] sm:$0xf]
        %v541 = vld [vmem:[#allocation2 + $0x54] sm:$0xff]
        %v542 = vld [vmem:[#allocation2 + $0x5c] sm:$0xf]
        %v543 = vld [vmem:[#allocation2 + $0x60] sm:$0xff]
        %v544 = vld [vmem:[#allocation2 + $0x68] sm:$0xf]
        %v545 = vld [vmem:[#allocation2 + $0x6c] sm:$0xff]
        %v546 = vld [vmem:[#allocation2 + $0x74] sm:$0xf]
        %v547 = vld [vmem:[#allocation2 + $0x78] sm:$0xff]
        %v548 = vld [vmem:[#allocation2 + $0x80] sm:$0xf]
        %v549 = vld [vmem:[#allocation2 + $0x84] sm:$0xff]
        %v550 = vld [vmem:[#allocation2 + $0x8c] sm:$0xf]
        %v551 = vld [vmem:[#allocation2 + $0x90] sm:$0xff]
        %v552 = vld [vmem:[#allocation2 + $0x98] sm:$0xf]
        %v553 = vld [vmem:[#allocation2 + $0x9c] sm:$0xff]
        %v554 = vld [vmem:[#allocation2 + $0xa4] sm:$0xf]
        %v555 = vld [vmem:[#allocation2 + $0xa8] sm:$0xff]
        %v556 = vld [vmem:[#allocation2 + $0xb0] sm:$0xf]
        %v557 = vld [vmem:[#allocation2 + $0xb4] sm:$0xff]
        %v558 = vld [vmem:[#allocation2 + $0xbc] sm:$0xf]
        %v559 = vld [vmem:[#allocation2 + $0xc0] sm:$0xff]
        %v560 = vld [vmem:[#allocation2 + $0xc8] sm:$0xf]
        %v561 = vld [vmem:[#allocation2 + $0xcc] sm:$0xff]
        %v562 = vld [vmem:[#allocation2 + $0xd4] sm:$0xf]
        %v563 = vld [vmem:[#allocation2 + $0xd8] sm:$0xff]
        %v564 = vld [vmem:[#allocation2 + $0xe0] sm:$0xf]
        %v565 = vld [vmem:[#allocation2 + $0xe4] sm:$0xff]
        %v566 = vld [vmem:[#allocation2 + $0xec] sm:$0xf]
        %v567 = vld [vmem:[#allocation2 + $0xf0] sm:$0xff]
        %v568 = vld [vmem:[#allocation2 + $0xf8] sm:$0xf]
        %v569 = vld [vmem:[#allocation2 + $0xfc] sm:$0xff]
        %v570 = vld [vmem:[#allocation2 + $0x104] sm:$0xf]
        %s571 = scalar_lea.vmem [#allocation2], 264
        %v572 = vld [vmem:[%s571] sm:$0xff]
        %v573 = vld [vmem:[%s571 + $0x8] sm:$0xf]
        %v574 = vld [vmem:[%s571 + $0xc] sm:$0xff]
        %v575 = vld [vmem:[%s571 + $0x14] sm:$0xf]
        %v576 = vld [vmem:[%s571 + $0x18] sm:$0xff]
        %v577 = vld [vmem:[%s571 + $0x20] sm:$0xf]
        %v578 = vld [vmem:[%s571 + $0x24] sm:$0xff]
        %v579 = vld [vmem:[%s571 + $0x2c] sm:$0xf]
        %v580 = vld [vmem:[%s571 + $0x30] sm:$0xff]
        %v581 = vld [vmem:[%s571 + $0x38] sm:$0xf]
        %v582 = vld [vmem:[%s571 + $0x3c] sm:$0xff]
        %v583 = vld [vmem:[%s571 + $0x44] sm:$0xf]
        %v584 = vld [vmem:[%s571 + $0x48] sm:$0xff]
        %v585 = vld [vmem:[%s571 + $0x50] sm:$0xf]
        %v586 = vld [vmem:[%s571 + $0x54] sm:$0xff]
        %v587 = vld [vmem:[%s571 + $0x5c] sm:$0xf]
        %v588 = vld [vmem:[%s571 + $0x60] sm:$0xff]
        %v589 = vld [vmem:[%s571 + $0x68] sm:$0xf]
        %v590 = vld [vmem:[%s571 + $0x6c] sm:$0xff]
        %v591 = vld [vmem:[%s571 + $0x74] sm:$0xf]
        %v592 = vld [vmem:[%s571 + $0x78] sm:$0xff]
        %v593 = vld [vmem:[%s571 + $0x80] sm:$0xf]
        %v594 = vld [vmem:[%s571 + $0x84] sm:$0xff]
        %v595 = vld [vmem:[%s571 + $0x8c] sm:$0xf]
        %v596 = vld [vmem:[%s571 + $0x90] sm:$0xff]
        %v597 = vld [vmem:[%s571 + $0x98] sm:$0xf]
        %v598 = vld [vmem:[%s571 + $0x9c] sm:$0xff]
        %v599 = vld [vmem:[%s571 + $0xa4] sm:$0xf]
        %v600 = vld [vmem:[%s571 + $0xa8] sm:$0xff]
        %v601 = vld [vmem:[%s571 + $0xb0] sm:$0xf]
        %v602 = vld [vmem:[%s571 + $0xb4] sm:$0xff]
        %v603 = vld [vmem:[%s571 + $0xbc] sm:$0xf]
        %v604 = vld [vmem:[%s571 + $0xc0] sm:$0xff]
        %v605 = vld [vmem:[%s571 + $0xc8] sm:$0xf]
        %v606 = vld [vmem:[%s571 + $0xcc] sm:$0xff]
        %v607 = vld [vmem:[%s571 + $0xd4] sm:$0xf]
        %v608 = vld [vmem:[%s571 + $0xd8] sm:$0xff]
        %v609 = vld [vmem:[%s571 + $0xe0] sm:$0xf]
        %v610 = vld [vmem:[%s571 + $0xe4] sm:$0xff]
        %v611 = vld [vmem:[%s571 + $0xec] sm:$0xf]
        %v612 = vld [vmem:[%s571 + $0xf0] sm:$0xff]
        %v613 = vld [vmem:[%s571 + $0xf8] sm:$0xf]
        %v614 = vld [vmem:[%s571 + $0xfc] sm:$0xff]
        %v615 = vld [vmem:[%s571 + $0x104] sm:$0xf]
        %v621 = vunpack.c.l.b16 %v521
        %v622 = vunpack.c.h.b16 %v521
        %v623 = vunpack.c.l.b16 %v522
        %v624 = vunpack.c.h.b16 %v522
        %v625 = vunpack.c.l.b16 %v523
        %v626 = vunpack.c.h.b16 %v523
        %v627 = vunpack.c.l.b16 %v524
        %v628 = vunpack.c.h.b16 %v524
        %v629 = vunpack.c.l.b16 %v525
        %v630 = vunpack.c.h.b16 %v525
        %v631 = vpack.c.b16 %v623, %v621
        %v632 = vpack.c.b16 %v624, %v622
        %v633 = vpack.c.b16 %v627, %v625
        %v634 = vpack.c.b16 %v628, %v626
        %v635 = vpack.c.b16 %v629, %v629
        %v636 = vpack.c.b16 %v630, %v630
        %vm637 = vsmask.f32 7424
        %v639 = vshrl.u32 %v631, 16
        %v641 = vshll.u32 %v631, 16
        %v643 = vrot.slane %v641, 1
        %v644 = vor.u32 %v639, %v643
        %v646 = vshll.u32 %v633, 16
        %v648 = vrot.slane %v646, 1
        %v649 = vsel %vm637, %v644, %v648
        %v651 = vshrl.u32 %v632, 16
        %v653 = vshll.u32 %v632, 16
        %v655 = vrot.slane %v653, 1
        %v656 = vor.u32 %v651, %v655
        %v658 = vshll.u32 %v634, 16
        %v660 = vrot.slane %v658, 1
        %v661 = vsel %vm637, %v656, %v660
        %v662 = vshrl.u32 %v633, 16
        %v664 = vor.u32 %v662, %v648
        %v666 = vshll.u32 %v635, 16
        %v668 = vrot.slane %v666, 1
        %v669 = vsel %vm637, %v664, %v668
        %v670 = vshrl.u32 %v634, 16
        %v672 = vor.u32 %v670, %v660
        %v674 = vshll.u32 %v636, 16
        %v676 = vrot.slane %v674, 1
        %v677 = vsel %vm637, %v672, %v676
        %v678 = vshrl.u32 %v635, 16
        %v680 = vor.u32 %v678, %v668
        %v681 = vshrl.u32 %v636, 16
        %v683 = vor.u32 %v681, %v676
        %v731 = vunpack.c.l.b16 %v572
        %v732 = vunpack.c.h.b16 %v572
        %v733 = vunpack.c.l.b16 %v573
        %v734 = vunpack.c.l.b16 %v574
        %v735 = vunpack.c.h.b16 %v574
        %v736 = vunpack.c.l.b16 %v575
        %v737 = vunpack.c.l.b16 %v576
        %v738 = vunpack.c.h.b16 %v576
        %v739 = vunpack.c.l.b16 %v577
        %v740 = vunpack.c.l.b16 %v578
        %v741 = vunpack.c.h.b16 %v578
        %v742 = vunpack.c.l.b16 %v579
        %v743 = vunpack.c.l.b16 %v580
        %v744 = vunpack.c.h.b16 %v580
        %v745 = vunpack.c.l.b16 %v581
        %v746 = vunpack.c.l.b16 %v582
        %v747 = vunpack.c.h.b16 %v582
        %v748 = vunpack.c.l.b16 %v583
        %v749 = vunpack.c.l.b16 %v584
        %v750 = vunpack.c.h.b16 %v584
        %v751 = vunpack.c.l.b16 %v585
        %v752 = vunpack.c.l.b16 %v586
        %v753 = vunpack.c.h.b16 %v586
        %v754 = vunpack.c.l.b16 %v587
        %v755 = vunpack.c.l.b16 %v588
        %v756 = vunpack.c.h.b16 %v588
        %v757 = vunpack.c.l.b16 %v589
        %v758 = vunpack.c.l.b16 %v590
        %v759 = vunpack.c.h.b16 %v590
        %v760 = vunpack.c.l.b16 %v591
        %v761 = vunpack.c.l.b16 %v592
        %v762 = vunpack.c.h.b16 %v592
        %v763 = vunpack.c.l.b16 %v593
        %v764 = vunpack.c.l.b16 %v594
        %v765 = vunpack.c.h.b16 %v594
        %v766 = vunpack.c.l.b16 %v595
        %v767 = vunpack.c.l.b16 %v596
        %v768 = vunpack.c.h.b16 %v596
        %v769 = vunpack.c.l.b16 %v597
        %v770 = vunpack.c.l.b16 %v598
        %v771 = vunpack.c.h.b16 %v598
        %v772 = vunpack.c.l.b16 %v599
        %v773 = vunpack.c.l.b16 %v600
        %v774 = vunpack.c.h.b16 %v600
        %v775 = vunpack.c.l.b16 %v601
        %v776 = vunpack.c.l.b16 %v602
        %v777 = vunpack.c.h.b16 %v602
        %v778 = vunpack.c.l.b16 %v603
        %v779 = vunpack.c.l.b16 %v604
        %v780 = vunpack.c.h.b16 %v604
        %v781 = vunpack.c.l.b16 %v605
        %v782 = vunpack.c.l.b16 %v606
        %v783 = vunpack.c.h.b16 %v606
        %v784 = vunpack.c.l.b16 %v607
        %v785 = vunpack.c.l.b16 %v608
        %v786 = vunpack.c.h.b16 %v608
        %v787 = vunpack.c.l.b16 %v609
        %v788 = vunpack.c.l.b16 %v610
        %v789 = vunpack.c.h.b16 %v610
        %v790 = vunpack.c.l.b16 %v611
        %v791 = vunpack.c.l.b16 %v612
        %v792 = vunpack.c.h.b16 %v612
        %v793 = vunpack.c.l.b16 %v613
        %v794 = vunpack.c.l.b16 %v614
        %v795 = vunpack.c.h.b16 %v614
        %v796 = vunpack.c.l.b16 %v615
        %v797 = vpack.c.b16 %v734, %v731
        %v798 = vpack.c.b16 %v735, %v732
        %v799 = vpack.c.b16 %v736, %v733
        %v800 = vpack.c.b16 %v740, %v737
        %v801 = vpack.c.b16 %v741, %v738
        %v802 = vpack.c.b16 %v742, %v739
        %v803 = vpack.c.b16 %v746, %v743
        %v804 = vpack.c.b16 %v747, %v744
        %v805 = vpack.c.b16 %v748, %v745
        %v806 = vpack.c.b16 %v752, %v749
        %v807 = vpack.c.b16 %v753, %v750
        %v808 = vpack.c.b16 %v754, %v751
        %v809 = vpack.c.b16 %v758, %v755
        %v810 = vpack.c.b16 %v759, %v756
        %v811 = vpack.c.b16 %v760, %v757
        %v812 = vpack.c.b16 %v764, %v761
        %v813 = vpack.c.b16 %v765, %v762
        %v814 = vpack.c.b16 %v766, %v763
        %v815 = vpack.c.b16 %v770, %v767
        %v816 = vpack.c.b16 %v771, %v768
        %v817 = vpack.c.b16 %v772, %v769
        %v818 = vpack.c.b16 %v776, %v773
        %v819 = vpack.c.b16 %v777, %v774
        %v820 = vpack.c.b16 %v778, %v775
        %v821 = vpack.c.b16 %v782, %v779
        %v822 = vpack.c.b16 %v783, %v780
        %v823 = vpack.c.b16 %v784, %v781
        %v824 = vpack.c.b16 %v788, %v785
        %v825 = vpack.c.b16 %v789, %v786
        %v826 = vpack.c.b16 %v790, %v787
        %v827 = vpack.c.b16 %v794, %v791
        %v828 = vpack.c.b16 %v795, %v792
        %v829 = vpack.c.b16 %v796, %v793
        %vm863 = vcmask 392192
        %v865 = vsel %vm863, %v661, 0
        %v868 = vsel %vm863, %v677, 0
        %v871 = vsel %vm863, %v683, 0
        %873 = vmatprep.subr.bf16.mxu0 %v798
        %874 = vmatpush1.bf16.msra.mxu0 %v797
        %875 = vmatprep.subr.bf16.mxu0 %v801
        %876 = vmatpush1.bf16.msra.mxu0 %v800
        %877 = vmatprep.subr.bf16.mxu0 %v804
        %878 = vmatpush1.bf16.msra.mxu0 %v803
        %879 = vmatprep.subr.bf16.mxu0 %v807
        %880 = vmatpush1.bf16.msra.mxu0 %v806
        %881 = vmatprep.subr.bf16.mxu0 %v810
        %882 = vmatpush1.bf16.msra.mxu0 %v809
        %883 = vmatprep.subr.bf16.mxu0 %v813
        %884 = vmatpush1.bf16.msra.mxu0 %v812
        %885 = vmatprep.subr.bf16.mxu0 %v816
        %886 = vmatpush1.bf16.msra.mxu0 %v815
        %887 = vmatprep.subr.bf16.mxu0 %v819
        %888 = vmatpush1.bf16.msra.mxu0 %v818
        %889 = vmatprep.subr.bf16.mxu0 %v822
        %890 = vmatpush1.bf16.msra.mxu0 %v821
        %891 = vmatprep.subr.bf16.mxu0 %v825
        %892 = vmatpush1.bf16.msra.mxu0 %v824
        %893 = vmatprep.subr.bf16.mxu0 %v828
        %894 = vmatpush1.bf16.msra.mxu0 %v827
        %895 = vmatprep.subr.bf16.mxu0 0
        %896 = vmatpush1.bf16.msra.mxu0 0
        %897 = vmatprep.subr.bf16.mxu0 0
        %898 = vmatpush1.bf16.msra.mxu0 0
        %899 = vmatprep.subr.bf16.mxu0 0
        %900 = vmatpush1.bf16.msra.mxu0 0
        %901 = vmatprep.subr.bf16.mxu0 0
        %902 = vmatpush1.bf16.msra.mxu0 0
        %903 = vmatprep.subr.bf16.mxu0 0
        %904 = vmatpush1.bf16.msra.mxu0 0
        %905 = vmatprep.mubr.bf16.mxu0 %v865
        %906 = vmatmul.mubr.bf16.gmra.mrb[0].mxu0 %v649
        %v907 = vpop.f32.mrb[0].mxu0
        %v908 = vadd.f32 0.0, %v907
        %v909 = vpop.f32.mrb[0].mxu0
        %v910 = vadd.f32 0.0, %v909
        %v911 = vpop.f32.mrb[0].mxu0
        %v912 = vadd.f32 0.0, %v911
        %v913 = vpop.f32.mrb[0].mxu0
        %v914 = vadd.f32 0.0, %v913
        %915 = vmatprep.mubr.bf16.mxu0 %v868
        %916 = vmatmul.mubr.bf16.gmra.mrb[0].mxu0 %v669
        %v917 = vpop.f32.mrb[0].mxu0
        %v918 = vadd.f32 0.0, %v917
        %v919 = vpop.f32.mrb[0].mxu0
        %v920 = vadd.f32 0.0, %v919
        %v921 = vpop.f32.mrb[0].mxu0
        %v922 = vadd.f32 0.0, %v921
        %v923 = vpop.f32.mrb[0].mxu0
        %v924 = vadd.f32 0.0, %v923
        %925 = vmatprep.mubr.bf16.mxu0 %v871
        %926 = vmatmul.mubr.bf16.gmra.mrb[0].mxu0 %v680
        %v927 = vpop.f32.mrb[0].mxu0
        %v928 = vadd.f32 0.0, %v927
        %v929 = vpop.f32.mrb[0].mxu0
        %v930 = vadd.f32 0.0, %v929
        %v931 = vpop.f32.mrb[0].mxu0
        %v932 = vpop.f32.mrb[0].mxu0
        %933 = vdwg.mxu0
        %934 = vmatprep.subr.bf16.mxu0 0
        %935 = vmatpush1.bf16.msra.mxu0 %v799
        %936 = vmatprep.subr.bf16.mxu0 0
        %937 = vmatpush1.bf16.msra.mxu0 %v802
        %938 = vmatprep.subr.bf16.mxu0 0
        %939 = vmatpush1.bf16.msra.mxu0 %v805
        %940 = vmatprep.subr.bf16.mxu0 0
        %941 = vmatpush1.bf16.msra.mxu0 %v808
        %942 = vmatprep.subr.bf16.mxu0 0
        %943 = vmatpush1.bf16.msra.mxu0 %v811
        %944 = vmatprep.subr.bf16.mxu0 0
        %945 = vmatpush1.bf16.msra.mxu0 %v814
        %946 = vmatprep.subr.bf16.mxu0 0
        %947 = vmatpush1.bf16.msra.mxu0 %v817
        %948 = vmatprep.subr.bf16.mxu0 0
        %949 = vmatpush1.bf16.msra.mxu0 %v820
        %950 = vmatprep.subr.bf16.mxu0 0
        %951 = vmatpush1.bf16.msra.mxu0 %v823
        %952 = vmatprep.subr.bf16.mxu0 0
        %953 = vmatpush1.bf16.msra.mxu0 %v826
        %954 = vmatprep.subr.bf16.mxu0 0
        %955 = vmatpush1.bf16.msra.mxu0 %v829
        %956 = vmatprep.subr.bf16.mxu0 0
        %957 = vmatpush1.bf16.msra.mxu0 0
        %958 = vmatprep.subr.bf16.mxu0 0
        %959 = vmatpush1.bf16.msra.mxu0 0
        %960 = vmatprep.subr.bf16.mxu0 0
        %961 = vmatpush1.bf16.msra.mxu0 0
        %962 = vmatprep.subr.bf16.mxu0 0
        %963 = vmatpush1.bf16.msra.mxu0 0
        %964 = vmatprep.subr.bf16.mxu0 0
        %965 = vmatpush1.bf16.msra.mxu0 0
        %966 = vmatprep.mubr.bf16.mxu0 %v865
        %967 = vmatmul.mubr.bf16.gmra.mrb[0].mxu0 %v649
        %v968 = vpop.f32.mrb[0].mxu0
        %v969 = vadd.f32 0.0, %v968
        %v970 = vpop.f32.mrb[0].mxu0
        %v971 = vpop.f32.mrb[0].mxu0
        %v972 = vadd.f32 0.0, %v971
        %v973 = vpop.f32.mrb[0].mxu0
        %974 = vmatprep.mubr.bf16.mxu0 %v868
        %975 = vmatmul.mubr.bf16.gmra.mrb[0].mxu0 %v669
        %v976 = vpop.f32.mrb[0].mxu0
        %v977 = vadd.f32 0.0, %v976
        %v978 = vpop.f32.mrb[0].mxu0
        %v979 = vpop.f32.mrb[0].mxu0
        %v980 = vadd.f32 0.0, %v979
        %v981 = vpop.f32.mrb[0].mxu0
        %982 = vmatprep.mubr.bf16.mxu0 %v871
        %983 = vmatmul.mubr.bf16.gmra.mrb[0].mxu0 %v680
        %v984 = vpop.f32.mrb[0].mxu0
        %v985 = vadd.f32 0.0, %v984
        %v986 = vpop.f32.mrb[0].mxu0
        %v987 = vpop.f32.mrb[0].mxu0
        %v988 = vpop.f32.mrb[0].mxu0
        %989 = vdwg.mxu0
        %v1037 = vunpack.c.l.b16 %v527
        %v1038 = vunpack.c.h.b16 %v527
        %v1039 = vunpack.c.l.b16 %v528
        %v1040 = vunpack.c.l.b16 %v529
        %v1041 = vunpack.c.h.b16 %v529
        %v1042 = vunpack.c.l.b16 %v530
        %v1043 = vunpack.c.l.b16 %v531
        %v1044 = vunpack.c.h.b16 %v531
        %v1045 = vunpack.c.l.b16 %v532
        %v1046 = vunpack.c.l.b16 %v533
        %v1047 = vunpack.c.h.b16 %v533
        %v1048 = vunpack.c.l.b16 %v534
        %v1049 = vunpack.c.l.b16 %v535
        %v1050 = vunpack.c.h.b16 %v535
        %v1051 = vunpack.c.l.b16 %v536
        %v1052 = vunpack.c.l.b16 %v537
        %v1053 = vunpack.c.h.b16 %v537
        %v1054 = vunpack.c.l.b16 %v538
        %v1055 = vunpack.c.l.b16 %v539
        %v1056 = vunpack.c.h.b16 %v539
        %v1057 = vunpack.c.l.b16 %v540
        %v1058 = vunpack.c.l.b16 %v541
        %v1059 = vunpack.c.h.b16 %v541
        %v1060 = vunpack.c.l.b16 %v542
        %v1061 = vunpack.c.l.b16 %v543
        %v1062 = vunpack.c.h.b16 %v543
        %v1063 = vunpack.c.l.b16 %v544
        %v1064 = vunpack.c.l.b16 %v545
        %v1065 = vunpack.c.h.b16 %v545
        %v1066 = vunpack.c.l.b16 %v546
        %v1067 = vunpack.c.l.b16 %v547
        %v1068 = vunpack.c.h.b16 %v547
        %v1069 = vunpack.c.l.b16 %v548
        %v1070 = vunpack.c.l.b16 %v549
        %v1071 = vunpack.c.h.b16 %v549
        %v1072 = vunpack.c.l.b16 %v550
        %v1073 = vunpack.c.l.b16 %v551
        %v1074 = vunpack.c.h.b16 %v551
        %v1075 = vunpack.c.l.b16 %v552
        %v1076 = vunpack.c.l.b16 %v553
        %v1077 = vunpack.c.h.b16 %v553
        %v1078 = vunpack.c.l.b16 %v554
        %v1079 = vunpack.c.l.b16 %v555
        %v1080 = vunpack.c.h.b16 %v555
        %v1081 = vunpack.c.l.b16 %v556
        %v1082 = vunpack.c.l.b16 %v557
        %v1083 = vunpack.c.h.b16 %v557
        %v1084 = vunpack.c.l.b16 %v558
        %v1085 = vunpack.c.l.b16 %v559
        %v1086 = vunpack.c.h.b16 %v559
        %v1087 = vunpack.c.l.b16 %v560
        %v1088 = vunpack.c.l.b16 %v561
        %v1089 = vunpack.c.h.b16 %v561
        %v1090 = vunpack.c.l.b16 %v562
        %v1091 = vunpack.c.l.b16 %v563
        %v1092 = vunpack.c.h.b16 %v563
        %v1093 = vunpack.c.l.b16 %v564
        %v1094 = vunpack.c.l.b16 %v565
        %v1095 = vunpack.c.h.b16 %v565
        %v1096 = vunpack.c.l.b16 %v566
        %v1097 = vunpack.c.l.b16 %v567
        %v1098 = vunpack.c.h.b16 %v567
        %v1099 = vunpack.c.l.b16 %v568
        %v1100 = vunpack.c.l.b16 %v569
        %v1101 = vunpack.c.h.b16 %v569
        %v1102 = vunpack.c.l.b16 %v570
        %v1103 = vpack.c.b16 %v1040, %v1037
        %v1104 = vpack.c.b16 %v1041, %v1038
        %v1105 = vpack.c.b16 %v1042, %v1039
        %v1106 = vpack.c.b16 %v1046, %v1043
        %v1107 = vpack.c.b16 %v1047, %v1044
        %v1108 = vpack.c.b16 %v1048, %v1045
        %v1109 = vpack.c.b16 %v1052, %v1049
        %v1110 = vpack.c.b16 %v1053, %v1050
        %v1111 = vpack.c.b16 %v1054, %v1051
        %v1112 = vpack.c.b16 %v1058, %v1055
        %v1113 = vpack.c.b16 %v1059, %v1056
        %v1114 = vpack.c.b16 %v1060, %v1057
        %v1115 = vpack.c.b16 %v1064, %v1061
        %v1116 = vpack.c.b16 %v1065, %v1062
        %v1117 = vpack.c.b16 %v1066, %v1063
        %v1118 = vpack.c.b16 %v1070, %v1067
        %v1119 = vpack.c.b16 %v1071, %v1068
        %v1120 = vpack.c.b16 %v1072, %v1069
        %v1121 = vpack.c.b16 %v1076, %v1073
        %v1122 = vpack.c.b16 %v1077, %v1074
        %v1123 = vpack.c.b16 %v1078, %v1075
        %v1124 = vpack.c.b16 %v1082, %v1079
        %v1125 = vpack.c.b16 %v1083, %v1080
        %v1126 = vpack.c.b16 %v1084, %v1081
        %v1127 = vpack.c.b16 %v1088, %v1085
        %v1128 = vpack.c.b16 %v1089, %v1086
        %v1129 = vpack.c.b16 %v1090, %v1087
        %v1130 = vpack.c.b16 %v1094, %v1091
        %v1131 = vpack.c.b16 %v1095, %v1092
        %v1132 = vpack.c.b16 %v1096, %v1093
        %v1133 = vpack.c.b16 %v1100, %v1097
        %v1134 = vpack.c.b16 %v1101, %v1098
        %v1135 = vpack.c.b16 %v1102, %v1099
        %v1169 = vsel %vm863, %v632, 0
        %v1171 = vsel %vm863, %v634, 0
        %v1173 = vsel %vm863, %v636, 0
        %1175 = vmatprep.subr.bf16.mxu0 %v1104
        %1176 = vmatpush1.bf16.msra.mxu0 %v1103
        %1177 = vmatprep.subr.bf16.mxu0 %v1107
        %1178 = vmatpush1.bf16.msra.mxu0 %v1106
        %1179 = vmatprep.subr.bf16.mxu0 %v1110
        %1180 = vmatpush1.bf16.msra.mxu0 %v1109
        %1181 = vmatprep.subr.bf16.mxu0 %v1113
        %1182 = vmatpush1.bf16.msra.mxu0 %v1112
        %1183 = vmatprep.subr.bf16.mxu0 %v1116
        %1184 = vmatpush1.bf16.msra.mxu0 %v1115
        %1185 = vmatprep.subr.bf16.mxu0 %v1119
        %1186 = vmatpush1.bf16.msra.mxu0 %v1118
        %1187 = vmatprep.subr.bf16.mxu0 %v1122
        %1188 = vmatpush1.bf16.msra.mxu0 %v1121
        %1189 = vmatprep.subr.bf16.mxu0 %v1125
        %1190 = vmatpush1.bf16.msra.mxu0 %v1124
        %1191 = vmatprep.subr.bf16.mxu0 %v1128
        %1192 = vmatpush1.bf16.msra.mxu0 %v1127
        %1193 = vmatprep.subr.bf16.mxu0 %v1131
        %1194 = vmatpush1.bf16.msra.mxu0 %v1130
        %1195 = vmatprep.subr.bf16.mxu0 %v1134
        %1196 = vmatpush1.bf16.msra.mxu0 %v1133
        %1197 = vmatprep.subr.bf16.mxu0 0
        %1198 = vmatpush1.bf16.msra.mxu0 0
        %1199 = vmatprep.subr.bf16.mxu0 0
        %1200 = vmatpush1.bf16.msra.mxu0 0
        %1201 = vmatprep.subr.bf16.mxu0 0
        %1202 = vmatpush1.bf16.msra.mxu0 0
        %1203 = vmatprep.subr.bf16.mxu0 0
        %1204 = vmatpush1.bf16.msra.mxu0 0
        %1205 = vmatprep.subr.bf16.mxu0 0
        %1206 = vmatpush1.bf16.msra.mxu0 0
        %1207 = vmatprep.mubr.bf16.mxu0 %v1169
        %1208 = vmatmul.mubr.bf16.gmra.mrb[0].mxu0 %v631
        %v1209 = vpop.f32.mrb[0].mxu0
        %v1210 = vadd.f32 %v908, %v1209
        %v1211 = vpop.f32.mrb[0].mxu0
        %v1212 = vadd.f32 %v910, %v1211
        %v1213 = vpop.f32.mrb[0].mxu0
        %v1214 = vadd.f32 %v912, %v1213
        %v1215 = vpop.f32.mrb[0].mxu0
        %v1216 = vadd.f32 %v914, %v1215
        %1217 = vmatprep.mubr.bf16.mxu0 %v1171
        %1218 = vmatmul.mubr.bf16.gmra.mrb[0].mxu0 %v633
        %v1219 = vpop.f32.mrb[0].mxu0
        %v1220 = vadd.f32 %v918, %v1219
        %v1221 = vpop.f32.mrb[0].mxu0
        %v1222 = vadd.f32 %v920, %v1221
        %v1223 = vpop.f32.mrb[0].mxu0
        %v1224 = vadd.f32 %v922, %v1223
        %v1225 = vpop.f32.mrb[0].mxu0
        %v1226 = vadd.f32 %v924, %v1225
        %1227 = vmatprep.mubr.bf16.mxu0 %v1173
        %1228 = vmatmul.mubr.bf16.gmra.mrb[0].mxu0 %v635
        %v1229 = vpop.f32.mrb[0].mxu0
        %v1230 = vadd.f32 %v928, %v1229
        %v1231 = vpop.f32.mrb[0].mxu0
        %v1232 = vadd.f32 %v930, %v1231
        %v1233 = vpop.f32.mrb[0].mxu0
        %v1234 = vpop.f32.mrb[0].mxu0
        %1235 = vdwg.mxu0
        %1236 = vmatprep.subr.bf16.mxu0 0
        %1237 = vmatpush1.bf16.msra.mxu0 %v1105
        %1238 = vmatprep.subr.bf16.mxu0 0
        %1239 = vmatpush1.bf16.msra.mxu0 %v1108
        %1240 = vmatprep.subr.bf16.mxu0 0
        %1241 = vmatpush1.bf16.msra.mxu0 %v1111
        %1242 = vmatprep.subr.bf16.mxu0 0
        %1243 = vmatpush1.bf16.msra.mxu0 %v1114
        %1244 = vmatprep.subr.bf16.mxu0 0
        %1245 = vmatpush1.bf16.msra.mxu0 %v1117
        %1246 = vmatprep.subr.bf16.mxu0 0
        %1247 = vmatpush1.bf16.msra.mxu0 %v1120
        %1248 = vmatprep.subr.bf16.mxu0 0
        %1249 = vmatpush1.bf16.msra.mxu0 %v1123
        %1250 = vmatprep.subr.bf16.mxu0 0
        %1251 = vmatpush1.bf16.msra.mxu0 %v1126
        %1252 = vmatprep.subr.bf16.mxu0 0
        %1253 = vmatpush1.bf16.msra.mxu0 %v1129
        %1254 = vmatprep.subr.bf16.mxu0 0
        %1255 = vmatpush1.bf16.msra.mxu0 %v1132
        %1256 = vmatprep.subr.bf16.mxu0 0
        %1257 = vmatpush1.bf16.msra.mxu0 %v1135
        %1258 = vmatprep.subr.bf16.mxu0 0
        %1259 = vmatpush1.bf16.msra.mxu0 0
        %1260 = vmatprep.subr.bf16.mxu0 0
        %1261 = vmatpush1.bf16.msra.mxu0 0
        %1262 = vmatprep.subr.bf16.mxu0 0
        %1263 = vmatpush1.bf16.msra.mxu0 0
        %1264 = vmatprep.subr.bf16.mxu0 0
        %1265 = vmatpush1.bf16.msra.mxu0 0
        %1266 = vmatprep.subr.bf16.mxu0 0
        %1267 = vmatpush1.bf16.msra.mxu0 0
        %1268 = vmatprep.mubr.bf16.mxu0 %v1169
        %1269 = vmatmul.mubr.bf16.gmra.mrb[0].mxu0 %v631
        %v1270 = vpop.f32.mrb[0].mxu0
        %v1271 = vadd.f32 %v969, %v1270
        %v1272 = vpop.f32.mrb[0].mxu0
        %v1273 = vpop.f32.mrb[0].mxu0
        %v1274 = vadd.f32 %v972, %v1273
        %v1275 = vpop.f32.mrb[0].mxu0
        %1276 = vmatprep.mubr.bf16.mxu0 %v1171
        %1277 = vmatmul.mubr.bf16.gmra.mrb[0].mxu0 %v633
        %v1278 = vpop.f32.mrb[0].mxu0
        %v1279 = vadd.f32 %v977, %v1278
        %v1280 = vpop.f32.mrb[0].mxu0
        %v1281 = vpop.f32.mrb[0].mxu0
        %v1282 = vadd.f32 %v980, %v1281
        %v1283 = vpop.f32.mrb[0].mxu0
        %1284 = vmatprep.mubr.bf16.mxu0 %v1173
        %1285 = vmatmul.mubr.bf16.gmra.mrb[0].mxu0 %v635
        %v1286 = vpop.f32.mrb[0].mxu0
        %v1287 = vadd.f32 %v985, %v1286
        %v1288 = vpop.f32.mrb[0].mxu0
        %v1289 = vpop.f32.mrb[0].mxu0
        %v1290 = vpop.f32.mrb[0].mxu0
        %1291 = vdwg.mxu0
        %s1292 = scalar_lea.vmem [#allocation2], 528
        %v1293 = vld [vmem:[%s1292] sm:$0xff]
        %v1294 = vld [vmem:[%s1292 + $0x8] sm:$0xf]
        %v1295 = vld [vmem:[%s1292 + $0xc] sm:$0xff]
        %v1296 = vld [vmem:[%s1292 + $0x14] sm:$0xf]
        %v1297 = vld [vmem:[%s1292 + $0x18] sm:$0xff]
        %v1298 = vld [vmem:[%s1292 + $0x20] sm:$0xf]
        %v1299 = vld [vmem:[%s1292 + $0x24] sm:$0xff]
        %v1300 = vld [vmem:[%s1292 + $0x2c] sm:$0xf]
        %v1301 = vld [vmem:[%s1292 + $0x30] sm:$0xff]
        %v1302 = vld [vmem:[%s1292 + $0x38] sm:$0xf]
        %v1303 = vld [vmem:[%s1292 + $0x3c] sm:$0xff]
        %v1304 = vld [vmem:[%s1292 + $0x44] sm:$0xf]
        %v1305 = vld [vmem:[%s1292 + $0x48] sm:$0xff]
        %v1306 = vld [vmem:[%s1292 + $0x50] sm:$0xf]
        %v1307 = vld [vmem:[%s1292 + $0x54] sm:$0xff]
        %v1308 = vld [vmem:[%s1292 + $0x5c] sm:$0xf]
        %v1309 = vld [vmem:[%s1292 + $0x60] sm:$0xff]
        %v1310 = vld [vmem:[%s1292 + $0x68] sm:$0xf]
        %v1311 = vld [vmem:[%s1292 + $0x6c] sm:$0xff]
        %v1312 = vld [vmem:[%s1292 + $0x74] sm:$0xf]
        %v1313 = vld [vmem:[%s1292 + $0x78] sm:$0xff]
        %v1314 = vld [vmem:[%s1292 + $0x80] sm:$0xf]
        %v1315 = vld [vmem:[%s1292 + $0x84] sm:$0xff]
        %v1316 = vld [vmem:[%s1292 + $0x8c] sm:$0xf]
        %v1317 = vld [vmem:[%s1292 + $0x90] sm:$0xff]
        %v1318 = vld [vmem:[%s1292 + $0x98] sm:$0xf]
        %v1319 = vld [vmem:[%s1292 + $0x9c] sm:$0xff]
        %v1320 = vld [vmem:[%s1292 + $0xa4] sm:$0xf]
        %v1321 = vld [vmem:[%s1292 + $0xa8] sm:$0xff]
        %v1322 = vld [vmem:[%s1292 + $0xb0] sm:$0xf]
        %v1323 = vld [vmem:[%s1292 + $0xb4] sm:$0xff]
        %v1324 = vld [vmem:[%s1292 + $0xbc] sm:$0xf]
        %v1325 = vld [vmem:[%s1292 + $0xc0] sm:$0xff]
        %v1326 = vld [vmem:[%s1292 + $0xc8] sm:$0xf]
        %v1327 = vld [vmem:[%s1292 + $0xcc] sm:$0xff]
        %v1328 = vld [vmem:[%s1292 + $0xd4] sm:$0xf]
        %v1329 = vld [vmem:[%s1292 + $0xd8] sm:$0xff]
        %v1330 = vld [vmem:[%s1292 + $0xe0] sm:$0xf]
        %v1331 = vld [vmem:[%s1292 + $0xe4] sm:$0xff]
        %v1332 = vld [vmem:[%s1292 + $0xec] sm:$0xf]
        %v1333 = vld [vmem:[%s1292 + $0xf0] sm:$0xff]
        %v1334 = vld [vmem:[%s1292 + $0xf8] sm:$0xf]
        %v1335 = vld [vmem:[%s1292 + $0xfc] sm:$0xff]
        %v1336 = vld [vmem:[%s1292 + $0x104] sm:$0xf]
        %vm1337 = vcmask 1046528
        %v1338 = vrot.slane %v631, 1
        %v1339 = vrot.slane %v633, 1
        %v1340 = vsel %vm1337, %v1338, %v1339
        %v1341 = vrot.slane %v632, 1
        %v1342 = vrot.slane %v634, 1
        %v1343 = vsel %vm1337, %v1341, %v1342
        %v1344 = vrot.slane %v635, 1
        %v1345 = vsel %vm1337, %v1339, %v1344
        %v1346 = vrot.slane %v636, 1
        %v1347 = vsel %vm1337, %v1342, %v1346
        %v1395 = vunpack.c.l.b16 %v1293
        %v1396 = vunpack.c.h.b16 %v1293
        %v1397 = vunpack.c.l.b16 %v1294
        %v1398 = vunpack.c.l.b16 %v1295
        %v1399 = vunpack.c.h.b16 %v1295
        %v1400 = vunpack.c.l.b16 %v1296
        %v1401 = vunpack.c.l.b16 %v1297
        %v1402 = vunpack.c.h.b16 %v1297
        %v1403 = vunpack.c.l.b16 %v1298
        %v1404 = vunpack.c.l.b16 %v1299
        %v1405 = vunpack.c.h.b16 %v1299
        %v1406 = vunpack.c.l.b16 %v1300
        %v1407 = vunpack.c.l.b16 %v1301
        %v1408 = vunpack.c.h.b16 %v1301
        %v1409 = vunpack.c.l.b16 %v1302
        %v1410 = vunpack.c.l.b16 %v1303
        %v1411 = vunpack.c.h.b16 %v1303
        %v1412 = vunpack.c.l.b16 %v1304
        %v1413 = vunpack.c.l.b16 %v1305
        %v1414 = vunpack.c.h.b16 %v1305
        %v1415 = vunpack.c.l.b16 %v1306
        %v1416 = vunpack.c.l.b16 %v1307
        %v1417 = vunpack.c.h.b16 %v1307
        %v1418 = vunpack.c.l.b16 %v1308
        %v1419 = vunpack.c.l.b16 %v1309
        %v1420 = vunpack.c.h.b16 %v1309
        %v1421 = vunpack.c.l.b16 %v1310
        %v1422 = vunpack.c.l.b16 %v1311
        %v1423 = vunpack.c.h.b16 %v1311
        %v1424 = vunpack.c.l.b16 %v1312
        %v1425 = vunpack.c.l.b16 %v1313
        %v1426 = vunpack.c.h.b16 %v1313
        %v1427 = vunpack.c.l.b16 %v1314
        %v1428 = vunpack.c.l.b16 %v1315
        %v1429 = vunpack.c.h.b16 %v1315
        %v1430 = vunpack.c.l.b16 %v1316
        %v1431 = vunpack.c.l.b16 %v1317
        %v1432 = vunpack.c.h.b16 %v1317
        %v1433 = vunpack.c.l.b16 %v1318
        %v1434 = vunpack.c.l.b16 %v1319
        %v1435 = vunpack.c.h.b16 %v1319
        %v1436 = vunpack.c.l.b16 %v1320
        %v1437 = vunpack.c.l.b16 %v1321
        %v1438 = vunpack.c.h.b16 %v1321
        %v1439 = vunpack.c.l.b16 %v1322
        %v1440 = vunpack.c.l.b16 %v1323
        %v1441 = vunpack.c.h.b16 %v1323
        %v1442 = vunpack.c.l.b16 %v1324
        %v1443 = vunpack.c.l.b16 %v1325
        %v1444 = vunpack.c.h.b16 %v1325
        %v1445 = vunpack.c.l.b16 %v1326
        %v1446 = vunpack.c.l.b16 %v1327
        %v1447 = vunpack.c.h.b16 %v1327
        %v1448 = vunpack.c.l.b16 %v1328
        %v1449 = vunpack.c.l.b16 %v1329
        %v1450 = vunpack.c.h.b16 %v1329
        %v1451 = vunpack.c.l.b16 %v1330
        %v1452 = vunpack.c.l.b16 %v1331
        %v1453 = vunpack.c.h.b16 %v1331
        %v1454 = vunpack.c.l.b16 %v1332
        %v1455 = vunpack.c.l.b16 %v1333
        %v1456 = vunpack.c.h.b16 %v1333
        %v1457 = vunpack.c.l.b16 %v1334
        %v1458 = vunpack.c.l.b16 %v1335
        %v1459 = vunpack.c.h.b16 %v1335
        %v1460 = vunpack.c.l.b16 %v1336
        %v1461 = vpack.c.b16 %v1398, %v1395
        %v1462 = vpack.c.b16 %v1399, %v1396
        %v1463 = vpack.c.b16 %v1400, %v1397
        %v1464 = vpack.c.b16 %v1404, %v1401
        %v1465 = vpack.c.b16 %v1405, %v1402
        %v1466 = vpack.c.b16 %v1406, %v1403
        %v1467 = vpack.c.b16 %v1410, %v1407
        %v1468 = vpack.c.b16 %v1411, %v1408
        %v1469 = vpack.c.b16 %v1412, %v1409
        %v1470 = vpack.c.b16 %v1416, %v1413
        %v1471 = vpack.c.b16 %v1417, %v1414
        %v1472 = vpack.c.b16 %v1418, %v1415
        %v1473 = vpack.c.b16 %v1422, %v1419
        %v1474 = vpack.c.b16 %v1423, %v1420
        %v1475 = vpack.c.b16 %v1424, %v1421
        %v1476 = vpack.c.b16 %v1428, %v1425
        %v1477 = vpack.c.b16 %v1429, %v1426
        %v1478 = vpack.c.b16 %v1430, %v1427
        %v1479 = vpack.c.b16 %v1434, %v1431
        %v1480 = vpack.c.b16 %v1435, %v1432
        %v1481 = vpack.c.b16 %v1436, %v1433
        %v1482 = vpack.c.b16 %v1440, %v1437
        %v1483 = vpack.c.b16 %v1441, %v1438
        %v1484 = vpack.c.b16 %v1442, %v1439
        %v1485 = vpack.c.b16 %v1446, %v1443
        %v1486 = vpack.c.b16 %v1447, %v1444
        %v1487 = vpack.c.b16 %v1448, %v1445
        %v1488 = vpack.c.b16 %v1452, %v1449
        %v1489 = vpack.c.b16 %v1453, %v1450
        %v1490 = vpack.c.b16 %v1454, %v1451
        %v1491 = vpack.c.b16 %v1458, %v1455
        %v1492 = vpack.c.b16 %v1459, %v1456
        %v1493 = vpack.c.b16 %v1460, %v1457
        %v1528 = vsel %vm863, %v1343, 0
        %v1531 = vsel %vm863, %v1347, 0
        %v1534 = vsel %vm863, %v1346, 0
        %1536 = vmatprep.subr.bf16.mxu0 %v1462
        %1537 = vmatpush1.bf16.msra.mxu0 %v1461
        %1538 = vmatprep.subr.bf16.mxu0 %v1465
        %1539 = vmatpush1.bf16.msra.mxu0 %v1464
        %1540 = vmatprep.subr.bf16.mxu0 %v1468
        %1541 = vmatpush1.bf16.msra.mxu0 %v1467
        %1542 = vmatprep.subr.bf16.mxu0 %v1471
        %1543 = vmatpush1.bf16.msra.mxu0 %v1470
        %1544 = vmatprep.subr.bf16.mxu0 %v1474
        %1545 = vmatpush1.bf16.msra.mxu0 %v1473
        %1546 = vmatprep.subr.bf16.mxu0 %v1477
        %1547 = vmatpush1.bf16.msra.mxu0 %v1476
        %1548 = vmatprep.subr.bf16.mxu0 %v1480
        %1549 = vmatpush1.bf16.msra.mxu0 %v1479
        %1550 = vmatprep.subr.bf16.mxu0 %v1483
        %1551 = vmatpush1.bf16.msra.mxu0 %v1482
        %1552 = vmatprep.subr.bf16.mxu0 %v1486
        %1553 = vmatpush1.bf16.msra.mxu0 %v1485
        %1554 = vmatprep.subr.bf16.mxu0 %v1489
        %1555 = vmatpush1.bf16.msra.mxu0 %v1488
        %1556 = vmatprep.subr.bf16.mxu0 %v1492
        %1557 = vmatpush1.bf16.msra.mxu0 %v1491
        %1558 = vmatprep.subr.bf16.mxu0 0
        %1559 = vmatpush1.bf16.msra.mxu0 0
        %1560 = vmatprep.subr.bf16.mxu0 0
        %1561 = vmatpush1.bf16.msra.mxu0 0
        %1562 = vmatprep.subr.bf16.mxu0 0
        %1563 = vmatpush1.bf16.msra.mxu0 0
        %1564 = vmatprep.subr.bf16.mxu0 0
        %1565 = vmatpush1.bf16.msra.mxu0 0
        %1566 = vmatprep.subr.bf16.mxu0 0
        %1567 = vmatpush1.bf16.msra.mxu0 0
        %1568 = vmatprep.mubr.bf16.mxu0 %v1528
        %1569 = vmatmul.mubr.bf16.gmra.mrb[0].mxu0 %v1340
        %v1570 = vpop.f32.mrb[0].mxu0
        %v1571 = vadd.f32 0.0, %v1570
        %v1572 = vpop.f32.mrb[0].mxu0
        %v1573 = vadd.f32 0.0, %v1572
        %v1574 = vpop.f32.mrb[0].mxu0
        %v1575 = vadd.f32 0.0, %v1574
        %v1576 = vpop.f32.mrb[0].mxu0
        %v1577 = vadd.f32 0.0, %v1576
        %1578 = vmatprep.mubr.bf16.mxu0 %v1531
        %1579 = vmatmul.mubr.bf16.gmra.mrb[0].mxu0 %v1345
        %v1580 = vpop.f32.mrb[0].mxu0
        %v1581 = vadd.f32 0.0, %v1580
        %v1582 = vpop.f32.mrb[0].mxu0
        %v1583 = vadd.f32 0.0, %v1582
        %v1584 = vpop.f32.mrb[0].mxu0
        %v1585 = vadd.f32 0.0, %v1584
        %v1586 = vpop.f32.mrb[0].mxu0
        %v1587 = vadd.f32 0.0, %v1586
        %1588 = vmatprep.mubr.bf16.mxu0 %v1534
        %1589 = vmatmul.mubr.bf16.gmra.mrb[0].mxu0 %v1344
        %v1590 = vpop.f32.mrb[0].mxu0
        %v1591 = vadd.f32 0.0, %v1590
        %v1592 = vpop.f32.mrb[0].mxu0
        %v1593 = vadd.f32 0.0, %v1592
        %v1594 = vpop.f32.mrb[0].mxu0
        %v1595 = vpop.f32.mrb[0].mxu0
        %1596 = vdwg.mxu0
        %1597 = vmatprep.subr.bf16.mxu0 0
        %1598 = vmatpush1.bf16.msra.mxu0 %v1463
        %1599 = vmatprep.subr.bf16.mxu0 0
        %1600 = vmatpush1.bf16.msra.mxu0 %v1466
        %1601 = vmatprep.subr.bf16.mxu0 0
        %1602 = vmatpush1.bf16.msra.mxu0 %v1469
        %1603 = vmatprep.subr.bf16.mxu0 0
        %1604 = vmatpush1.bf16.msra.mxu0 %v1472
        %1605 = vmatprep.subr.bf16.mxu0 0
        %1606 = vmatpush1.bf16.msra.mxu0 %v1475
        %1607 = vmatprep.subr.bf16.mxu0 0
        %1608 = vmatpush1.bf16.msra.mxu0 %v1478
        %1609 = vmatprep.subr.bf16.mxu0 0
        %1610 = vmatpush1.bf16.msra.mxu0 %v1481
        %1611 = vmatprep.subr.bf16.mxu0 0
        %1612 = vmatpush1.bf16.msra.mxu0 %v1484
        %1613 = vmatprep.subr.bf16.mxu0 0
        %1614 = vmatpush1.bf16.msra.mxu0 %v1487
        %1615 = vmatprep.subr.bf16.mxu0 0
        %1616 = vmatpush1.bf16.msra.mxu0 %v1490
        %1617 = vmatprep.subr.bf16.mxu0 0
        %1618 = vmatpush1.bf16.msra.mxu0 %v1493
        %1619 = vmatprep.subr.bf16.mxu0 0
        %1620 = vmatpush1.bf16.msra.mxu0 0
        %1621 = vmatprep.subr.bf16.mxu0 0
        %1622 = vmatpush1.bf16.msra.mxu0 0
        %1623 = vmatprep.subr.bf16.mxu0 0
        %1624 = vmatpush1.bf16.msra.mxu0 0
        %1625 = vmatprep.subr.bf16.mxu0 0
        %1626 = vmatpush1.bf16.msra.mxu0 0
        %1627 = vmatprep.subr.bf16.mxu0 0
        %1628 = vmatpush1.bf16.msra.mxu0 0
        %1629 = vmatprep.mubr.bf16.mxu0 %v1528
        %1630 = vmatmul.mubr.bf16.gmra.mrb[0].mxu0 %v1340
        %v1631 = vpop.f32.mrb[0].mxu0
        %v1632 = vadd.f32 0.0, %v1631
        %v1633 = vpop.f32.mrb[0].mxu0
        %v1634 = vpop.f32.mrb[0].mxu0
        %v1635 = vadd.f32 0.0, %v1634
        %v1636 = vpop.f32.mrb[0].mxu0
        %1637 = vmatprep.mubr.bf16.mxu0 %v1531
        %1638 = vmatmul.mubr.bf16.gmra.mrb[0].mxu0 %v1345
        %v1639 = vpop.f32.mrb[0].mxu0
        %v1640 = vadd.f32 0.0, %v1639
        %v1641 = vpop.f32.mrb[0].mxu0
        %v1642 = vpop.f32.mrb[0].mxu0
        %v1643 = vadd.f32 0.0, %v1642
        %v1644 = vpop.f32.mrb[0].mxu0
        %1645 = vmatprep.mubr.bf16.mxu0 %v1534
        %1646 = vmatmul.mubr.bf16.gmra.mrb[0].mxu0 %v1344
        %v1647 = vpop.f32.mrb[0].mxu0
        %v1648 = vadd.f32 0.0, %v1647
        %v1649 = vpop.f32.mrb[0].mxu0
        %v1650 = vpop.f32.mrb[0].mxu0
        %v1651 = vpop.f32.mrb[0].mxu0
        %1652 = vdwg.mxu0
        %v1653 = vadd.f32 %v1210, %v1571
        %v1654 = vadd.f32 %v1212, %v1573
        %v1655 = vadd.f32 %v1271, %v1632
        %v1656 = vadd.f32 %v1214, %v1575
        %v1657 = vadd.f32 %v1216, %v1577
        %v1658 = vadd.f32 %v1274, %v1635
        %v1659 = vadd.f32 %v1220, %v1581
        %v1660 = vadd.f32 %v1222, %v1583
        %v1661 = vadd.f32 %v1279, %v1640
        %v1662 = vadd.f32 %v1224, %v1585
        %v1663 = vadd.f32 %v1226, %v1587
        %v1664 = vadd.f32 %v1282, %v1643
        %v1665 = vadd.f32 %v1230, %v1591
        %v1666 = vadd.f32 %v1232, %v1593
        %v1667 = vadd.f32 %v1287, %v1648
        %s1668 = scalar_lea.vmem [#allocation2], 792
        %v1669 = vld [vmem:[%s1668] sm:$0xff]
        %v1670 = vld [vmem:[%s1668 + $0x8] sm:$0xf]
        %v1671 = vld [vmem:[%s1668 + $0xc] sm:$0xff]
        %v1672 = vld [vmem:[%s1668 + $0x14] sm:$0xf]
        %v1673 = vld [vmem:[%s1668 + $0x18] sm:$0xff]
        %v1674 = vld [vmem:[%s1668 + $0x20] sm:$0xf]
        %v1675 = vld [vmem:[%s1668 + $0x24] sm:$0xff]
        %v1676 = vld [vmem:[%s1668 + $0x2c] sm:$0xf]
        %v1677 = vld [vmem:[%s1668 + $0x30] sm:$0xff]
        %v1678 = vld [vmem:[%s1668 + $0x38] sm:$0xf]
        %v1679 = vld [vmem:[%s1668 + $0x3c] sm:$0xff]
        %v1680 = vld [vmem:[%s1668 + $0x44] sm:$0xf]
        %v1681 = vld [vmem:[%s1668 + $0x48] sm:$0xff]
        %v1682 = vld [vmem:[%s1668 + $0x50] sm:$0xf]
        %v1683 = vld [vmem:[%s1668 + $0x54] sm:$0xff]
        %v1684 = vld [vmem:[%s1668 + $0x5c] sm:$0xf]
        %v1685 = vld [vmem:[%s1668 + $0x60] sm:$0xff]
        %v1686 = vld [vmem:[%s1668 + $0x68] sm:$0xf]
        %v1687 = vld [vmem:[%s1668 + $0x6c] sm:$0xff]
        %v1688 = vld [vmem:[%s1668 + $0x74] sm:$0xf]
        %v1689 = vld [vmem:[%s1668 + $0x78] sm:$0xff]
        %v1690 = vld [vmem:[%s1668 + $0x80] sm:$0xf]
        %v1691 = vld [vmem:[%s1668 + $0x84] sm:$0xff]
        %v1692 = vld [vmem:[%s1668 + $0x8c] sm:$0xf]
        %v1693 = vld [vmem:[%s1668 + $0x90] sm:$0xff]
        %v1694 = vld [vmem:[%s1668 + $0x98] sm:$0xf]
        %v1695 = vld [vmem:[%s1668 + $0x9c] sm:$0xff]
        %v1696 = vld [vmem:[%s1668 + $0xa4] sm:$0xf]
        %v1697 = vld [vmem:[%s1668 + $0xa8] sm:$0xff]
        %v1698 = vld [vmem:[%s1668 + $0xb0] sm:$0xf]
        %v1699 = vld [vmem:[%s1668 + $0xb4] sm:$0xff]
        %v1700 = vld [vmem:[%s1668 + $0xbc] sm:$0xf]
        %v1701 = vld [vmem:[%s1668 + $0xc0] sm:$0xff]
        %v1702 = vld [vmem:[%s1668 + $0xc8] sm:$0xf]
        %v1703 = vld [vmem:[%s1668 + $0xcc] sm:$0xff]
        %v1704 = vld [vmem:[%s1668 + $0xd4] sm:$0xf]
        %v1705 = vld [vmem:[%s1668 + $0xd8] sm:$0xff]
        %v1706 = vld [vmem:[%s1668 + $0xe0] sm:$0xf]
        %v1707 = vld [vmem:[%s1668 + $0xe4] sm:$0xff]
        %v1708 = vld [vmem:[%s1668 + $0xec] sm:$0xf]
        %v1709 = vld [vmem:[%s1668 + $0xf0] sm:$0xff]
        %v1710 = vld [vmem:[%s1668 + $0xf8] sm:$0xf]
        %v1711 = vld [vmem:[%s1668 + $0xfc] sm:$0xff]
        %v1712 = vld [vmem:[%s1668 + $0x104] sm:$0xf]
        %vm1713 = vsmask.f32 6400
        %v1714 = vrot.slane %v639, 1
        %v1715 = vrot.slane %v641, 2
        %v1716 = vor.u32 %v1714, %v1715
        %v1717 = vrot.slane %v662, 1
        %v1718 = vrot.slane %v646, 2
        %v1719 = vor.u32 %v1717, %v1718
        %v1720 = vsel %vm1713, %v1716, %v1719
        %v1721 = vrot.slane %v651, 1
        %v1722 = vrot.slane %v653, 2
        %v1723 = vor.u32 %v1721, %v1722
        %v1724 = vrot.slane %v670, 1
        %v1725 = vrot.slane %v658, 2
        %v1726 = vor.u32 %v1724, %v1725
        %v1727 = vsel %vm1713, %v1723, %v1726
        %v1728 = vrot.slane %v678, 1
        %v1729 = vrot.slane %v666, 2
        %v1730 = vor.u32 %v1728, %v1729
        %v1731 = vsel %vm1713, %v1719, %v1730
        %v1732 = vrot.slane %v681, 1
        %v1733 = vrot.slane %v674, 2
        %v1734 = vor.u32 %v1732, %v1733
        %v1735 = vsel %vm1713, %v1726, %v1734
        %v1783 = vunpack.c.l.b16 %v1669
        %v1784 = vunpack.c.h.b16 %v1669
        %v1785 = vunpack.c.l.b16 %v1670
        %v1786 = vunpack.c.l.b16 %v1671
        %v1787 = vunpack.c.h.b16 %v1671
        %v1788 = vunpack.c.l.b16 %v1672
        %v1789 = vunpack.c.l.b16 %v1673
        %v1790 = vunpack.c.h.b16 %v1673
        %v1791 = vunpack.c.l.b16 %v1674
        %v1792 = vunpack.c.l.b16 %v1675
        %v1793 = vunpack.c.h.b16 %v1675
        %v1794 = vunpack.c.l.b16 %v1676
        %v1795 = vunpack.c.l.b16 %v1677
        %v1796 = vunpack.c.h.b16 %v1677
        %v1797 = vunpack.c.l.b16 %v1678
        %v1798 = vunpack.c.l.b16 %v1679
        %v1799 = vunpack.c.h.b16 %v1679
        %v1800 = vunpack.c.l.b16 %v1680
        %v1801 = vunpack.c.l.b16 %v1681
        %v1802 = vunpack.c.h.b16 %v1681
        %v1803 = vunpack.c.l.b16 %v1682
        %v1804 = vunpack.c.l.b16 %v1683
        %v1805 = vunpack.c.h.b16 %v1683
        %v1806 = vunpack.c.l.b16 %v1684
        %v1807 = vunpack.c.l.b16 %v1685
        %v1808 = vunpack.c.h.b16 %v1685
        %v1809 = vunpack.c.l.b16 %v1686
        %v1810 = vunpack.c.l.b16 %v1687
        %v1811 = vunpack.c.h.b16 %v1687
        %v1812 = vunpack.c.l.b16 %v1688
        %v1813 = vunpack.c.l.b16 %v1689
        %v1814 = vunpack.c.h.b16 %v1689
        %v1815 = vunpack.c.l.b16 %v1690
        %v1816 = vunpack.c.l.b16 %v1691
        %v1817 = vunpack.c.h.b16 %v1691
        %v1818 = vunpack.c.l.b16 %v1692
        %v1819 = vunpack.c.l.b16 %v1693
        %v1820 = vunpack.c.h.b16 %v1693
        %v1821 = vunpack.c.l.b16 %v1694
        %v1822 = vunpack.c.l.b16 %v1695
        %v1823 = vunpack.c.h.b16 %v1695
        %v1824 = vunpack.c.l.b16 %v1696
        %v1825 = vunpack.c.l.b16 %v1697
        %v1826 = vunpack.c.h.b16 %v1697
        %v1827 = vunpack.c.l.b16 %v1698
        %v1828 = vunpack.c.l.b16 %v1699
        %v1829 = vunpack.c.h.b16 %v1699
        %v1830 = vunpack.c.l.b16 %v1700
        %v1831 = vunpack.c.l.b16 %v1701
        %v1832 = vunpack.c.h.b16 %v1701
        %v1833 = vunpack.c.l.b16 %v1702
        %v1834 = vunpack.c.l.b16 %v1703
        %v1835 = vunpack.c.h.b16 %v1703
        %v1836 = vunpack.c.l.b16 %v1704
        %v1837 = vunpack.c.l.b16 %v1705
        %v1838 = vunpack.c.h.b16 %v1705
        %v1839 = vunpack.c.l.b16 %v1706
        %v1840 = vunpack.c.l.b16 %v1707
        %v1841 = vunpack.c.h.b16 %v1707
        %v1842 = vunpack.c.l.b16 %v1708
        %v1843 = vunpack.c.l.b16 %v1709
        %v1844 = vunpack.c.h.b16 %v1709
        %v1845 = vunpack.c.l.b16 %v1710
        %v1846 = vunpack.c.l.b16 %v1711
        %v1847 = vunpack.c.h.b16 %v1711
        %v1848 = vunpack.c.l.b16 %v1712
        %v1849 = vpack.c.b16 %v1786, %v1783
        %v1850 = vpack.c.b16 %v1787, %v1784
        %v1851 = vpack.c.b16 %v1788, %v1785
        %v1852 = vpack.c.b16 %v1792, %v1789
        %v1853 = vpack.c.b16 %v1793, %v1790
        %v1854 = vpack.c.b16 %v1794, %v1791
        %v1855 = vpack.c.b16 %v1798, %v1795
        %v1856 = vpack.c.b16 %v1799, %v1796
        %v1857 = vpack.c.b16 %v1800, %v1797
        %v1858 = vpack.c.b16 %v1804, %v1801
        %v1859 = vpack.c.b16 %v1805, %v1802
        %v1860 = vpack.c.b16 %v1806, %v1803
        %v1861 = vpack.c.b16 %v1810, %v1807
        %v1862 = vpack.c.b16 %v1811, %v1808
        %v1863 = vpack.c.b16 %v1812, %v1809
        %v1864 = vpack.c.b16 %v1816, %v1813
        %v1865 = vpack.c.b16 %v1817, %v1814
        %v1866 = vpack.c.b16 %v1818, %v1815
        %v1867 = vpack.c.b16 %v1822, %v1819
        %v1868 = vpack.c.b16 %v1823, %v1820
        %v1869 = vpack.c.b16 %v1824, %v1821
        %v1870 = vpack.c.b16 %v1828, %v1825
        %v1871 = vpack.c.b16 %v1829, %v1826
        %v1872 = vpack.c.b16 %v1830, %v1827
        %v1873 = vpack.c.b16 %v1834, %v1831
        %v1874 = vpack.c.b16 %v1835, %v1832
        %v1875 = vpack.c.b16 %v1836, %v1833
        %v1876 = vpack.c.b16 %v1840, %v1837
        %v1877 = vpack.c.b16 %v1841, %v1838
        %v1878 = vpack.c.b16 %v1842, %v1839
        %v1879 = vpack.c.b16 %v1846, %v1843
        %v1880 = vpack.c.b16 %v1847, %v1844
        %v1881 = vpack.c.b16 %v1848, %v1845
        %v1916 = vsel %vm863, %v1727, 0
        %v1919 = vsel %vm863, %v1735, 0
        %v1922 = vsel %vm863, %v1734, 0
        %1924 = vmatprep.subr.bf16.mxu0 %v1850
        %1925 = vmatpush1.bf16.msra.mxu0 %v1849
        %1926 = vmatprep.subr.bf16.mxu0 %v1853
        %1927 = vmatpush1.bf16.msra.mxu0 %v1852
        %1928 = vmatprep.subr.bf16.mxu0 %v1856
        %1929 = vmatpush1.bf16.msra.mxu0 %v1855
        %1930 = vmatprep.subr.bf16.mxu0 %v1859
        %1931 = vmatpush1.bf16.msra.mxu0 %v1858
        %1932 = vmatprep.subr.bf16.mxu0 %v1862
        %1933 = vmatpush1.bf16.msra.mxu0 %v1861
        %1934 = vmatprep.subr.bf16.mxu0 %v1865
        %1935 = vmatpush1.bf16.msra.mxu0 %v1864
        %1936 = vmatprep.subr.bf16.mxu0 %v1868
        %1937 = vmatpush1.bf16.msra.mxu0 %v1867
        %1938 = vmatprep.subr.bf16.mxu0 %v1871
        %1939 = vmatpush1.bf16.msra.mxu0 %v1870
        %1940 = vmatprep.subr.bf16.mxu0 %v1874
        %1941 = vmatpush1.bf16.msra.mxu0 %v1873
        %1942 = vmatprep.subr.bf16.mxu0 %v1877
        %1943 = vmatpush1.bf16.msra.mxu0 %v1876
        %1944 = vmatprep.subr.bf16.mxu0 %v1880
        %1945 = vmatpush1.bf16.msra.mxu0 %v1879
        %1946 = vmatprep.subr.bf16.mxu0 0
        %1947 = vmatpush1.bf16.msra.mxu0 0
        %1948 = vmatprep.subr.bf16.mxu0 0
        %1949 = vmatpush1.bf16.msra.mxu0 0
        %1950 = vmatprep.subr.bf16.mxu0 0
        %1951 = vmatpush1.bf16.msra.mxu0 0
        %1952 = vmatprep.subr.bf16.mxu0 0
        %1953 = vmatpush1.bf16.msra.mxu0 0
        %1954 = vmatprep.subr.bf16.mxu0 0
        %1955 = vmatpush1.bf16.msra.mxu0 0
        %1956 = vmatprep.mubr.bf16.mxu0 %v1916
        %1957 = vmatmul.mubr.bf16.gmra.mrb[0].mxu0 %v1720
        %v1958 = vpop.f32.mrb[0].mxu0
        %v1959 = vadd.f32 0.0, %v1958
        %v1960 = vpop.f32.mrb[0].mxu0
        %v1961 = vadd.f32 0.0, %v1960
        %v1962 = vpop.f32.mrb[0].mxu0
        %v1963 = vadd.f32 0.0, %v1962
        %v1964 = vpop.f32.mrb[0].mxu0
        %v1965 = vadd.f32 0.0, %v1964
        %1966 = vmatprep.mubr.bf16.mxu0 %v1919
        %1967 = vmatmul.mubr.bf16.gmra.mrb[0].mxu0 %v1731
        %v1968 = vpop.f32.mrb[0].mxu0
        %v1969 = vadd.f32 0.0, %v1968
        %v1970 = vpop.f32.mrb[0].mxu0
        %v1971 = vadd.f32 0.0, %v1970
        %v1972 = vpop.f32.mrb[0].mxu0
        %v1973 = vadd.f32 0.0, %v1972
        %v1974 = vpop.f32.mrb[0].mxu0
        %v1975 = vadd.f32 0.0, %v1974
        %1976 = vmatprep.mubr.bf16.mxu0 %v1922
        %1977 = vmatmul.mubr.bf16.gmra.mrb[0].mxu0 %v1730
        %v1978 = vpop.f32.mrb[0].mxu0
        %v1979 = vadd.f32 0.0, %v1978
        %v1980 = vpop.f32.mrb[0].mxu0
        %v1981 = vadd.f32 0.0, %v1980
        %v1982 = vpop.f32.mrb[0].mxu0
        %v1983 = vpop.f32.mrb[0].mxu0
        %1984 = vdwg.mxu0
        %1985 = vmatprep.subr.bf16.mxu0 0
        %1986 = vmatpush1.bf16.msra.mxu0 %v1851
        %1987 = vmatprep.subr.bf16.mxu0 0
        %1988 = vmatpush1.bf16.msra.mxu0 %v1854
        %1989 = vmatprep.subr.bf16.mxu0 0
        %1990 = vmatpush1.bf16.msra.mxu0 %v1857
        %1991 = vmatprep.subr.bf16.mxu0 0
        %1992 = vmatpush1.bf16.msra.mxu0 %v1860
        %1993 = vmatprep.subr.bf16.mxu0 0
        %1994 = vmatpush1.bf16.msra.mxu0 %v1863
        %1995 = vmatprep.subr.bf16.mxu0 0
        %1996 = vmatpush1.bf16.msra.mxu0 %v1866
        %1997 = vmatprep.subr.bf16.mxu0 0
        %1998 = vmatpush1.bf16.msra.mxu0 %v1869
        %1999 = vmatprep.subr.bf16.mxu0 0
        %2000 = vmatpush1.bf16.msra.mxu0 %v1872
        %2001 = vmatprep.subr.bf16.mxu0 0
        %2002 = vmatpush1.bf16.msra.mxu0 %v1875
        %2003 = vmatprep.subr.bf16.mxu0 0
        %2004 = vmatpush1.bf16.msra.mxu0 %v1878
        %2005 = vmatprep.subr.bf16.mxu0 0
        %2006 = vmatpush1.bf16.msra.mxu0 %v1881
        %2007 = vmatprep.subr.bf16.mxu0 0
        %2008 = vmatpush1.bf16.msra.mxu0 0
        %2009 = vmatprep.subr.bf16.mxu0 0
        %2010 = vmatpush1.bf16.msra.mxu0 0
        %2011 = vmatprep.subr.bf16.mxu0 0
        %2012 = vmatpush1.bf16.msra.mxu0 0
        %2013 = vmatprep.subr.bf16.mxu0 0
        %2014 = vmatpush1.bf16.msra.mxu0 0
        %2015 = vmatprep.subr.bf16.mxu0 0
        %2016 = vmatpush1.bf16.msra.mxu0 0
        %2017 = vmatprep.mubr.bf16.mxu0 %v1916
        %2018 = vmatmul.mubr.bf16.gmra.mrb[0].mxu0 %v1720
        %v2019 = vpop.f32.mrb[0].mxu0
        %v2020 = vadd.f32 0.0, %v2019
        %v2021 = vpop.f32.mrb[0].mxu0
        %v2022 = vpop.f32.mrb[0].mxu0
        %v2023 = vadd.f32 0.0, %v2022
        %v2024 = vpop.f32.mrb[0].mxu0
        %2025 = vmatprep.mubr.bf16.mxu0 %v1919
        %2026 = vmatmul.mubr.bf16.gmra.mrb[0].mxu0 %v1731
        %v2027 = vpop.f32.mrb[0].mxu0
        %v2028 = vadd.f32 0.0, %v2027
        %v2029 = vpop.f32.mrb[0].mxu0
        %v2030 = vpop.f32.mrb[0].mxu0
        %v2031 = vadd.f32 0.0, %v2030
        %v2032 = vpop.f32.mrb[0].mxu0
        %2033 = vmatprep.mubr.bf16.mxu0 %v1922
        %2034 = vmatmul.mubr.bf16.gmra.mrb[0].mxu0 %v1730
        %v2035 = vpop.f32.mrb[0].mxu0
        %v2036 = vadd.f32 0.0, %v2035
        %v2037 = vpop.f32.mrb[0].mxu0
        %v2038 = vpop.f32.mrb[0].mxu0
        %v2039 = vpop.f32.mrb[0].mxu0
        %2040 = vdwg.mxu0
        %v2041 = vadd.f32 %v1653, %v1959
        %v2042 = vadd.f32 %v1654, %v1961
        %v2043 = vadd.f32 %v1655, %v2020
        %v2044 = vadd.f32 %v1656, %v1963
        %v2045 = vadd.f32 %v1657, %v1965
        %v2046 = vadd.f32 %v1658, %v2023
        %v2047 = vadd.f32 %v1659, %v1969
        %v2048 = vadd.f32 %v1660, %v1971
        %v2049 = vadd.f32 %v1661, %v2028
        %v2050 = vadd.f32 %v1662, %v1973
        %v2051 = vadd.f32 %v1663, %v1975
        %v2052 = vadd.f32 %v1664, %v2031
        %v2053 = vadd.f32 %v1665, %v1979
        %v2054 = vadd.f32 %v1666, %v1981
        %v2055 = vadd.f32 %v1667, %v2036
        %s2056 = scalar_lea.vmem [#allocation2], 1056
        %v2057 = vld [vmem:[%s2056] sm:$0xff]
        %v2058 = vld [vmem:[%s2056 + $0x8] sm:$0xf]
        %v2059 = vld [vmem:[%s2056 + $0xc] sm:$0xff]
        %v2060 = vld [vmem:[%s2056 + $0x14] sm:$0xf]
        %v2061 = vld [vmem:[%s2056 + $0x18] sm:$0xff]
        %v2062 = vld [vmem:[%s2056 + $0x20] sm:$0xf]
        %v2063 = vld [vmem:[%s2056 + $0x24] sm:$0xff]
        %v2064 = vld [vmem:[%s2056 + $0x2c] sm:$0xf]
        %v2065 = vld [vmem:[%s2056 + $0x30] sm:$0xff]
        %v2066 = vld [vmem:[%s2056 + $0x38] sm:$0xf]
        %v2067 = vld [vmem:[%s2056 + $0x3c] sm:$0xff]
        %v2068 = vld [vmem:[%s2056 + $0x44] sm:$0xf]
        %v2069 = vld [vmem:[%s2056 + $0x48] sm:$0xff]
        %v2070 = vld [vmem:[%s2056 + $0x50] sm:$0xf]
        %v2071 = vld [vmem:[%s2056 + $0x54] sm:$0xff]
        %v2072 = vld [vmem:[%s2056 + $0x5c] sm:$0xf]
        %v2073 = vld [vmem:[%s2056 + $0x60] sm:$0xff]
        %v2074 = vld [vmem:[%s2056 + $0x68] sm:$0xf]
        %v2075 = vld [vmem:[%s2056 + $0x6c] sm:$0xff]
        %v2076 = vld [vmem:[%s2056 + $0x74] sm:$0xf]
        %v2077 = vld [vmem:[%s2056 + $0x78] sm:$0xff]
        %v2078 = vld [vmem:[%s2056 + $0x80] sm:$0xf]
        %v2079 = vld [vmem:[%s2056 + $0x84] sm:$0xff]
        %v2080 = vld [vmem:[%s2056 + $0x8c] sm:$0xf]
        %v2081 = vld [vmem:[%s2056 + $0x90] sm:$0xff]
        %v2082 = vld [vmem:[%s2056 + $0x98] sm:$0xf]
        %v2083 = vld [vmem:[%s2056 + $0x9c] sm:$0xff]
        %v2084 = vld [vmem:[%s2056 + $0xa4] sm:$0xf]
        %v2085 = vld [vmem:[%s2056 + $0xa8] sm:$0xff]
        %v2086 = vld [vmem:[%s2056 + $0xb0] sm:$0xf]
        %v2087 = vld [vmem:[%s2056 + $0xb4] sm:$0xff]
        %v2088 = vld [vmem:[%s2056 + $0xbc] sm:$0xf]
        %v2089 = vld [vmem:[%s2056 + $0xc0] sm:$0xff]
        %v2090 = vld [vmem:[%s2056 + $0xc8] sm:$0xf]
        %v2091 = vld [vmem:[%s2056 + $0xcc] sm:$0xff]
        %v2092 = vld [vmem:[%s2056 + $0xd4] sm:$0xf]
        %v2093 = vld [vmem:[%s2056 + $0xd8] sm:$0xff]
        %v2094 = vld [vmem:[%s2056 + $0xe0] sm:$0xf]
        %v2095 = vld [vmem:[%s2056 + $0xe4] sm:$0xff]
        %v2096 = vld [vmem:[%s2056 + $0xec] sm:$0xf]
        %v2097 = vld [vmem:[%s2056 + $0xf0] sm:$0xff]
        %v2098 = vld [vmem:[%s2056 + $0xf8] sm:$0xf]
        %v2099 = vld [vmem:[%s2056 + $0xfc] sm:$0xff]
        %v2100 = vld [vmem:[%s2056 + $0x104] sm:$0xf]
        %v2102 = vunpack.c.l.b16 %v526
        %v2103 = vunpack.c.h.b16 %v526
        %v2104 = vpack.c.b16 %v2102, %v629
        %v2105 = vpack.c.b16 %v2103, %v630
        %vm2106 = vcmask 1045504
        %v2107 = vrot.slane %v631, 2
        %v2108 = vrot.slane %v633, 2
        %v2109 = vsel %vm2106, %v2107, %v2108
        %v2110 = vrot.slane %v632, 2
        %v2111 = vrot.slane %v634, 2
        %v2112 = vsel %vm2106, %v2110, %v2111
        %v2113 = vrot.slane %v2104, 2
        %v2114 = vsel %vm2106, %v2108, %v2113
        %v2115 = vrot.slane %v2105, 2
        %v2116 = vsel %vm2106, %v2111, %v2115
        %v2164 = vunpack.c.l.b16 %v2057
        %v2165 = vunpack.c.h.b16 %v2057
        %v2166 = vunpack.c.l.b16 %v2058
        %v2167 = vunpack.c.l.b16 %v2059
        %v2168 = vunpack.c.h.b16 %v2059
        %v2169 = vunpack.c.l.b16 %v2060
        %v2170 = vunpack.c.l.b16 %v2061
        %v2171 = vunpack.c.h.b16 %v2061
        %v2172 = vunpack.c.l.b16 %v2062
        %v2173 = vunpack.c.l.b16 %v2063
        %v2174 = vunpack.c.h.b16 %v2063
        %v2175 = vunpack.c.l.b16 %v2064
        %v2176 = vunpack.c.l.b16 %v2065
        %v2177 = vunpack.c.h.b16 %v2065
        %v2178 = vunpack.c.l.b16 %v2066
        %v2179 = vunpack.c.l.b16 %v2067
        %v2180 = vunpack.c.h.b16 %v2067
        %v2181 = vunpack.c.l.b16 %v2068
        %v2182 = vunpack.c.l.b16 %v2069
        %v2183 = vunpack.c.h.b16 %v2069
        %v2184 = vunpack.c.l.b16 %v2070
        %v2185 = vunpack.c.l.b16 %v2071
        %v2186 = vunpack.c.h.b16 %v2071
        %v2187 = vunpack.c.l.b16 %v2072
        %v2188 = vunpack.c.l.b16 %v2073
        %v2189 = vunpack.c.h.b16 %v2073
        %v2190 = vunpack.c.l.b16 %v2074
        %v2191 = vunpack.c.l.b16 %v2075
        %v2192 = vunpack.c.h.b16 %v2075
        %v2193 = vunpack.c.l.b16 %v2076
        %v2194 = vunpack.c.l.b16 %v2077
        %v2195 = vunpack.c.h.b16 %v2077
        %v2196 = vunpack.c.l.b16 %v2078
        %v2197 = vunpack.c.l.b16 %v2079
        %v2198 = vunpack.c.h.b16 %v2079
        %v2199 = vunpack.c.l.b16 %v2080
        %v2200 = vunpack.c.l.b16 %v2081
        %v2201 = vunpack.c.h.b16 %v2081
        %v2202 = vunpack.c.l.b16 %v2082
        %v2203 = vunpack.c.l.b16 %v2083
        %v2204 = vunpack.c.h.b16 %v2083
        %v2205 = vunpack.c.l.b16 %v2084
        %v2206 = vunpack.c.l.b16 %v2085
        %v2207 = vunpack.c.h.b16 %v2085
        %v2208 = vunpack.c.l.b16 %v2086
        %v2209 = vunpack.c.l.b16 %v2087
        %v2210 = vunpack.c.h.b16 %v2087
        %v2211 = vunpack.c.l.b16 %v2088
        %v2212 = vunpack.c.l.b16 %v2089
        %v2213 = vunpack.c.h.b16 %v2089
        %v2214 = vunpack.c.l.b16 %v2090
        %v2215 = vunpack.c.l.b16 %v2091
        %v2216 = vunpack.c.h.b16 %v2091
        %v2217 = vunpack.c.l.b16 %v2092
        %v2218 = vunpack.c.l.b16 %v2093
        %v2219 = vunpack.c.h.b16 %v2093
        %v2220 = vunpack.c.l.b16 %v2094
        %v2221 = vunpack.c.l.b16 %v2095
        %v2222 = vunpack.c.h.b16 %v2095
        %v2223 = vunpack.c.l.b16 %v2096
        %v2224 = vunpack.c.l.b16 %v2097
        %v2225 = vunpack.c.h.b16 %v2097
        %v2226 = vunpack.c.l.b16 %v2098
        %v2227 = vunpack.c.l.b16 %v2099
        %v2228 = vunpack.c.h.b16 %v2099
        %v2229 = vunpack.c.l.b16 %v2100
        %v2230 = vpack.c.b16 %v2167, %v2164
        %v2231 = vpack.c.b16 %v2168, %v2165
        %v2232 = vpack.c.b16 %v2169, %v2166
        %v2233 = vpack.c.b16 %v2173, %v2170
        %v2234 = vpack.c.b16 %v2174, %v2171
        %v2235 = vpack.c.b16 %v2175, %v2172
        %v2236 = vpack.c.b16 %v2179, %v2176
        %v2237 = vpack.c.b16 %v2180, %v2177
        %v2238 = vpack.c.b16 %v2181, %v2178
        %v2239 = vpack.c.b16 %v2185, %v2182
        %v2240 = vpack.c.b16 %v2186, %v2183
        %v2241 = vpack.c.b16 %v2187, %v2184
        %v2242 = vpack.c.b16 %v2191, %v2188
        %v2243 = vpack.c.b16 %v2192, %v2189
        %v2244 = vpack.c.b16 %v2193, %v2190
        %v2245 = vpack.c.b16 %v2197, %v2194
        %v2246 = vpack.c.b16 %v2198, %v2195
        %v2247 = vpack.c.b16 %v2199, %v2196
        %v2248 = vpack.c.b16 %v2203, %v2200
        %v2249 = vpack.c.b16 %v2204, %v2201
        %v2250 = vpack.c.b16 %v2205, %v2202
        %v2251 = vpack.c.b16 %v2209, %v2206
        %v2252 = vpack.c.b16 %v2210, %v2207
        %v2253 = vpack.c.b16 %v2211, %v2208
        %v2254 = vpack.c.b16 %v2215, %v2212
        %v2255 = vpack.c.b16 %v2216, %v2213
        %v2256 = vpack.c.b16 %v2217, %v2214
        %v2257 = vpack.c.b16 %v2221, %v2218
        %v2258 = vpack.c.b16 %v2222, %v2219
        %v2259 = vpack.c.b16 %v2223, %v2220
        %v2260 = vpack.c.b16 %v2227, %v2224
        %v2261 = vpack.c.b16 %v2228, %v2225
        %v2262 = vpack.c.b16 %v2229, %v2226
        %v2297 = vsel %vm863, %v2112, 0
        %v2300 = vsel %vm863, %v2116, 0
        %v2303 = vsel %vm863, %v2115, 0
        %2305 = vmatprep.subr.bf16.mxu0 %v2231
        %2306 = vmatpush1.bf16.msra.mxu0 %v2230
        %2307 = vmatprep.subr.bf16.mxu0 %v2234
        %2308 = vmatpush1.bf16.msra.mxu0 %v2233
        %2309 = vmatprep.subr.bf16.mxu0 %v2237
        %2310 = vmatpush1.bf16.msra.mxu0 %v2236
        %2311 = vmatprep.subr.bf16.mxu0 %v2240
        %2312 = vmatpush1.bf16.msra.mxu0 %v2239
        %2313 = vmatprep.subr.bf16.mxu0 %v2243
        %2314 = vmatpush1.bf16.msra.mxu0 %v2242
        %2315 = vmatprep.subr.bf16.mxu0 %v2246
        %2316 = vmatpush1.bf16.msra.mxu0 %v2245
        %2317 = vmatprep.subr.bf16.mxu0 %v2249
        %2318 = vmatpush1.bf16.msra.mxu0 %v2248
        %2319 = vmatprep.subr.bf16.mxu0 %v2252
        %2320 = vmatpush1.bf16.msra.mxu0 %v2251
        %2321 = vmatprep.subr.bf16.mxu0 %v2255
        %2322 = vmatpush1.bf16.msra.mxu0 %v2254
        %2323 = vmatprep.subr.bf16.mxu0 %v2258
        %2324 = vmatpush1.bf16.msra.mxu0 %v2257
        %2325 = vmatprep.subr.bf16.mxu0 %v2261
        %2326 = vmatpush1.bf16.msra.mxu0 %v2260
        %2327 = vmatprep.subr.bf16.mxu0 0
        %2328 = vmatpush1.bf16.msra.mxu0 0
        %2329 = vmatprep.subr.bf16.mxu0 0
        %2330 = vmatpush1.bf16.msra.mxu0 0
        %2331 = vmatprep.subr.bf16.mxu0 0
        %2332 = vmatpush1.bf16.msra.mxu0 0
        %2333 = vmatprep.subr.bf16.mxu0 0
        %2334 = vmatpush1.bf16.msra.mxu0 0
        %2335 = vmatprep.subr.bf16.mxu0 0
        %2336 = vmatpush1.bf16.msra.mxu0 0
        %2337 = vmatprep.mubr.bf16.mxu0 %v2297
        %2338 = vmatmul.mubr.bf16.gmra.mrb[0].mxu0 %v2109
        %v2339 = vpop.f32.mrb[0].mxu0
        %v2340 = vadd.f32 0.0, %v2339
        %v2341 = vpop.f32.mrb[0].mxu0
        %v2342 = vadd.f32 0.0, %v2341
        %v2343 = vpop.f32.mrb[0].mxu0
        %v2344 = vadd.f32 0.0, %v2343
        %v2345 = vpop.f32.mrb[0].mxu0
        %v2346 = vadd.f32 0.0, %v2345
        %2347 = vmatprep.mubr.bf16.mxu0 %v2300
        %2348 = vmatmul.mubr.bf16.gmra.mrb[0].mxu0 %v2114
        %v2349 = vpop.f32.mrb[0].mxu0
        %v2350 = vadd.f32 0.0, %v2349
        %v2351 = vpop.f32.mrb[0].mxu0
        %v2352 = vadd.f32 0.0, %v2351
        %v2353 = vpop.f32.mrb[0].mxu0
        %v2354 = vadd.f32 0.0, %v2353
        %v2355 = vpop.f32.mrb[0].mxu0
        %v2356 = vadd.f32 0.0, %v2355
        %2357 = vmatprep.mubr.bf16.mxu0 %v2303
        %2358 = vmatmul.mubr.bf16.gmra.mrb[0].mxu0 %v2113
        %v2359 = vpop.f32.mrb[0].mxu0
        %v2360 = vadd.f32 0.0, %v2359
        %v2361 = vpop.f32.mrb[0].mxu0
        %v2362 = vadd.f32 0.0, %v2361
        %v2363 = vpop.f32.mrb[0].mxu0
        %v2364 = vpop.f32.mrb[0].mxu0
        %2365 = vdwg.mxu0
        %2366 = vmatprep.subr.bf16.mxu0 0
        %2367 = vmatpush1.bf16.msra.mxu0 %v2232
        %2368 = vmatprep.subr.bf16.mxu0 0
        %2369 = vmatpush1.bf16.msra.mxu0 %v2235
        %2370 = vmatprep.subr.bf16.mxu0 0
        %2371 = vmatpush1.bf16.msra.mxu0 %v2238
        %2372 = vmatprep.subr.bf16.mxu0 0
        %2373 = vmatpush1.bf16.msra.mxu0 %v2241
        %2374 = vmatprep.subr.bf16.mxu0 0
        %2375 = vmatpush1.bf16.msra.mxu0 %v2244
        %2376 = vmatprep.subr.bf16.mxu0 0
        %2377 = vmatpush1.bf16.msra.mxu0 %v2247
        %2378 = vmatprep.subr.bf16.mxu0 0
        %2379 = vmatpush1.bf16.msra.mxu0 %v2250
        %2380 = vmatprep.subr.bf16.mxu0 0
        %2381 = vmatpush1.bf16.msra.mxu0 %v2253
        %2382 = vmatprep.subr.bf16.mxu0 0
        %2383 = vmatpush1.bf16.msra.mxu0 %v2256
        %2384 = vmatprep.subr.bf16.mxu0 0
        %2385 = vmatpush1.bf16.msra.mxu0 %v2259
        %2386 = vmatprep.subr.bf16.mxu0 0
        %2387 = vmatpush1.bf16.msra.mxu0 %v2262
        %2388 = vmatprep.subr.bf16.mxu0 0
        %2389 = vmatpush1.bf16.msra.mxu0 0
        %2390 = vmatprep.subr.bf16.mxu0 0
        %2391 = vmatpush1.bf16.msra.mxu0 0
        %2392 = vmatprep.subr.bf16.mxu0 0
        %2393 = vmatpush1.bf16.msra.mxu0 0
        %2394 = vmatprep.subr.bf16.mxu0 0
        %2395 = vmatpush1.bf16.msra.mxu0 0
        %2396 = vmatprep.subr.bf16.mxu0 0
        %2397 = vmatpush1.bf16.msra.mxu0 0
        %2398 = vmatprep.mubr.bf16.mxu0 %v2297
        %2399 = vmatmul.mubr.bf16.gmra.mrb[0].mxu0 %v2109
        %v2400 = vpop.f32.mrb[0].mxu0
        %v2401 = vadd.f32 0.0, %v2400
        %v2402 = vpop.f32.mrb[0].mxu0
        %v2403 = vpop.f32.mrb[0].mxu0
        %v2404 = vadd.f32 0.0, %v2403
        %v2405 = vpop.f32.mrb[0].mxu0
        %2406 = vmatprep.mubr.bf16.mxu0 %v2300
        %2407 = vmatmul.mubr.bf16.gmra.mrb[0].mxu0 %v2114
        %v2408 = vpop.f32.mrb[0].mxu0
        %v2409 = vadd.f32 0.0, %v2408
        %v2410 = vpop.f32.mrb[0].mxu0
        %v2411 = vpop.f32.mrb[0].mxu0
        %v2412 = vadd.f32 0.0, %v2411
        %v2413 = vpop.f32.mrb[0].mxu0
        %2414 = vmatprep.mubr.bf16.mxu0 %v2303
        %2415 = vmatmul.mubr.bf16.gmra.mrb[0].mxu0 %v2113
        %v2416 = vpop.f32.mrb[0].mxu0
        %v2417 = vadd.f32 0.0, %v2416
        %v2418 = vpop.f32.mrb[0].mxu0
        %v2419 = vpop.f32.mrb[0].mxu0
        %v2420 = vpop.f32.mrb[0].mxu0
        %2421 = vdwg.mxu0
        %v2422 = vadd.f32 %v2041, %v2340
        %v2423 = vadd.f32 %v2042, %v2342
        %v2424 = vadd.f32 %v2043, %v2401
        %v2425 = vadd.f32 %v2044, %v2344
        %v2426 = vadd.f32 %v2045, %v2346
        %v2427 = vadd.f32 %v2046, %v2404
        %v2428 = vadd.f32 %v2047, %v2350
        %v2429 = vadd.f32 %v2048, %v2352
        %v2430 = vadd.f32 %v2049, %v2409
        %v2431 = vadd.f32 %v2050, %v2354
        %v2432 = vadd.f32 %v2051, %v2356
        %v2433 = vadd.f32 %v2052, %v2412
        %v2434 = vadd.f32 %v2053, %v2360
        %v2435 = vadd.f32 %v2054, %v2362
        %v2436 = vadd.f32 %v2055, %v2417
        %s2437 = scalar_lea.vmem [#allocation2], 1320
        %v2438 = vld [vmem:[%s2437] sm:$0xff]
        %v2439 = vld [vmem:[%s2437 + $0x8] sm:$0xf]
        %v2440 = vld [vmem:[%s2437 + $0xc] sm:$0xff]
        %v2441 = vld [vmem:[%s2437 + $0x14] sm:$0xf]
        %v2442 = vld [vmem:[%s2437 + $0x18] sm:$0xff]
        %v2443 = vld [vmem:[%s2437 + $0x20] sm:$0xf]
        %v2444 = vld [vmem:[%s2437 + $0x24] sm:$0xff]
        %v2445 = vld [vmem:[%s2437 + $0x2c] sm:$0xf]
        %v2446 = vld [vmem:[%s2437 + $0x30] sm:$0xff]
        %v2447 = vld [vmem:[%s2437 + $0x38] sm:$0xf]
        %v2448 = vld [vmem:[%s2437 + $0x3c] sm:$0xff]
        %v2449 = vld [vmem:[%s2437 + $0x44] sm:$0xf]
        %v2450 = vld [vmem:[%s2437 + $0x48] sm:$0xff]
        %v2451 = vld [vmem:[%s2437 + $0x50] sm:$0xf]
        %v2452 = vld [vmem:[%s2437 + $0x54] sm:$0xff]
        %v2453 = vld [vmem:[%s2437 + $0x5c] sm:$0xf]
        %v2454 = vld [vmem:[%s2437 + $0x60] sm:$0xff]
        %v2455 = vld [vmem:[%s2437 + $0x68] sm:$0xf]
        %v2456 = vld [vmem:[%s2437 + $0x6c] sm:$0xff]
        %v2457 = vld [vmem:[%s2437 + $0x74] sm:$0xf]
        %v2458 = vld [vmem:[%s2437 + $0x78] sm:$0xff]
        %v2459 = vld [vmem:[%s2437 + $0x80] sm:$0xf]
        %v2460 = vld [vmem:[%s2437 + $0x84] sm:$0xff]
        %v2461 = vld [vmem:[%s2437 + $0x8c] sm:$0xf]
        %v2462 = vld [vmem:[%s2437 + $0x90] sm:$0xff]
        %v2463 = vld [vmem:[%s2437 + $0x98] sm:$0xf]
        %v2464 = vld [vmem:[%s2437 + $0x9c] sm:$0xff]
        %v2465 = vld [vmem:[%s2437 + $0xa4] sm:$0xf]
        %v2466 = vld [vmem:[%s2437 + $0xa8] sm:$0xff]
        %v2467 = vld [vmem:[%s2437 + $0xb0] sm:$0xf]
        %v2468 = vld [vmem:[%s2437 + $0xb4] sm:$0xff]
        %v2469 = vld [vmem:[%s2437 + $0xbc] sm:$0xf]
        %v2470 = vld [vmem:[%s2437 + $0xc0] sm:$0xff]
        %v2471 = vld [vmem:[%s2437 + $0xc8] sm:$0xf]
        %v2472 = vld [vmem:[%s2437 + $0xcc] sm:$0xff]
        %v2473 = vld [vmem:[%s2437 + $0xd4] sm:$0xf]
        %v2474 = vld [vmem:[%s2437 + $0xd8] sm:$0xff]
        %v2475 = vld [vmem:[%s2437 + $0xe0] sm:$0xf]
        %v2476 = vld [vmem:[%s2437 + $0xe4] sm:$0xff]
        %v2477 = vld [vmem:[%s2437 + $0xec] sm:$0xf]
        %v2478 = vld [vmem:[%s2437 + $0xf0] sm:$0xff]
        %v2479 = vld [vmem:[%s2437 + $0xf8] sm:$0xf]
        %v2480 = vld [vmem:[%s2437 + $0xfc] sm:$0xff]
        %v2481 = vld [vmem:[%s2437 + $0x104] sm:$0xf]
        %vm2482 = vsmask.f32 5376
        %v2483 = vrot.slane %v639, 2
        %v2484 = vrot.slane %v641, 3
        %v2485 = vor.u32 %v2483, %v2484
        %v2486 = vrot.slane %v662, 2
        %v2487 = vrot.slane %v646, 3
        %v2488 = vor.u32 %v2486, %v2487
        %v2489 = vsel %vm2482, %v2485, %v2488
        %v2490 = vrot.slane %v651, 2
        %v2491 = vrot.slane %v653, 3
        %v2492 = vor.u32 %v2490, %v2491
        %v2493 = vrot.slane %v670, 2
        %v2494 = vrot.slane %v658, 3
        %v2495 = vor.u32 %v2493, %v2494
        %v2496 = vsel %vm2482, %v2492, %v2495
        %v2498 = vshrl.u32 %v2104, 16
        %v2500 = vrot.slane %v2498, 2
        %v2501 = vshll.u32 %v2104, 16
        %v2503 = vrot.slane %v2501, 3
        %v2504 = vor.u32 %v2500, %v2503
        %v2505 = vsel %vm2482, %v2488, %v2504
        %v2507 = vshrl.u32 %v2105, 16
        %v2509 = vrot.slane %v2507, 2
        %v2510 = vshll.u32 %v2105, 16
        %v2512 = vrot.slane %v2510, 3
        %v2513 = vor.u32 %v2509, %v2512
        %v2514 = vsel %vm2482, %v2495, %v2513
        %v2562 = vunpack.c.l.b16 %v2438
        %v2563 = vunpack.c.h.b16 %v2438
        %v2564 = vunpack.c.l.b16 %v2439
        %v2565 = vunpack.c.l.b16 %v2440
        %v2566 = vunpack.c.h.b16 %v2440
        %v2567 = vunpack.c.l.b16 %v2441
        %v2568 = vunpack.c.l.b16 %v2442
        %v2569 = vunpack.c.h.b16 %v2442
        %v2570 = vunpack.c.l.b16 %v2443
        %v2571 = vunpack.c.l.b16 %v2444
        %v2572 = vunpack.c.h.b16 %v2444
        %v2573 = vunpack.c.l.b16 %v2445
        %v2574 = vunpack.c.l.b16 %v2446
        %v2575 = vunpack.c.h.b16 %v2446
        %v2576 = vunpack.c.l.b16 %v2447
        %v2577 = vunpack.c.l.b16 %v2448
        %v2578 = vunpack.c.h.b16 %v2448
        %v2579 = vunpack.c.l.b16 %v2449
        %v2580 = vunpack.c.l.b16 %v2450
        %v2581 = vunpack.c.h.b16 %v2450
        %v2582 = vunpack.c.l.b16 %v2451
        %v2583 = vunpack.c.l.b16 %v2452
        %v2584 = vunpack.c.h.b16 %v2452
        %v2585 = vunpack.c.l.b16 %v2453
        %v2586 = vunpack.c.l.b16 %v2454
        %v2587 = vunpack.c.h.b16 %v2454
        %v2588 = vunpack.c.l.b16 %v2455
        %v2589 = vunpack.c.l.b16 %v2456
        %v2590 = vunpack.c.h.b16 %v2456
        %v2591 = vunpack.c.l.b16 %v2457
        %v2592 = vunpack.c.l.b16 %v2458
        %v2593 = vunpack.c.h.b16 %v2458
        %v2594 = vunpack.c.l.b16 %v2459
        %v2595 = vunpack.c.l.b16 %v2460
        %v2596 = vunpack.c.h.b16 %v2460
        %v2597 = vunpack.c.l.b16 %v2461
        %v2598 = vunpack.c.l.b16 %v2462
        %v2599 = vunpack.c.h.b16 %v2462
        %v2600 = vunpack.c.l.b16 %v2463
        %v2601 = vunpack.c.l.b16 %v2464
        %v2602 = vunpack.c.h.b16 %v2464
        %v2603 = vunpack.c.l.b16 %v2465
        %v2604 = vunpack.c.l.b16 %v2466
        %v2605 = vunpack.c.h.b16 %v2466
        %v2606 = vunpack.c.l.b16 %v2467
        %v2607 = vunpack.c.l.b16 %v2468
        %v2608 = vunpack.c.h.b16 %v2468
        %v2609 = vunpack.c.l.b16 %v2469
        %v2610 = vunpack.c.l.b16 %v2470
        %v2611 = vunpack.c.h.b16 %v2470
        %v2612 = vunpack.c.l.b16 %v2471
        %v2613 = vunpack.c.l.b16 %v2472
        %v2614 = vunpack.c.h.b16 %v2472
        %v2615 = vunpack.c.l.b16 %v2473
        %v2616 = vunpack.c.l.b16 %v2474
        %v2617 = vunpack.c.h.b16 %v2474
        %v2618 = vunpack.c.l.b16 %v2475
        %v2619 = vunpack.c.l.b16 %v2476
        %v2620 = vunpack.c.h.b16 %v2476
        %v2621 = vunpack.c.l.b16 %v2477
        %v2622 = vunpack.c.l.b16 %v2478
        %v2623 = vunpack.c.h.b16 %v2478
        %v2624 = vunpack.c.l.b16 %v2479
        %v2625 = vunpack.c.l.b16 %v2480
        %v2626 = vunpack.c.h.b16 %v2480
        %v2627 = vunpack.c.l.b16 %v2481
        %v2628 = vpack.c.b16 %v2565, %v2562
        %v2629 = vpack.c.b16 %v2566, %v2563
        %v2630 = vpack.c.b16 %v2567, %v2564
        %v2631 = vpack.c.b16 %v2571, %v2568
        %v2632 = vpack.c.b16 %v2572, %v2569
        %v2633 = vpack.c.b16 %v2573, %v2570
        %v2634 = vpack.c.b16 %v2577, %v2574
        %v2635 = vpack.c.b16 %v2578, %v2575
        %v2636 = vpack.c.b16 %v2579, %v2576
        %v2637 = vpack.c.b16 %v2583, %v2580
        %v2638 = vpack.c.b16 %v2584, %v2581
        %v2639 = vpack.c.b16 %v2585, %v2582
        %v2640 = vpack.c.b16 %v2589, %v2586
        %v2641 = vpack.c.b16 %v2590, %v2587
        %v2642 = vpack.c.b16 %v2591, %v2588
        %v2643 = vpack.c.b16 %v2595, %v2592
        %v2644 = vpack.c.b16 %v2596, %v2593
        %v2645 = vpack.c.b16 %v2597, %v2594
        %v2646 = vpack.c.b16 %v2601, %v2598
        %v2647 = vpack.c.b16 %v2602, %v2599
        %v2648 = vpack.c.b16 %v2603, %v2600
        %v2649 = vpack.c.b16 %v2607, %v2604
        %v2650 = vpack.c.b16 %v2608, %v2605
        %v2651 = vpack.c.b16 %v2609, %v2606
        %v2652 = vpack.c.b16 %v2613, %v2610
        %v2653 = vpack.c.b16 %v2614, %v2611
        %v2654 = vpack.c.b16 %v2615, %v2612
        %v2655 = vpack.c.b16 %v2619, %v2616
        %v2656 = vpack.c.b16 %v2620, %v2617
        %v2657 = vpack.c.b16 %v2621, %v2618
        %v2658 = vpack.c.b16 %v2625, %v2622
        %v2659 = vpack.c.b16 %v2626, %v2623
        %v2660 = vpack.c.b16 %v2627, %v2624
        %v2695 = vsel %vm863, %v2496, 0
        %v2698 = vsel %vm863, %v2514, 0
        %v2701 = vsel %vm863, %v2513, 0
        %2703 = vmatprep.subr.bf16.mxu0 %v2629
        %2704 = vmatpush1.bf16.msra.mxu0 %v2628
        %2705 = vmatprep.subr.bf16.mxu0 %v2632
        %2706 = vmatpush1.bf16.msra.mxu0 %v2631
        %2707 = vmatprep.subr.bf16.mxu0 %v2635
        %2708 = vmatpush1.bf16.msra.mxu0 %v2634
        %2709 = vmatprep.subr.bf16.mxu0 %v2638
        %2710 = vmatpush1.bf16.msra.mxu0 %v2637
        %2711 = vmatprep.subr.bf16.mxu0 %v2641
        %2712 = vmatpush1.bf16.msra.mxu0 %v2640
        %2713 = vmatprep.subr.bf16.mxu0 %v2644
        %2714 = vmatpush1.bf16.msra.mxu0 %v2643
        %2715 = vmatprep.subr.bf16.mxu0 %v2647
        %2716 = vmatpush1.bf16.msra.mxu0 %v2646
        %2717 = vmatprep.subr.bf16.mxu0 %v2650
        %2718 = vmatpush1.bf16.msra.mxu0 %v2649
        %2719 = vmatprep.subr.bf16.mxu0 %v2653
        %2720 = vmatpush1.bf16.msra.mxu0 %v2652
        %2721 = vmatprep.subr.bf16.mxu0 %v2656
        %2722 = vmatpush1.bf16.msra.mxu0 %v2655
        %2723 = vmatprep.subr.bf16.mxu0 %v2659
        %2724 = vmatpush1.bf16.msra.mxu0 %v2658
        %2725 = vmatprep.subr.bf16.mxu0 0
        %2726 = vmatpush1.bf16.msra.mxu0 0
        %2727 = vmatprep.subr.bf16.mxu0 0
        %2728 = vmatpush1.bf16.msra.mxu0 0
        %2729 = vmatprep.subr.bf16.mxu0 0
        %2730 = vmatpush1.bf16.msra.mxu0 0
        %2731 = vmatprep.subr.bf16.mxu0 0
        %2732 = vmatpush1.bf16.msra.mxu0 0
        %2733 = vmatprep.subr.bf16.mxu0 0
        %2734 = vmatpush1.bf16.msra.mxu0 0
        %2735 = vmatprep.mubr.bf16.mxu0 %v2695
        %2736 = vmatmul.mubr.bf16.gmra.mrb[0].mxu0 %v2489
        %v2737 = vpop.f32.mrb[0].mxu0
        %v2738 = vadd.f32 0.0, %v2737
        %v2739 = vpop.f32.mrb[0].mxu0
        %v2740 = vadd.f32 0.0, %v2739
        %v2741 = vpop.f32.mrb[0].mxu0
        %v2742 = vadd.f32 0.0, %v2741
        %v2743 = vpop.f32.mrb[0].mxu0
        %v2744 = vadd.f32 0.0, %v2743
        %2745 = vmatprep.mubr.bf16.mxu0 %v2698
        %2746 = vmatmul.mubr.bf16.gmra.mrb[0].mxu0 %v2505
        %v2747 = vpop.f32.mrb[0].mxu0
        %v2748 = vadd.f32 0.0, %v2747
        %v2749 = vpop.f32.mrb[0].mxu0
        %v2750 = vadd.f32 0.0, %v2749
        %v2751 = vpop.f32.mrb[0].mxu0
        %v2752 = vadd.f32 0.0, %v2751
        %v2753 = vpop.f32.mrb[0].mxu0
        %v2754 = vadd.f32 0.0, %v2753
        %2755 = vmatprep.mubr.bf16.mxu0 %v2701
        %2756 = vmatmul.mubr.bf16.gmra.mrb[0].mxu0 %v2504
        %v2757 = vpop.f32.mrb[0].mxu0
        %v2758 = vadd.f32 0.0, %v2757
        %v2759 = vpop.f32.mrb[0].mxu0
        %v2760 = vadd.f32 0.0, %v2759
        %v2761 = vpop.f32.mrb[0].mxu0
        %v2762 = vpop.f32.mrb[0].mxu0
        %2763 = vdwg.mxu0
        %2764 = vmatprep.subr.bf16.mxu0 0
        %2765 = vmatpush1.bf16.msra.mxu0 %v2630
        %2766 = vmatprep.subr.bf16.mxu0 0
        %2767 = vmatpush1.bf16.msra.mxu0 %v2633
        %2768 = vmatprep.subr.bf16.mxu0 0
        %2769 = vmatpush1.bf16.msra.mxu0 %v2636
        %2770 = vmatprep.subr.bf16.mxu0 0
        %2771 = vmatpush1.bf16.msra.mxu0 %v2639
        %2772 = vmatprep.subr.bf16.mxu0 0
        %2773 = vmatpush1.bf16.msra.mxu0 %v2642
        %2774 = vmatprep.subr.bf16.mxu0 0
        %2775 = vmatpush1.bf16.msra.mxu0 %v2645
        %2776 = vmatprep.subr.bf16.mxu0 0
        %2777 = vmatpush1.bf16.msra.mxu0 %v2648
        %2778 = vmatprep.subr.bf16.mxu0 0
        %2779 = vmatpush1.bf16.msra.mxu0 %v2651
        %2780 = vmatprep.subr.bf16.mxu0 0
        %2781 = vmatpush1.bf16.msra.mxu0 %v2654
        %2782 = vmatprep.subr.bf16.mxu0 0
        %2783 = vmatpush1.bf16.msra.mxu0 %v2657
        %2784 = vmatprep.subr.bf16.mxu0 0
        %2785 = vmatpush1.bf16.msra.mxu0 %v2660
        %2786 = vmatprep.subr.bf16.mxu0 0
        %2787 = vmatpush1.bf16.msra.mxu0 0
        %2788 = vmatprep.subr.bf16.mxu0 0
        %2789 = vmatpush1.bf16.msra.mxu0 0
        %2790 = vmatprep.subr.bf16.mxu0 0
        %2791 = vmatpush1.bf16.msra.mxu0 0
        %2792 = vmatprep.subr.bf16.mxu0 0
        %2793 = vmatpush1.bf16.msra.mxu0 0
        %2794 = vmatprep.subr.bf16.mxu0 0
        %2795 = vmatpush1.bf16.msra.mxu0 0
        %2796 = vmatprep.mubr.bf16.mxu0 %v2695
        %2797 = vmatmul.mubr.bf16.gmra.mrb[0].mxu0 %v2489
        %v2798 = vpop.f32.mrb[0].mxu0
        %v2799 = vadd.f32 0.0, %v2798
        %v2800 = vpop.f32.mrb[0].mxu0
        %v2801 = vpop.f32.mrb[0].mxu0
        %v2802 = vadd.f32 0.0, %v2801
        %v2803 = vpop.f32.mrb[0].mxu0
        %2804 = vmatprep.mubr.bf16.mxu0 %v2698
        %2805 = vmatmul.mubr.bf16.gmra.mrb[0].mxu0 %v2505
        %v2806 = vpop.f32.mrb[0].mxu0
        %v2807 = vadd.f32 0.0, %v2806
        %v2808 = vpop.f32.mrb[0].mxu0
        %v2809 = vpop.f32.mrb[0].mxu0
        %v2810 = vadd.f32 0.0, %v2809
        %v2811 = vpop.f32.mrb[0].mxu0
        %2812 = vmatprep.mubr.bf16.mxu0 %v2701
        %2813 = vmatmul.mubr.bf16.gmra.mrb[0].mxu0 %v2504
        %v2814 = vpop.f32.mrb[0].mxu0
        %v2815 = vadd.f32 0.0, %v2814
        %v2816 = vpop.f32.mrb[0].mxu0
        %v2817 = vpop.f32.mrb[0].mxu0
        %v2818 = vpop.f32.mrb[0].mxu0
        %2819 = vdwg.mxu0
        %v2820 = vadd.f32 %v2422, %v2738
        %v2821 = vadd.f32 %v2423, %v2740
        %v2822 = vadd.f32 %v2424, %v2799
        %v2823 = vadd.f32 %v2425, %v2742
        %v2824 = vadd.f32 %v2426, %v2744
        %v2825 = vadd.f32 %v2427, %v2802
        %v2826 = vadd.f32 %v2428, %v2748
        %v2827 = vadd.f32 %v2429, %v2750
        %v2828 = vadd.f32 %v2430, %v2807
        %v2829 = vadd.f32 %v2431, %v2752
        %v2830 = vadd.f32 %v2432, %v2754
        %v2831 = vadd.f32 %v2433, %v2810
        %v2832 = vadd.f32 %v2434, %v2758
        %v2833 = vadd.f32 %v2435, %v2760
        %v2834 = vadd.f32 %v2436, %v2815
        %s2835 = scalar_lea.vmem [#allocation2], 1584
        %v2836 = vld [vmem:[%s2835] sm:$0xff]
        %v2837 = vld [vmem:[%s2835 + $0x8] sm:$0xf]
        %v2838 = vld [vmem:[%s2835 + $0xc] sm:$0xff]
        %v2839 = vld [vmem:[%s2835 + $0x14] sm:$0xf]
        %v2840 = vld [vmem:[%s2835 + $0x18] sm:$0xff]
        %v2841 = vld [vmem:[%s2835 + $0x20] sm:$0xf]
        %v2842 = vld [vmem:[%s2835 + $0x24] sm:$0xff]
        %v2843 = vld [vmem:[%s2835 + $0x2c] sm:$0xf]
        %v2844 = vld [vmem:[%s2835 + $0x30] sm:$0xff]
        %v2845 = vld [vmem:[%s2835 + $0x38] sm:$0xf]
        %v2846 = vld [vmem:[%s2835 + $0x3c] sm:$0xff]
        %v2847 = vld [vmem:[%s2835 + $0x44] sm:$0xf]
        %v2848 = vld [vmem:[%s2835 + $0x48] sm:$0xff]
        %v2849 = vld [vmem:[%s2835 + $0x50] sm:$0xf]
        %v2850 = vld [vmem:[%s2835 + $0x54] sm:$0xff]
        %v2851 = vld [vmem:[%s2835 + $0x5c] sm:$0xf]
        %v2852 = vld [vmem:[%s2835 + $0x60] sm:$0xff]
        %v2853 = vld [vmem:[%s2835 + $0x68] sm:$0xf]
        %v2854 = vld [vmem:[%s2835 + $0x6c] sm:$0xff]
        %v2855 = vld [vmem:[%s2835 + $0x74] sm:$0xf]
        %v2856 = vld [vmem:[%s2835 + $0x78] sm:$0xff]
        %v2857 = vld [vmem:[%s2835 + $0x80] sm:$0xf]
        %v2858 = vld [vmem:[%s2835 + $0x84] sm:$0xff]
        %v2859 = vld [vmem:[%s2835 + $0x8c] sm:$0xf]
        %v2860 = vld [vmem:[%s2835 + $0x90] sm:$0xff]
        %v2861 = vld [vmem:[%s2835 + $0x98] sm:$0xf]
        %v2862 = vld [vmem:[%s2835 + $0x9c] sm:$0xff]
        %v2863 = vld [vmem:[%s2835 + $0xa4] sm:$0xf]
        %v2864 = vld [vmem:[%s2835 + $0xa8] sm:$0xff]
        %v2865 = vld [vmem:[%s2835 + $0xb0] sm:$0xf]
        %v2866 = vld [vmem:[%s2835 + $0xb4] sm:$0xff]
        %v2867 = vld [vmem:[%s2835 + $0xbc] sm:$0xf]
        %v2868 = vld [vmem:[%s2835 + $0xc0] sm:$0xff]
        %v2869 = vld [vmem:[%s2835 + $0xc8] sm:$0xf]
        %v2870 = vld [vmem:[%s2835 + $0xcc] sm:$0xff]
        %v2871 = vld [vmem:[%s2835 + $0xd4] sm:$0xf]
        %v2872 = vld [vmem:[%s2835 + $0xd8] sm:$0xff]
        %v2873 = vld [vmem:[%s2835 + $0xe0] sm:$0xf]
        %v2874 = vld [vmem:[%s2835 + $0xe4] sm:$0xff]
        %v2875 = vld [vmem:[%s2835 + $0xec] sm:$0xf]
        %v2876 = vld [vmem:[%s2835 + $0xf0] sm:$0xff]
        %v2877 = vld [vmem:[%s2835 + $0xf8] sm:$0xf]
        %v2878 = vld [vmem:[%s2835 + $0xfc] sm:$0xff]
        %v2879 = vld [vmem:[%s2835 + $0x104] sm:$0xf]
        %vm2880 = vcmask 1044480
        %v2881 = vrot.slane %v631, 3
        %v2882 = vrot.slane %v633, 3
        %v2883 = vsel %vm2880, %v2881, %v2882
        %v2884 = vrot.slane %v632, 3
        %v2885 = vrot.slane %v634, 3
        %v2886 = vsel %vm2880, %v2884, %v2885
        %v2887 = vrot.slane %v2104, 3
        %v2888 = vsel %vm2880, %v2882, %v2887
        %v2889 = vrot.slane %v2105, 3
        %v2890 = vsel %vm2880, %v2885, %v2889
        %v2938 = vunpack.c.l.b16 %v2836
        %v2939 = vunpack.c.h.b16 %v2836
        %v2940 = vunpack.c.l.b16 %v2837
        %v2941 = vunpack.c.l.b16 %v2838
        %v2942 = vunpack.c.h.b16 %v2838
        %v2943 = vunpack.c.l.b16 %v2839
        %v2944 = vunpack.c.l.b16 %v2840
        %v2945 = vunpack.c.h.b16 %v2840
        %v2946 = vunpack.c.l.b16 %v2841
        %v2947 = vunpack.c.l.b16 %v2842
        %v2948 = vunpack.c.h.b16 %v2842
        %v2949 = vunpack.c.l.b16 %v2843
        %v2950 = vunpack.c.l.b16 %v2844
        %v2951 = vunpack.c.h.b16 %v2844
        %v2952 = vunpack.c.l.b16 %v2845
        %v2953 = vunpack.c.l.b16 %v2846
        %v2954 = vunpack.c.h.b16 %v2846
        %v2955 = vunpack.c.l.b16 %v2847
        %v2956 = vunpack.c.l.b16 %v2848
        %v2957 = vunpack.c.h.b16 %v2848
        %v2958 = vunpack.c.l.b16 %v2849
        %v2959 = vunpack.c.l.b16 %v2850
        %v2960 = vunpack.c.h.b16 %v2850
        %v2961 = vunpack.c.l.b16 %v2851
        %v2962 = vunpack.c.l.b16 %v2852
        %v2963 = vunpack.c.h.b16 %v2852
        %v2964 = vunpack.c.l.b16 %v2853
        %v2965 = vunpack.c.l.b16 %v2854
        %v2966 = vunpack.c.h.b16 %v2854
        %v2967 = vunpack.c.l.b16 %v2855
        %v2968 = vunpack.c.l.b16 %v2856
        %v2969 = vunpack.c.h.b16 %v2856
        %v2970 = vunpack.c.l.b16 %v2857
        %v2971 = vunpack.c.l.b16 %v2858
        %v2972 = vunpack.c.h.b16 %v2858
        %v2973 = vunpack.c.l.b16 %v2859
        %v2974 = vunpack.c.l.b16 %v2860
        %v2975 = vunpack.c.h.b16 %v2860
        %v2976 = vunpack.c.l.b16 %v2861
        %v2977 = vunpack.c.l.b16 %v2862
        %v2978 = vunpack.c.h.b16 %v2862
        %v2979 = vunpack.c.l.b16 %v2863
        %v2980 = vunpack.c.l.b16 %v2864
        %v2981 = vunpack.c.h.b16 %v2864
        %v2982 = vunpack.c.l.b16 %v2865
        %v2983 = vunpack.c.l.b16 %v2866
        %v2984 = vunpack.c.h.b16 %v2866
        %v2985 = vunpack.c.l.b16 %v2867
        %v2986 = vunpack.c.l.b16 %v2868
        %v2987 = vunpack.c.h.b16 %v2868
        %v2988 = vunpack.c.l.b16 %v2869
        %v2989 = vunpack.c.l.b16 %v2870
        %v2990 = vunpack.c.h.b16 %v2870
        %v2991 = vunpack.c.l.b16 %v2871
        %v2992 = vunpack.c.l.b16 %v2872
        %v2993 = vunpack.c.h.b16 %v2872
        %v2994 = vunpack.c.l.b16 %v2873
        %v2995 = vunpack.c.l.b16 %v2874
        %v2996 = vunpack.c.h.b16 %v2874
        %v2997 = vunpack.c.l.b16 %v2875
        %v2998 = vunpack.c.l.b16 %v2876
        %v2999 = vunpack.c.h.b16 %v2876
        %v3000 = vunpack.c.l.b16 %v2877
        %v3001 = vunpack.c.l.b16 %v2878
        %v3002 = vunpack.c.h.b16 %v2878
        %v3003 = vunpack.c.l.b16 %v2879
        %v3004 = vpack.c.b16 %v2941, %v2938
        %v3005 = vpack.c.b16 %v2942, %v2939
        %v3006 = vpack.c.b16 %v2943, %v2940
        %v3007 = vpack.c.b16 %v2947, %v2944
        %v3008 = vpack.c.b16 %v2948, %v2945
        %v3009 = vpack.c.b16 %v2949, %v2946
        %v3010 = vpack.c.b16 %v2953, %v2950
        %v3011 = vpack.c.b16 %v2954, %v2951
        %v3012 = vpack.c.b16 %v2955, %v2952
        %v3013 = vpack.c.b16 %v2959, %v2956
        %v3014 = vpack.c.b16 %v2960, %v2957
        %v3015 = vpack.c.b16 %v2961, %v2958
        %v3016 = vpack.c.b16 %v2965, %v2962
        %v3017 = vpack.c.b16 %v2966, %v2963
        %v3018 = vpack.c.b16 %v2967, %v2964
        %v3019 = vpack.c.b16 %v2971, %v2968
        %v3020 = vpack.c.b16 %v2972, %v2969
        %v3021 = vpack.c.b16 %v2973, %v2970
        %v3022 = vpack.c.b16 %v2977, %v2974
        %v3023 = vpack.c.b16 %v2978, %v2975
        %v3024 = vpack.c.b16 %v2979, %v2976
        %v3025 = vpack.c.b16 %v2983, %v2980
        %v3026 = vpack.c.b16 %v2984, %v2981
        %v3027 = vpack.c.b16 %v2985, %v2982
        %v3028 = vpack.c.b16 %v2989, %v2986
        %v3029 = vpack.c.b16 %v2990, %v2987
        %v3030 = vpack.c.b16 %v2991, %v2988
        %v3031 = vpack.c.b16 %v2995, %v2992
        %v3032 = vpack.c.b16 %v2996, %v2993
        %v3033 = vpack.c.b16 %v2997, %v2994
        %v3034 = vpack.c.b16 %v3001, %v2998
        %v3035 = vpack.c.b16 %v3002, %v2999
        %v3036 = vpack.c.b16 %v3003, %v3000
        %v3071 = vsel %vm863, %v2886, 0
        %v3074 = vsel %vm863, %v2890, 0
        %v3077 = vsel %vm863, %v2889, 0
        %3079 = vmatprep.subr.bf16.mxu0 %v3005
        %3080 = vmatpush1.bf16.msra.mxu0 %v3004
        %3081 = vmatprep.subr.bf16.mxu0 %v3008
        %3082 = vmatpush1.bf16.msra.mxu0 %v3007
        %3083 = vmatprep.subr.bf16.mxu0 %v3011
        %3084 = vmatpush1.bf16.msra.mxu0 %v3010
        %3085 = vmatprep.subr.bf16.mxu0 %v3014
        %3086 = vmatpush1.bf16.msra.mxu0 %v3013
        %3087 = vmatprep.subr.bf16.mxu0 %v3017
        %3088 = vmatpush1.bf16.msra.mxu0 %v3016
        %3089 = vmatprep.subr.bf16.mxu0 %v3020
        %3090 = vmatpush1.bf16.msra.mxu0 %v3019
        %3091 = vmatprep.subr.bf16.mxu0 %v3023
        %3092 = vmatpush1.bf16.msra.mxu0 %v3022
        %3093 = vmatprep.subr.bf16.mxu0 %v3026
        %3094 = vmatpush1.bf16.msra.mxu0 %v3025
        %3095 = vmatprep.subr.bf16.mxu0 %v3029
        %3096 = vmatpush1.bf16.msra.mxu0 %v3028
        %3097 = vmatprep.subr.bf16.mxu0 %v3032
        %3098 = vmatpush1.bf16.msra.mxu0 %v3031
        %3099 = vmatprep.subr.bf16.mxu0 %v3035
        %3100 = vmatpush1.bf16.msra.mxu0 %v3034
        %3101 = vmatprep.subr.bf16.mxu0 0
        %3102 = vmatpush1.bf16.msra.mxu0 0
        %3103 = vmatprep.subr.bf16.mxu0 0
        %3104 = vmatpush1.bf16.msra.mxu0 0
        %3105 = vmatprep.subr.bf16.mxu0 0
        %3106 = vmatpush1.bf16.msra.mxu0 0
        %3107 = vmatprep.subr.bf16.mxu0 0
        %3108 = vmatpush1.bf16.msra.mxu0 0
        %3109 = vmatprep.subr.bf16.mxu0 0
        %3110 = vmatpush1.bf16.msra.mxu0 0
        %3111 = vmatprep.mubr.bf16.mxu0 %v3071
        %3112 = vmatmul.mubr.bf16.gmra.mrb[0].mxu0 %v2883
        %v3113 = vpop.f32.mrb[0].mxu0
        %v3114 = vadd.f32 0.0, %v3113
        %v3115 = vpop.f32.mrb[0].mxu0
        %v3116 = vadd.f32 0.0, %v3115
        %v3117 = vpop.f32.mrb[0].mxu0
        %v3118 = vadd.f32 0.0, %v3117
        %v3119 = vpop.f32.mrb[0].mxu0
        %v3120 = vadd.f32 0.0, %v3119
        %3121 = vmatprep.mubr.bf16.mxu0 %v3074
        %3122 = vmatmul.mubr.bf16.gmra.mrb[0].mxu0 %v2888
        %v3123 = vpop.f32.mrb[0].mxu0
        %v3124 = vadd.f32 0.0, %v3123
        %v3125 = vpop.f32.mrb[0].mxu0
        %v3126 = vadd.f32 0.0, %v3125
        %v3127 = vpop.f32.mrb[0].mxu0
        %v3128 = vadd.f32 0.0, %v3127
        %v3129 = vpop.f32.mrb[0].mxu0
        %v3130 = vadd.f32 0.0, %v3129
        %3131 = vmatprep.mubr.bf16.mxu0 %v3077
        %3132 = vmatmul.mubr.bf16.gmra.mrb[0].mxu0 %v2887
        %v3133 = vpop.f32.mrb[0].mxu0
        %v3134 = vadd.f32 0.0, %v3133
        %v3135 = vpop.f32.mrb[0].mxu0
        %v3136 = vadd.f32 0.0, %v3135
        %v3137 = vpop.f32.mrb[0].mxu0
        %v3138 = vpop.f32.mrb[0].mxu0
        %3139 = vdwg.mxu0
        %3140 = vmatprep.subr.bf16.mxu0 0
        %3141 = vmatpush1.bf16.msra.mxu0 %v3006
        %3142 = vmatprep.subr.bf16.mxu0 0
        %3143 = vmatpush1.bf16.msra.mxu0 %v3009
        %3144 = vmatprep.subr.bf16.mxu0 0
        %3145 = vmatpush1.bf16.msra.mxu0 %v3012
        %3146 = vmatprep.subr.bf16.mxu0 0
        %3147 = vmatpush1.bf16.msra.mxu0 %v3015
        %3148 = vmatprep.subr.bf16.mxu0 0
        %3149 = vmatpush1.bf16.msra.mxu0 %v3018
        %3150 = vmatprep.subr.bf16.mxu0 0
        %3151 = vmatpush1.bf16.msra.mxu0 %v3021
        %3152 = vmatprep.subr.bf16.mxu0 0
        %3153 = vmatpush1.bf16.msra.mxu0 %v3024
        %3154 = vmatprep.subr.bf16.mxu0 0
        %3155 = vmatpush1.bf16.msra.mxu0 %v3027
        %3156 = vmatprep.subr.bf16.mxu0 0
        %3157 = vmatpush1.bf16.msra.mxu0 %v3030
        %3158 = vmatprep.subr.bf16.mxu0 0
        %3159 = vmatpush1.bf16.msra.mxu0 %v3033
        %3160 = vmatprep.subr.bf16.mxu0 0
        %3161 = vmatpush1.bf16.msra.mxu0 %v3036
        %3162 = vmatprep.subr.bf16.mxu0 0
        %3163 = vmatpush1.bf16.msra.mxu0 0
        %3164 = vmatprep.subr.bf16.mxu0 0
        %3165 = vmatpush1.bf16.msra.mxu0 0
        %3166 = vmatprep.subr.bf16.mxu0 0
        %3167 = vmatpush1.bf16.msra.mxu0 0
        %3168 = vmatprep.subr.bf16.mxu0 0
        %3169 = vmatpush1.bf16.msra.mxu0 0
        %3170 = vmatprep.subr.bf16.mxu0 0
        %3171 = vmatpush1.bf16.msra.mxu0 0
        %3172 = vmatprep.mubr.bf16.mxu0 %v3071
        %3173 = vmatmul.mubr.bf16.gmra.mrb[0].mxu0 %v2883
        %v3174 = vpop.f32.mrb[0].mxu0
        %v3175 = vadd.f32 0.0, %v3174
        %v3176 = vpop.f32.mrb[0].mxu0
        %v3177 = vpop.f32.mrb[0].mxu0
        %v3178 = vadd.f32 0.0, %v3177
        %v3179 = vpop.f32.mrb[0].mxu0
        %3180 = vmatprep.mubr.bf16.mxu0 %v3074
        %3181 = vmatmul.mubr.bf16.gmra.mrb[0].mxu0 %v2888
        %v3182 = vpop.f32.mrb[0].mxu0
        %v3183 = vadd.f32 0.0, %v3182
        %v3184 = vpop.f32.mrb[0].mxu0
        %v3185 = vpop.f32.mrb[0].mxu0
        %v3186 = vadd.f32 0.0, %v3185
        %v3187 = vpop.f32.mrb[0].mxu0
        %3188 = vmatprep.mubr.bf16.mxu0 %v3077
        %3189 = vmatmul.mubr.bf16.gmra.mrb[0].mxu0 %v2887
        %v3190 = vpop.f32.mrb[0].mxu0
        %v3191 = vadd.f32 0.0, %v3190
        %v3192 = vpop.f32.mrb[0].mxu0
        %v3193 = vpop.f32.mrb[0].mxu0
        %v3194 = vpop.f32.mrb[0].mxu0
        %3195 = vdwg.mxu0
        %v3196 = vadd.f32 %v2820, %v3114
        %v3197 = vadd.f32 %v2821, %v3116
        %v3198 = vadd.f32 %v2822, %v3175
        %v3199 = vadd.f32 %v2823, %v3118
        %v3200 = vadd.f32 %v2824, %v3120
        %v3201 = vadd.f32 %v2825, %v3178
        %v3202 = vadd.f32 %v2826, %v3124
        %v3203 = vadd.f32 %v2827, %v3126
        %v3204 = vadd.f32 %v2828, %v3183
        %v3205 = vadd.f32 %v2829, %v3128
        %v3206 = vadd.f32 %v2830, %v3130
        %v3207 = vadd.f32 %v2831, %v3186
        %v3208 = vadd.f32 %v2832, %v3134
        %v3209 = vadd.f32 %v2833, %v3136
        %v3210 = vadd.f32 %v2834, %v3191
        %s3211 = scalar_lea.vmem [#allocation2], 1848
        %v3212 = vld [vmem:[%s3211] sm:$0xff]
        %v3213 = vld [vmem:[%s3211 + $0x8] sm:$0xf]
        %v3214 = vld [vmem:[%s3211 + $0xc] sm:$0xff]
        %v3215 = vld [vmem:[%s3211 + $0x14] sm:$0xf]
        %v3216 = vld [vmem:[%s3211 + $0x18] sm:$0xff]
        %v3217 = vld [vmem:[%s3211 + $0x20] sm:$0xf]
        %v3218 = vld [vmem:[%s3211 + $0x24] sm:$0xff]
        %v3219 = vld [vmem:[%s3211 + $0x2c] sm:$0xf]
        %v3220 = vld [vmem:[%s3211 + $0x30] sm:$0xff]
        %v3221 = vld [vmem:[%s3211 + $0x38] sm:$0xf]
        %v3222 = vld [vmem:[%s3211 + $0x3c] sm:$0xff]
        %v3223 = vld [vmem:[%s3211 + $0x44] sm:$0xf]
        %v3224 = vld [vmem:[%s3211 + $0x48] sm:$0xff]
        %v3225 = vld [vmem:[%s3211 + $0x50] sm:$0xf]
        %v3226 = vld [vmem:[%s3211 + $0x54] sm:$0xff]
        %v3227 = vld [vmem:[%s3211 + $0x5c] sm:$0xf]
        %v3228 = vld [vmem:[%s3211 + $0x60] sm:$0xff]
        %v3229 = vld [vmem:[%s3211 + $0x68] sm:$0xf]
        %v3230 = vld [vmem:[%s3211 + $0x6c] sm:$0xff]
        %v3231 = vld [vmem:[%s3211 + $0x74] sm:$0xf]
        %v3232 = vld [vmem:[%s3211 + $0x78] sm:$0xff]
        %v3233 = vld [vmem:[%s3211 + $0x80] sm:$0xf]
        %v3234 = vld [vmem:[%s3211 + $0x84] sm:$0xff]
        %v3235 = vld [vmem:[%s3211 + $0x8c] sm:$0xf]
        %v3236 = vld [vmem:[%s3211 + $0x90] sm:$0xff]
        %v3237 = vld [vmem:[%s3211 + $0x98] sm:$0xf]
        %v3238 = vld [vmem:[%s3211 + $0x9c] sm:$0xff]
        %v3239 = vld [vmem:[%s3211 + $0xa4] sm:$0xf]
        %v3240 = vld [vmem:[%s3211 + $0xa8] sm:$0xff]
        %v3241 = vld [vmem:[%s3211 + $0xb0] sm:$0xf]
        %v3242 = vld [vmem:[%s3211 + $0xb4] sm:$0xff]
        %v3243 = vld [vmem:[%s3211 + $0xbc] sm:$0xf]
        %v3244 = vld [vmem:[%s3211 + $0xc0] sm:$0xff]
        %v3245 = vld [vmem:[%s3211 + $0xc8] sm:$0xf]
        %v3246 = vld [vmem:[%s3211 + $0xcc] sm:$0xff]
        %v3247 = vld [vmem:[%s3211 + $0xd4] sm:$0xf]
        %v3248 = vld [vmem:[%s3211 + $0xd8] sm:$0xff]
        %v3249 = vld [vmem:[%s3211 + $0xe0] sm:$0xf]
        %v3250 = vld [vmem:[%s3211 + $0xe4] sm:$0xff]
        %v3251 = vld [vmem:[%s3211 + $0xec] sm:$0xf]
        %v3252 = vld [vmem:[%s3211 + $0xf0] sm:$0xff]
        %v3253 = vld [vmem:[%s3211 + $0xf8] sm:$0xf]
        %v3254 = vld [vmem:[%s3211 + $0xfc] sm:$0xff]
        %v3255 = vld [vmem:[%s3211 + $0x104] sm:$0xf]
        %vm3256 = vsmask.f32 4352
        %v3257 = vrot.slane %v639, 3
        %v3258 = vrot.slane %v641, 4
        %v3259 = vor.u32 %v3257, %v3258
        %v3260 = vrot.slane %v662, 3
        %v3261 = vrot.slane %v646, 4
        %v3262 = vor.u32 %v3260, %v3261
        %v3263 = vsel %vm3256, %v3259, %v3262
        %v3264 = vrot.slane %v651, 3
        %v3265 = vrot.slane %v653, 4
        %v3266 = vor.u32 %v3264, %v3265
        %v3267 = vrot.slane %v670, 3
        %v3268 = vrot.slane %v658, 4
        %v3269 = vor.u32 %v3267, %v3268
        %v3270 = vsel %vm3256, %v3266, %v3269
        %v3271 = vrot.slane %v2498, 3
        %v3272 = vrot.slane %v2501, 4
        %v3273 = vor.u32 %v3271, %v3272
        %v3274 = vsel %vm3256, %v3262, %v3273
        %v3275 = vrot.slane %v2507, 3
        %v3276 = vrot.slane %v2510, 4
        %v3277 = vor.u32 %v3275, %v3276
        %v3278 = vsel %vm3256, %v3269, %v3277
        %v3326 = vunpack.c.l.b16 %v3212
        %v3327 = vunpack.c.h.b16 %v3212
        %v3328 = vunpack.c.l.b16 %v3213
        %v3329 = vunpack.c.l.b16 %v3214
        %v3330 = vunpack.c.h.b16 %v3214
        %v3331 = vunpack.c.l.b16 %v3215
        %v3332 = vunpack.c.l.b16 %v3216
        %v3333 = vunpack.c.h.b16 %v3216
        %v3334 = vunpack.c.l.b16 %v3217
        %v3335 = vunpack.c.l.b16 %v3218
        %v3336 = vunpack.c.h.b16 %v3218
        %v3337 = vunpack.c.l.b16 %v3219
        %v3338 = vunpack.c.l.b16 %v3220
        %v3339 = vunpack.c.h.b16 %v3220
        %v3340 = vunpack.c.l.b16 %v3221
        %v3341 = vunpack.c.l.b16 %v3222
        %v3342 = vunpack.c.h.b16 %v3222
        %v3343 = vunpack.c.l.b16 %v3223
        %v3344 = vunpack.c.l.b16 %v3224
        %v3345 = vunpack.c.h.b16 %v3224
        %v3346 = vunpack.c.l.b16 %v3225
        %v3347 = vunpack.c.l.b16 %v3226
        %v3348 = vunpack.c.h.b16 %v3226
        %v3349 = vunpack.c.l.b16 %v3227
        %v3350 = vunpack.c.l.b16 %v3228
        %v3351 = vunpack.c.h.b16 %v3228
        %v3352 = vunpack.c.l.b16 %v3229
        %v3353 = vunpack.c.l.b16 %v3230
        %v3354 = vunpack.c.h.b16 %v3230
        %v3355 = vunpack.c.l.b16 %v3231
        %v3356 = vunpack.c.l.b16 %v3232
        %v3357 = vunpack.c.h.b16 %v3232
        %v3358 = vunpack.c.l.b16 %v3233
        %v3359 = vunpack.c.l.b16 %v3234
        %v3360 = vunpack.c.h.b16 %v3234
        %v3361 = vunpack.c.l.b16 %v3235
        %v3362 = vunpack.c.l.b16 %v3236
        %v3363 = vunpack.c.h.b16 %v3236
        %v3364 = vunpack.c.l.b16 %v3237
        %v3365 = vunpack.c.l.b16 %v3238
        %v3366 = vunpack.c.h.b16 %v3238
        %v3367 = vunpack.c.l.b16 %v3239
        %v3368 = vunpack.c.l.b16 %v3240
        %v3369 = vunpack.c.h.b16 %v3240
        %v3370 = vunpack.c.l.b16 %v3241
        %v3371 = vunpack.c.l.b16 %v3242
        %v3372 = vunpack.c.h.b16 %v3242
        %v3373 = vunpack.c.l.b16 %v3243
        %v3374 = vunpack.c.l.b16 %v3244
        %v3375 = vunpack.c.h.b16 %v3244
        %v3376 = vunpack.c.l.b16 %v3245
        %v3377 = vunpack.c.l.b16 %v3246
        %v3378 = vunpack.c.h.b16 %v3246
        %v3379 = vunpack.c.l.b16 %v3247
        %v3380 = vunpack.c.l.b16 %v3248
        %v3381 = vunpack.c.h.b16 %v3248
        %v3382 = vunpack.c.l.b16 %v3249
        %v3383 = vunpack.c.l.b16 %v3250
        %v3384 = vunpack.c.h.b16 %v3250
        %v3385 = vunpack.c.l.b16 %v3251
        %v3386 = vunpack.c.l.b16 %v3252
        %v3387 = vunpack.c.h.b16 %v3252
        %v3388 = vunpack.c.l.b16 %v3253
        %v3389 = vunpack.c.l.b16 %v3254
        %v3390 = vunpack.c.h.b16 %v3254
        %v3391 = vunpack.c.l.b16 %v3255
        %v3392 = vpack.c.b16 %v3329, %v3326
        %v3393 = vpack.c.b16 %v3330, %v3327
        %v3394 = vpack.c.b16 %v3331, %v3328
        %v3395 = vpack.c.b16 %v3335, %v3332
        %v3396 = vpack.c.b16 %v3336, %v3333
        %v3397 = vpack.c.b16 %v3337, %v3334
        %v3398 = vpack.c.b16 %v3341, %v3338
        %v3399 = vpack.c.b16 %v3342, %v3339
        %v3400 = vpack.c.b16 %v3343, %v3340
        %v3401 = vpack.c.b16 %v3347, %v3344
        %v3402 = vpack.c.b16 %v3348, %v3345
        %v3403 = vpack.c.b16 %v3349, %v3346
        %v3404 = vpack.c.b16 %v3353, %v3350
        %v3405 = vpack.c.b16 %v3354, %v3351
        %v3406 = vpack.c.b16 %v3355, %v3352
        %v3407 = vpack.c.b16 %v3359, %v3356
        %v3408 = vpack.c.b16 %v3360, %v3357
        %v3409 = vpack.c.b16 %v3361, %v3358
        %v3410 = vpack.c.b16 %v3365, %v3362
        %v3411 = vpack.c.b16 %v3366, %v3363
        %v3412 = vpack.c.b16 %v3367, %v3364
        %v3413 = vpack.c.b16 %v3371, %v3368
        %v3414 = vpack.c.b16 %v3372, %v3369
        %v3415 = vpack.c.b16 %v3373, %v3370
        %v3416 = vpack.c.b16 %v3377, %v3374
        %v3417 = vpack.c.b16 %v3378, %v3375
        %v3418 = vpack.c.b16 %v3379, %v3376
        %v3419 = vpack.c.b16 %v3383, %v3380
        %v3420 = vpack.c.b16 %v3384, %v3381
        %v3421 = vpack.c.b16 %v3385, %v3382
        %v3422 = vpack.c.b16 %v3389, %v3386
        %v3423 = vpack.c.b16 %v3390, %v3387
        %v3424 = vpack.c.b16 %v3391, %v3388
        %v3459 = vsel %vm863, %v3270, 0
        %v3462 = vsel %vm863, %v3278, 0
        %v3465 = vsel %vm863, %v3277, 0
        %3467 = vmatprep.subr.bf16.mxu0 %v3393
        %3468 = vmatpush1.bf16.msra.mxu0 %v3392
        %3469 = vmatprep.subr.bf16.mxu0 %v3396
        %3470 = vmatpush1.bf16.msra.mxu0 %v3395
        %3471 = vmatprep.subr.bf16.mxu0 %v3399
        %3472 = vmatpush1.bf16.msra.mxu0 %v3398
        %3473 = vmatprep.subr.bf16.mxu0 %v3402
        %3474 = vmatpush1.bf16.msra.mxu0 %v3401
        %3475 = vmatprep.subr.bf16.mxu0 %v3405
        %3476 = vmatpush1.bf16.msra.mxu0 %v3404
        %3477 = vmatprep.subr.bf16.mxu0 %v3408
        %3478 = vmatpush1.bf16.msra.mxu0 %v3407
        %3479 = vmatprep.subr.bf16.mxu0 %v3411
        %3480 = vmatpush1.bf16.msra.mxu0 %v3410
        %3481 = vmatprep.subr.bf16.mxu0 %v3414
        %3482 = vmatpush1.bf16.msra.mxu0 %v3413
        %3483 = vmatprep.subr.bf16.mxu0 %v3417
        %3484 = vmatpush1.bf16.msra.mxu0 %v3416
        %3485 = vmatprep.subr.bf16.mxu0 %v3420
        %3486 = vmatpush1.bf16.msra.mxu0 %v3419
        %3487 = vmatprep.subr.bf16.mxu0 %v3423
        %3488 = vmatpush1.bf16.msra.mxu0 %v3422
        %3489 = vmatprep.subr.bf16.mxu0 0
        %3490 = vmatpush1.bf16.msra.mxu0 0
        %3491 = vmatprep.subr.bf16.mxu0 0
        %3492 = vmatpush1.bf16.msra.mxu0 0
        %3493 = vmatprep.subr.bf16.mxu0 0
        %3494 = vmatpush1.bf16.msra.mxu0 0
        %3495 = vmatprep.subr.bf16.mxu0 0
        %3496 = vmatpush1.bf16.msra.mxu0 0
        %3497 = vmatprep.subr.bf16.mxu0 0
        %3498 = vmatpush1.bf16.msra.mxu0 0
        %3499 = vmatprep.mubr.bf16.mxu0 %v3459
        %3500 = vmatmul.mubr.bf16.gmra.mrb[0].mxu0 %v3263
        %v3501 = vpop.f32.mrb[0].mxu0
        %v3502 = vadd.f32 0.0, %v3501
        %v3503 = vpop.f32.mrb[0].mxu0
        %v3504 = vadd.f32 0.0, %v3503
        %v3505 = vpop.f32.mrb[0].mxu0
        %v3506 = vadd.f32 0.0, %v3505
        %v3507 = vpop.f32.mrb[0].mxu0
        %v3508 = vadd.f32 0.0, %v3507
        %3509 = vmatprep.mubr.bf16.mxu0 %v3462
        %3510 = vmatmul.mubr.bf16.gmra.mrb[0].mxu0 %v3274
        %v3511 = vpop.f32.mrb[0].mxu0
        %v3512 = vadd.f32 0.0, %v3511
        %v3513 = vpop.f32.mrb[0].mxu0
        %v3514 = vadd.f32 0.0, %v3513
        %v3515 = vpop.f32.mrb[0].mxu0
        %v3516 = vadd.f32 0.0, %v3515
        %v3517 = vpop.f32.mrb[0].mxu0
        %v3518 = vadd.f32 0.0, %v3517
        %3519 = vmatprep.mubr.bf16.mxu0 %v3465
        %3520 = vmatmul.mubr.bf16.gmra.mrb[0].mxu0 %v3273
        %v3521 = vpop.f32.mrb[0].mxu0
        %v3522 = vadd.f32 0.0, %v3521
        %v3523 = vpop.f32.mrb[0].mxu0
        %v3524 = vadd.f32 0.0, %v3523
        %v3525 = vpop.f32.mrb[0].mxu0
        %v3526 = vpop.f32.mrb[0].mxu0
        %3527 = vdwg.mxu0
        %3528 = vmatprep.subr.bf16.mxu0 0
        %3529 = vmatpush1.bf16.msra.mxu0 %v3394
        %3530 = vmatprep.subr.bf16.mxu0 0
        %3531 = vmatpush1.bf16.msra.mxu0 %v3397
        %3532 = vmatprep.subr.bf16.mxu0 0
        %3533 = vmatpush1.bf16.msra.mxu0 %v3400
        %3534 = vmatprep.subr.bf16.mxu0 0
        %3535 = vmatpush1.bf16.msra.mxu0 %v3403
        %3536 = vmatprep.subr.bf16.mxu0 0
        %3537 = vmatpush1.bf16.msra.mxu0 %v3406
        %3538 = vmatprep.subr.bf16.mxu0 0
        %3539 = vmatpush1.bf16.msra.mxu0 %v3409
        %3540 = vmatprep.subr.bf16.mxu0 0
        %3541 = vmatpush1.bf16.msra.mxu0 %v3412
        %3542 = vmatprep.subr.bf16.mxu0 0
        %3543 = vmatpush1.bf16.msra.mxu0 %v3415
        %3544 = vmatprep.subr.bf16.mxu0 0
        %3545 = vmatpush1.bf16.msra.mxu0 %v3418
        %3546 = vmatprep.subr.bf16.mxu0 0
        %3547 = vmatpush1.bf16.msra.mxu0 %v3421
        %3548 = vmatprep.subr.bf16.mxu0 0
        %3549 = vmatpush1.bf16.msra.mxu0 %v3424
        %3550 = vmatprep.subr.bf16.mxu0 0
        %3551 = vmatpush1.bf16.msra.mxu0 0
        %3552 = vmatprep.subr.bf16.mxu0 0
        %3553 = vmatpush1.bf16.msra.mxu0 0
        %3554 = vmatprep.subr.bf16.mxu0 0
        %3555 = vmatpush1.bf16.msra.mxu0 0
        %3556 = vmatprep.subr.bf16.mxu0 0
        %3557 = vmatpush1.bf16.msra.mxu0 0
        %3558 = vmatprep.subr.bf16.mxu0 0
        %3559 = vmatpush1.bf16.msra.mxu0 0
        %3560 = vmatprep.mubr.bf16.mxu0 %v3459
        %3561 = vmatmul.mubr.bf16.gmra.mrb[0].mxu0 %v3263
        %v3562 = vpop.f32.mrb[0].mxu0
        %v3563 = vadd.f32 0.0, %v3562
        %v3564 = vpop.f32.mrb[0].mxu0
        %v3565 = vpop.f32.mrb[0].mxu0
        %v3566 = vadd.f32 0.0, %v3565
        %v3567 = vpop.f32.mrb[0].mxu0
        %3568 = vmatprep.mubr.bf16.mxu0 %v3462
        %3569 = vmatmul.mubr.bf16.gmra.mrb[0].mxu0 %v3274
        %v3570 = vpop.f32.mrb[0].mxu0
        %v3571 = vadd.f32 0.0, %v3570
        %v3572 = vpop.f32.mrb[0].mxu0
        %v3573 = vpop.f32.mrb[0].mxu0
        %v3574 = vadd.f32 0.0, %v3573
        %v3575 = vpop.f32.mrb[0].mxu0
        %3576 = vmatprep.mubr.bf16.mxu0 %v3465
        %3577 = vmatmul.mubr.bf16.gmra.mrb[0].mxu0 %v3273
        %v3578 = vpop.f32.mrb[0].mxu0
        %v3579 = vadd.f32 0.0, %v3578
        %v3580 = vpop.f32.mrb[0].mxu0
        %v3581 = vpop.f32.mrb[0].mxu0
        %v3582 = vpop.f32.mrb[0].mxu0
        %3583 = vdwg.mxu0
        %v3584 = vadd.f32 %v3196, %v3502
        %v3585 = vadd.f32 %v3197, %v3504
        %v3586 = vadd.f32 %v3198, %v3563
        %v3587 = vadd.f32 %v3199, %v3506
        %v3588 = vadd.f32 %v3200, %v3508
        %v3589 = vadd.f32 %v3201, %v3566
        %v3590 = vadd.f32 %v3202, %v3512
        %v3591 = vadd.f32 %v3203, %v3514
        %v3592 = vadd.f32 %v3204, %v3571
        %v3593 = vadd.f32 %v3205, %v3516
        %v3594 = vadd.f32 %v3206, %v3518
        %v3595 = vadd.f32 %v3207, %v3574
        %v3596 = vadd.f32 %v3208, %v3522
        %v3597 = vadd.f32 %v3209, %v3524
        %v3598 = vadd.f32 %v3210, %v3579
        %v3602 = vrot.slane %v3584, 3
        %v3603 = vrot.slane %v3585, 3
        %v3604 = vrot.slane %v3586, 3
        %v3611 = vrot.slane %v3587, 6
        %v3612 = vrot.slane %v3588, 6
        %v3613 = vrot.slane %v3589, 6
        %v3617 = vrot.slane %v3587, 1
        %v3618 = vrot.slane %v3588, 1
        %v3619 = vrot.slane %v3589, 1
        %v3626 = vrot.slane %v3590, 4
        %v3627 = vrot.slane %v3591, 4
        %v3628 = vrot.slane %v3592, 4
        %v3632 = vrot.slane %v3590, 7
        %v3633 = vrot.slane %v3591, 7
        %v3634 = vrot.slane %v3592, 7
        %v3641 = vrot.slane %v3593, 2
        %v3642 = vrot.slane %v3594, 2
        %v3643 = vrot.slane %v3595, 2
        %v3647 = vrot.slane %v3593, 5
        %v3648 = vrot.slane %v3594, 5
        %v3649 = vrot.slane %v3595, 5
        %v3656 = vrot.slane %v3596, 3
        %v3657 = vrot.slane %v3597, 3
        %v3658 = vrot.slane %v3598, 3
        %vm3662 = vcmask 1040384
        %v3663 = vsel %vm3662, %v3584, %v3602
        %v3664 = vsel %vm3662, %v3585, %v3603
        %v3665 = vsel %vm3662, %v3586, %v3604
        %vm3666 = vcmask 1041408
        %v3667 = vsel %vm3666, %v3663, %v3611
        %v3668 = vsel %vm3666, %v3664, %v3612
        %v3669 = vsel %vm3666, %v3665, %v3613
        %vm3670 = vcmask 1042432
        %v3671 = vsel %vm3670, %v3667, %v3617
        %v3672 = vsel %vm3670, %v3668, %v3618
        %v3673 = vsel %vm3670, %v3669, %v3619
        %vm3674 = vcmask 1043456
        %v3675 = vsel %vm3674, %v3671, %v3626
        %v3676 = vsel %vm3674, %v3672, %v3627
        %v3677 = vsel %vm3674, %v3673, %v3628
        %vm3678 = vcmask 1044480
        %v3679 = vsel %vm3678, %v3675, %v3632
        %v3680 = vsel %vm3678, %v3676, %v3633
        %v3681 = vsel %vm3678, %v3677, %v3634
        %vm3682 = vcmask 1045504
        %v3683 = vsel %vm3682, %v3679, %v3641
        %v3684 = vsel %vm3682, %v3680, %v3642
        %v3685 = vsel %vm3682, %v3681, %v3643
        %vm3686 = vcmask 1046528
        %v3687 = vsel %vm3686, %v3683, %v3647
        %v3688 = vsel %vm3686, %v3684, %v3648
        %v3689 = vsel %vm3686, %v3685, %v3649
        %v3690 = vsel %vm3662, %v3596, %v3656
        %v3691 = vsel %vm3662, %v3597, %v3657
        %v3692 = vsel %vm3662, %v3598, %v3658
        %v3693 = vld [vmem:[#allocation5] sm:$0x7]
        %v3695 = vlaneseq
        %v3696 = vshrl.u32 %v3695, 7
        %v3697 = vsub.s32 0, %v3696
        %v3698 = vrot.slane %v3693, %v3697
        %v3699 = vlaneseq
        %v3700 = vshrl.u32 %v3699, 7
        %v3701 = vsub.s32 1, %v3700
        %v3702 = vrot.slane %v3693, %v3701
        %v3703 = vlaneseq
        %v3704 = vshrl.u32 %v3703, 7
        %v3705 = vsub.s32 2, %v3704
        %v3706 = vrot.slane %v3693, %v3705
        %v3710 = vadd.f32 %v3687, %v3698
        %v3711 = vadd.f32 %v3688, %v3702
        %v3712 = vadd.f32 %v3689, %v3706
        %v3713 = vadd.f32 %v3690, %v3698
        %v3714 = vadd.f32 %v3691, %v3702
        %v3715 = vadd.f32 %v3692, %v3706
        %v3716 = vmax.f32 %v3710, 0.0
        %v3717 = vmax.f32 %v3711, 0.0
        %v3718 = vmax.f32 %v3712, 0.0
        %v3719 = vmax.f32 %v3713, 0.0
        %v3720 = vmax.f32 %v3714, 0.0
        %v3721 = vmax.f32 %v3715, 0.0
        %v3722 = vpack.c.bf16 %v3719, %v3716
        %v3723 = vpack.c.bf16 %v3720, %v3717
        %v3724 = vpack.c.bf16 %v3721, %v3718
        %v3725 = vld [vmem:[#allocation7] sm:$0xff]
        %v3726 = vld [vmem:[#allocation7 + $0x8] sm:$0xff]
        %v3727 = vld [vmem:[#allocation7 + $0x10] sm:$0xff]
        %v3728 = vld [vmem:[#allocation7 + $0x18] sm:$0xff]
        %v3729 = vld [vmem:[#allocation7 + $0x20] sm:$0xff]
        %v3730 = vld [vmem:[#allocation7 + $0x28] sm:$0xff]
        %v3731 = vld [vmem:[#allocation7 + $0x30] sm:$0xff]
        %v3732 = vld [vmem:[#allocation7 + $0x38] sm:$0xff]
        %v3733 = vld [vmem:[#allocation7 + $0x40] sm:$0xff]
        %v3734 = vld [vmem:[#allocation7 + $0x48] sm:$0xff]
        %v3735 = vld [vmem:[#allocation7 + $0x50] sm:$0xff]
        %v3736 = vld [vmem:[#allocation7 + $0x58] sm:$0xff]
        %v3737 = vld [vmem:[#allocation7 + $0x60] sm:$0xff]
        %v3738 = vld [vmem:[#allocation7 + $0x68] sm:$0xff]
        %v3739 = vld [vmem:[#allocation7 + $0x70] sm:$0xff]
        %v3740 = vld [vmem:[#allocation7 + $0x78] sm:$0xff]
        %v3741 = vld [vmem:[#allocation7 + $0x80] sm:$0xff]
        %v3742 = vld [vmem:[#allocation7 + $0x88] sm:$0xff]
        %v3743 = vld [vmem:[#allocation7 + $0x90] sm:$0xff]
        %v3744 = vld [vmem:[#allocation7 + $0x98] sm:$0xff]
        %v3745 = vld [vmem:[#allocation7 + $0xa0] sm:$0xff]
        %v3746 = vld [vmem:[#allocation7 + $0xa8] sm:$0xff]
        %v3747 = vld [vmem:[#allocation7 + $0xb0] sm:$0xff]
        %v3748 = vld [vmem:[#allocation7 + $0xb8] sm:$0xff]
        %v3749 = vld [vmem:[#allocation7 + $0xc0] sm:$0xff]
        %v3750 = vld [vmem:[#allocation7 + $0xc8] sm:$0xff]
        %v3751 = vld [vmem:[#allocation7 + $0xd0] sm:$0xff]
        %v3752 = vld [vmem:[#allocation7 + $0xd8] sm:$0xff]
        %v3753 = vld [vmem:[#allocation7 + $0xe0] sm:$0xff]
        %v3754 = vld [vmem:[#allocation7 + $0xe8] sm:$0xff]
        %v3755 = vld [vmem:[#allocation7 + $0xf0] sm:$0xff]
        %v3756 = vld [vmem:[#allocation7 + $0xf8] sm:$0xff]
        %v3757 = vld [vmem:[#allocation7 + $0x100] sm:$0xff]
        %v3758 = vld [vmem:[#allocation7 + $0x108] sm:$0xff]
        %v3759 = vld [vmem:[#allocation7 + $0x110] sm:$0xff]
        %v3760 = vld [vmem:[#allocation7 + $0x118] sm:$0xff]
        %v3761 = vld [vmem:[#allocation7 + $0x120] sm:$0xff]
        %v3762 = vld [vmem:[#allocation7 + $0x128] sm:$0xff]
        %v3763 = vld [vmem:[#allocation7 + $0x130] sm:$0xff]
        %v3764 = vld [vmem:[#allocation7 + $0x138] sm:$0xff]
        %s3765 = scalar_lea.vmem [#allocation7], 320
        %v3766 = vld [vmem:[%s3765] sm:$0xff]
        %v3767 = vld [vmem:[%s3765 + $0x8] sm:$0xff]
        %v3768 = vld [vmem:[%s3765 + $0x10] sm:$0xff]
        %v3769 = vld [vmem:[%s3765 + $0x18] sm:$0xff]
        %v3770 = vld [vmem:[%s3765 + $0x20] sm:$0xff]
        %v3771 = vld [vmem:[%s3765 + $0x28] sm:$0xff]
        %v3772 = vld [vmem:[%s3765 + $0x30] sm:$0xff]
        %v3773 = vld [vmem:[%s3765 + $0x38] sm:$0xff]
        %v3774 = vld [vmem:[%s3765 + $0x40] sm:$0xff]
        %v3775 = vld [vmem:[%s3765 + $0x48] sm:$0xff]
        %v3776 = vld [vmem:[%s3765 + $0x50] sm:$0xff]
        %v3777 = vld [vmem:[%s3765 + $0x58] sm:$0xff]
        %v3778 = vld [vmem:[%s3765 + $0x60] sm:$0xff]
        %v3779 = vld [vmem:[%s3765 + $0x68] sm:$0xff]
        %v3780 = vld [vmem:[%s3765 + $0x70] sm:$0xff]
        %v3781 = vld [vmem:[%s3765 + $0x78] sm:$0xff]
        %v3782 = vld [vmem:[%s3765 + $0x80] sm:$0xff]
        %v3783 = vld [vmem:[%s3765 + $0x88] sm:$0xff]
        %v3784 = vld [vmem:[%s3765 + $0x90] sm:$0xff]
        %v3785 = vld [vmem:[%s3765 + $0x98] sm:$0xff]
        %v3786 = vld [vmem:[%s3765 + $0xa0] sm:$0xff]
        %v3787 = vld [vmem:[%s3765 + $0xa8] sm:$0xff]
        %v3788 = vld [vmem:[%s3765 + $0xb0] sm:$0xff]
        %v3789 = vld [vmem:[%s3765 + $0xb8] sm:$0xff]
        %v3790 = vld [vmem:[%s3765 + $0xc0] sm:$0xff]
        %v3791 = vld [vmem:[%s3765 + $0xc8] sm:$0xff]
        %v3792 = vld [vmem:[%s3765 + $0xd0] sm:$0xff]
        %v3793 = vld [vmem:[%s3765 + $0xd8] sm:$0xff]
        %v3794 = vld [vmem:[%s3765 + $0xe0] sm:$0xff]
        %v3795 = vld [vmem:[%s3765 + $0xe8] sm:$0xff]
        %v3796 = vld [vmem:[%s3765 + $0xf0] sm:$0xff]
        %v3797 = vld [vmem:[%s3765 + $0xf8] sm:$0xff]
        %v3798 = vld [vmem:[%s3765 + $0x100] sm:$0xff]
        %v3799 = vld [vmem:[%s3765 + $0x108] sm:$0xff]
        %v3800 = vld [vmem:[%s3765 + $0x110] sm:$0xff]
        %v3801 = vld [vmem:[%s3765 + $0x118] sm:$0xff]
        %v3802 = vld [vmem:[%s3765 + $0x120] sm:$0xff]
        %v3803 = vld [vmem:[%s3765 + $0x128] sm:$0xff]
        %v3804 = vld [vmem:[%s3765 + $0x130] sm:$0xff]
        %v3805 = vld [vmem:[%s3765 + $0x138] sm:$0xff]
        %v3807 = vshrl.u32 %v3722, 16
        %v3809 = vshll.u32 %v3722, 16
        %v3811 = vrot.slane %v3809, 1
        %v3812 = vor.u32 %v3807, %v3811
        %v3814 = vshrl.u32 %v3723, 16
        %v3816 = vshll.u32 %v3723, 16
        %v3818 = vrot.slane %v3816, 1
        %v3819 = vor.u32 %v3814, %v3818
        %v3821 = vshrl.u32 %v3724, 16
        %v3823 = vshll.u32 %v3724, 16
        %v3825 = vrot.slane %v3823, 1
        %v3826 = vor.u32 %v3821, %v3825
        %v3869 = vunpack.c.l.b16 %v3766
        %v3870 = vunpack.c.h.b16 %v3766
        %v3871 = vunpack.c.l.b16 %v3767
        %v3872 = vunpack.c.h.b16 %v3767
        %v3873 = vunpack.c.l.b16 %v3768
        %v3874 = vunpack.c.h.b16 %v3768
        %v3875 = vunpack.c.l.b16 %v3769
        %v3876 = vunpack.c.h.b16 %v3769
        %v3877 = vunpack.c.l.b16 %v3770
        %v3878 = vunpack.c.h.b16 %v3770
        %v3879 = vunpack.c.l.b16 %v3771
        %v3880 = vunpack.c.h.b16 %v3771
        %v3881 = vunpack.c.l.b16 %v3772
        %v3882 = vunpack.c.h.b16 %v3772
        %v3883 = vunpack.c.l.b16 %v3773
        %v3884 = vunpack.c.h.b16 %v3773
        %v3885 = vunpack.c.l.b16 %v3774
        %v3886 = vunpack.c.h.b16 %v3774
        %v3887 = vunpack.c.l.b16 %v3775
        %v3888 = vunpack.c.h.b16 %v3775
        %v3889 = vunpack.c.l.b16 %v3776
        %v3890 = vunpack.c.h.b16 %v3776
        %v3891 = vunpack.c.l.b16 %v3777
        %v3892 = vunpack.c.h.b16 %v3777
        %v3893 = vunpack.c.l.b16 %v3778
        %v3894 = vunpack.c.h.b16 %v3778
        %v3895 = vunpack.c.l.b16 %v3779
        %v3896 = vunpack.c.h.b16 %v3779
        %v3897 = vunpack.c.l.b16 %v3780
        %v3898 = vunpack.c.h.b16 %v3780
        %v3899 = vunpack.c.l.b16 %v3781
        %v3900 = vunpack.c.h.b16 %v3781
        %v3901 = vunpack.c.l.b16 %v3782
        %v3902 = vunpack.c.h.b16 %v3782
        %v3903 = vunpack.c.l.b16 %v3783
        %v3904 = vunpack.c.h.b16 %v3783
        %v3905 = vunpack.c.l.b16 %v3784
        %v3906 = vunpack.c.h.b16 %v3784
        %v3907 = vunpack.c.l.b16 %v3785
        %v3908 = vunpack.c.h.b16 %v3785
        %v3909 = vunpack.c.l.b16 %v3786
        %v3910 = vunpack.c.h.b16 %v3786
        %v3911 = vunpack.c.l.b16 %v3787
        %v3912 = vunpack.c.h.b16 %v3787
        %v3913 = vunpack.c.l.b16 %v3788
        %v3914 = vunpack.c.h.b16 %v3788
        %v3915 = vunpack.c.l.b16 %v3789
        %v3916 = vunpack.c.h.b16 %v3789
        %v3917 = vunpack.c.l.b16 %v3790
        %v3918 = vunpack.c.h.b16 %v3790
        %v3919 = vunpack.c.l.b16 %v3791
        %v3920 = vunpack.c.h.b16 %v3791
        %v3921 = vunpack.c.l.b16 %v3792
        %v3922 = vunpack.c.h.b16 %v3792
        %v3923 = vunpack.c.l.b16 %v3793
        %v3924 = vunpack.c.h.b16 %v3793
        %v3925 = vunpack.c.l.b16 %v3794
        %v3926 = vunpack.c.h.b16 %v3794
        %v3927 = vunpack.c.l.b16 %v3795
        %v3928 = vunpack.c.h.b16 %v3795
        %v3929 = vunpack.c.l.b16 %v3796
        %v3930 = vunpack.c.h.b16 %v3796
        %v3931 = vunpack.c.l.b16 %v3797
        %v3932 = vunpack.c.h.b16 %v3797
        %v3933 = vunpack.c.l.b16 %v3798
        %v3934 = vunpack.c.h.b16 %v3798
        %v3935 = vunpack.c.l.b16 %v3799
        %v3936 = vunpack.c.h.b16 %v3799
        %v3937 = vunpack.c.l.b16 %v3800
        %v3938 = vunpack.c.h.b16 %v3800
        %v3939 = vunpack.c.l.b16 %v3801
        %v3940 = vunpack.c.h.b16 %v3801
        %v3941 = vunpack.c.l.b16 %v3802
        %v3942 = vunpack.c.h.b16 %v3802
        %v3943 = vunpack.c.l.b16 %v3803
        %v3944 = vunpack.c.h.b16 %v3803
        %v3945 = vunpack.c.l.b16 %v3804
        %v3946 = vunpack.c.h.b16 %v3804
        %v3947 = vunpack.c.l.b16 %v3805
        %v3948 = vunpack.c.h.b16 %v3805
        %v3949 = vpack.c.b16 %v3871, %v3869
        %v3950 = vpack.c.b16 %v3872, %v3870
        %v3951 = vpack.c.b16 %v3875, %v3873
        %v3952 = vpack.c.b16 %v3876, %v3874
        %v3953 = vpack.c.b16 %v3879, %v3877
        %v3954 = vpack.c.b16 %v3880, %v3878
        %v3955 = vpack.c.b16 %v3883, %v3881
        %v3956 = vpack.c.b16 %v3884, %v3882
        %v3957 = vpack.c.b16 %v3887, %v3885
        %v3958 = vpack.c.b16 %v3888, %v3886
        %v3959 = vpack.c.b16 %v3891, %v3889
        %v3960 = vpack.c.b16 %v3892, %v3890
        %v3961 = vpack.c.b16 %v3895, %v3893
        %v3962 = vpack.c.b16 %v3896, %v3894
        %v3963 = vpack.c.b16 %v3899, %v3897
        %v3964 = vpack.c.b16 %v3900, %v3898
        %v3965 = vpack.c.b16 %v3903, %v3901
        %v3966 = vpack.c.b16 %v3904, %v3902
        %v3967 = vpack.c.b16 %v3907, %v3905
        %v3968 = vpack.c.b16 %v3908, %v3906
        %v3969 = vpack.c.b16 %v3911, %v3909
        %v3970 = vpack.c.b16 %v3912, %v3910
        %v3971 = vpack.c.b16 %v3915, %v3913
        %v3972 = vpack.c.b16 %v3916, %v3914
        %v3973 = vpack.c.b16 %v3919, %v3917
        %v3974 = vpack.c.b16 %v3920, %v3918
        %v3975 = vpack.c.b16 %v3923, %v3921
        %v3976 = vpack.c.b16 %v3924, %v3922
        %v3977 = vpack.c.b16 %v3927, %v3925
        %v3978 = vpack.c.b16 %v3928, %v3926
        %v3979 = vpack.c.b16 %v3931, %v3929
        %v3980 = vpack.c.b16 %v3932, %v3930
        %v3981 = vpack.c.b16 %v3935, %v3933
        %v3982 = vpack.c.b16 %v3936, %v3934
        %v3983 = vpack.c.b16 %v3939, %v3937
        %v3984 = vpack.c.b16 %v3940, %v3938
        %v3985 = vpack.c.b16 %v3943, %v3941
        %v3986 = vpack.c.b16 %v3944, %v3942
        %v3987 = vpack.c.b16 %v3947, %v3945
        %v3988 = vpack.c.b16 %v3948, %v3946
        %vm4029 = vcmask 523264
        %v4031 = vsel %vm4029, %v3826, 0
        %4033 = vmatprep.subr.bf16.mxu0 %v3950
        %4034 = vmatpush1.bf16.msra.mxu0 %v3949
        %4035 = vmatprep.subr.bf16.mxu0 %v3952
        %4036 = vmatpush1.bf16.msra.mxu0 %v3951
        %4037 = vmatprep.subr.bf16.mxu0 %v3954
        %4038 = vmatpush1.bf16.msra.mxu0 %v3953
        %4039 = vmatprep.subr.bf16.mxu0 %v3956
        %4040 = vmatpush1.bf16.msra.mxu0 %v3955
        %4041 = vmatprep.subr.bf16.mxu0 %v3958
        %4042 = vmatpush1.bf16.msra.mxu0 %v3957
        %4043 = vmatprep.subr.bf16.mxu0 %v3960
        %4044 = vmatpush1.bf16.msra.mxu0 %v3959
        %4045 = vmatprep.subr.bf16.mxu0 %v3962
        %4046 = vmatpush1.bf16.msra.mxu0 %v3961
        %4047 = vmatprep.subr.bf16.mxu0 %v3964
        %4048 = vmatpush1.bf16.msra.mxu0 %v3963
        %4049 = vmatprep.subr.bf16.mxu0 %v3966
        %4050 = vmatpush1.bf16.msra.mxu0 %v3965
        %4051 = vmatprep.subr.bf16.mxu0 %v3968
        %4052 = vmatpush1.bf16.msra.mxu0 %v3967
        %4053 = vmatprep.subr.bf16.mxu0 %v3970
        %4054 = vmatpush1.bf16.msra.mxu0 %v3969
        %4055 = vmatprep.subr.bf16.mxu0 %v3972
        %4056 = vmatpush1.bf16.msra.mxu0 %v3971
        %4057 = vmatprep.subr.bf16.mxu0 %v3974
        %4058 = vmatpush1.bf16.msra.mxu0 %v3973
        %4059 = vmatprep.subr.bf16.mxu0 %v3976
        %4060 = vmatpush1.bf16.msra.mxu0 %v3975
        %4061 = vmatprep.subr.bf16.mxu0 %v3978
        %4062 = vmatpush1.bf16.msra.mxu0 %v3977
        %4063 = vmatprep.subr.bf16.mxu0 %v3980
        %4064 = vmatpush1.bf16.msra.mxu0 %v3979
        %4065 = vmatprep.mubr.bf16.mxu0 %v3819
        %4066 = vmatmul.mubr.bf16.gmra.mrb[0].mxu0 %v3812
        %v4067 = vpop.f32.mrb[0].mxu0
        %v4068 = vadd.f32 0.0, %v4067
        %v4069 = vpop.f32.mrb[0].mxu0
        %v4070 = vadd.f32 0.0, %v4069
        %v4071 = vpop.f32.mrb[0].mxu0
        %v4072 = vpop.f32.mrb[0].mxu0
        %4073 = vdwg.mxu0
        %4074 = vmatprep.subr.bf16.mxu0 %v3982
        %4075 = vmatpush1.bf16.msra.mxu0 %v3981
        %4076 = vmatprep.subr.bf16.mxu0 %v3984
        %4077 = vmatpush1.bf16.msra.mxu0 %v3983
        %4078 = vmatprep.subr.bf16.mxu0 %v3986
        %4079 = vmatpush1.bf16.msra.mxu0 %v3985
        %4080 = vmatprep.subr.bf16.mxu0 %v3988
        %4081 = vmatpush1.bf16.msra.mxu0 %v3987
        %4082 = vmatprep.subr.bf16.mxu0 0
        %4083 = vmatpush1.bf16.msra.mxu0 0
        %4084 = vmatprep.subr.bf16.mxu0 0
        %4085 = vmatpush1.bf16.msra.mxu0 0
        %4086 = vmatprep.subr.bf16.mxu0 0
        %4087 = vmatpush1.bf16.msra.mxu0 0
        %4088 = vmatprep.subr.bf16.mxu0 0
        %4089 = vmatpush1.bf16.msra.mxu0 0
        %4090 = vmatprep.subr.bf16.mxu0 0
        %4091 = vmatpush1.bf16.msra.mxu0 0
        %4092 = vmatprep.subr.bf16.mxu0 0
        %4093 = vmatpush1.bf16.msra.mxu0 0
        %4094 = vmatprep.subr.bf16.mxu0 0
        %4095 = vmatpush1.bf16.msra.mxu0 0
        %4096 = vmatprep.subr.bf16.mxu0 0
        %4097 = vmatpush1.bf16.msra.mxu0 0
        %4098 = vmatprep.subr.bf16.mxu0 0
        %4099 = vmatpush1.bf16.msra.mxu0 0
        %4100 = vmatprep.subr.bf16.mxu0 0
        %4101 = vmatpush1.bf16.msra.mxu0 0
        %4102 = vmatprep.subr.bf16.mxu0 0
        %4103 = vmatpush1.bf16.msra.mxu0 0
        %4104 = vmatprep.subr.bf16.mxu0 0
        %4105 = vmatpush1.bf16.msra.mxu0 0
        %4106 = vmatprep.mubr.bf16.mxu0 0
        %4107 = vmatmul.mubr.bf16.gmra.mrb[0].mxu0 %v4031
        %v4108 = vpop.f32.mrb[0].mxu0
        %v4109 = vadd.f32 %v4068, %v4108
        %v4110 = vpop.f32.mrb[0].mxu0
        %v4111 = vadd.f32 %v4070, %v4110
        %v4112 = vpop.f32.mrb[0].mxu0
        %v4113 = vpop.f32.mrb[0].mxu0
        %4114 = vdwg.mxu0
        %v4155 = vunpack.c.l.b16 %v3725
        %v4156 = vunpack.c.h.b16 %v3725
        %v4157 = vunpack.c.l.b16 %v3726
        %v4158 = vunpack.c.h.b16 %v3726
        %v4159 = vunpack.c.l.b16 %v3727
        %v4160 = vunpack.c.h.b16 %v3727
        %v4161 = vunpack.c.l.b16 %v3728
        %v4162 = vunpack.c.h.b16 %v3728
        %v4163 = vunpack.c.l.b16 %v3729
        %v4164 = vunpack.c.h.b16 %v3729
        %v4165 = vunpack.c.l.b16 %v3730
        %v4166 = vunpack.c.h.b16 %v3730
        %v4167 = vunpack.c.l.b16 %v3731
        %v4168 = vunpack.c.h.b16 %v3731
        %v4169 = vunpack.c.l.b16 %v3732
        %v4170 = vunpack.c.h.b16 %v3732
        %v4171 = vunpack.c.l.b16 %v3733
        %v4172 = vunpack.c.h.b16 %v3733
        %v4173 = vunpack.c.l.b16 %v3734
        %v4174 = vunpack.c.h.b16 %v3734
        %v4175 = vunpack.c.l.b16 %v3735
        %v4176 = vunpack.c.h.b16 %v3735
        %v4177 = vunpack.c.l.b16 %v3736
        %v4178 = vunpack.c.h.b16 %v3736
        %v4179 = vunpack.c.l.b16 %v3737
        %v4180 = vunpack.c.h.b16 %v3737
        %v4181 = vunpack.c.l.b16 %v3738
        %v4182 = vunpack.c.h.b16 %v3738
        %v4183 = vunpack.c.l.b16 %v3739
        %v4184 = vunpack.c.h.b16 %v3739
        %v4185 = vunpack.c.l.b16 %v3740
        %v4186 = vunpack.c.h.b16 %v3740
        %v4187 = vunpack.c.l.b16 %v3741
        %v4188 = vunpack.c.h.b16 %v3741
        %v4189 = vunpack.c.l.b16 %v3742
        %v4190 = vunpack.c.h.b16 %v3742
        %v4191 = vunpack.c.l.b16 %v3743
        %v4192 = vunpack.c.h.b16 %v3743
        %v4193 = vunpack.c.l.b16 %v3744
        %v4194 = vunpack.c.h.b16 %v3744
        %v4195 = vunpack.c.l.b16 %v3745
        %v4196 = vunpack.c.h.b16 %v3745
        %v4197 = vunpack.c.l.b16 %v3746
        %v4198 = vunpack.c.h.b16 %v3746
        %v4199 = vunpack.c.l.b16 %v3747
        %v4200 = vunpack.c.h.b16 %v3747
        %v4201 = vunpack.c.l.b16 %v3748
        %v4202 = vunpack.c.h.b16 %v3748
        %v4203 = vunpack.c.l.b16 %v3749
        %v4204 = vunpack.c.h.b16 %v3749
        %v4205 = vunpack.c.l.b16 %v3750
        %v4206 = vunpack.c.h.b16 %v3750
        %v4207 = vunpack.c.l.b16 %v3751
        %v4208 = vunpack.c.h.b16 %v3751
        %v4209 = vunpack.c.l.b16 %v3752
        %v4210 = vunpack.c.h.b16 %v3752
        %v4211 = vunpack.c.l.b16 %v3753
        %v4212 = vunpack.c.h.b16 %v3753
        %v4213 = vunpack.c.l.b16 %v3754
        %v4214 = vunpack.c.h.b16 %v3754
        %v4215 = vunpack.c.l.b16 %v3755
        %v4216 = vunpack.c.h.b16 %v3755
        %v4217 = vunpack.c.l.b16 %v3756
        %v4218 = vunpack.c.h.b16 %v3756
        %v4219 = vunpack.c.l.b16 %v3757
        %v4220 = vunpack.c.h.b16 %v3757
        %v4221 = vunpack.c.l.b16 %v3758
        %v4222 = vunpack.c.h.b16 %v3758
        %v4223 = vunpack.c.l.b16 %v3759
        %v4224 = vunpack.c.h.b16 %v3759
        %v4225 = vunpack.c.l.b16 %v3760
        %v4226 = vunpack.c.h.b16 %v3760
        %v4227 = vunpack.c.l.b16 %v3761
        %v4228 = vunpack.c.h.b16 %v3761
        %v4229 = vunpack.c.l.b16 %v3762
        %v4230 = vunpack.c.h.b16 %v3762
        %v4231 = vunpack.c.l.b16 %v3763
        %v4232 = vunpack.c.h.b16 %v3763
        %v4233 = vunpack.c.l.b16 %v3764
        %v4234 = vunpack.c.h.b16 %v3764
        %v4235 = vpack.c.b16 %v4157, %v4155
        %v4236 = vpack.c.b16 %v4158, %v4156
        %v4237 = vpack.c.b16 %v4161, %v4159
        %v4238 = vpack.c.b16 %v4162, %v4160
        %v4239 = vpack.c.b16 %v4165, %v4163
        %v4240 = vpack.c.b16 %v4166, %v4164
        %v4241 = vpack.c.b16 %v4169, %v4167
        %v4242 = vpack.c.b16 %v4170, %v4168
        %v4243 = vpack.c.b16 %v4173, %v4171
        %v4244 = vpack.c.b16 %v4174, %v4172
        %v4245 = vpack.c.b16 %v4177, %v4175
        %v4246 = vpack.c.b16 %v4178, %v4176
        %v4247 = vpack.c.b16 %v4181, %v4179
        %v4248 = vpack.c.b16 %v4182, %v4180
        %v4249 = vpack.c.b16 %v4185, %v4183
        %v4250 = vpack.c.b16 %v4186, %v4184
        %v4251 = vpack.c.b16 %v4189, %v4187
        %v4252 = vpack.c.b16 %v4190, %v4188
        %v4253 = vpack.c.b16 %v4193, %v4191
        %v4254 = vpack.c.b16 %v4194, %v4192
        %v4255 = vpack.c.b16 %v4197, %v4195
        %v4256 = vpack.c.b16 %v4198, %v4196
        %v4257 = vpack.c.b16 %v4201, %v4199
        %v4258 = vpack.c.b16 %v4202, %v4200
        %v4259 = vpack.c.b16 %v4205, %v4203
        %v4260 = vpack.c.b16 %v4206, %v4204
        %v4261 = vpack.c.b16 %v4209, %v4207
        %v4262 = vpack.c.b16 %v4210, %v4208
        %v4263 = vpack.c.b16 %v4213, %v4211
        %v4264 = vpack.c.b16 %v4214, %v4212
        %v4265 = vpack.c.b16 %v4217, %v4215
        %v4266 = vpack.c.b16 %v4218, %v4216
        %v4267 = vpack.c.b16 %v4221, %v4219
        %v4268 = vpack.c.b16 %v4222, %v4220
        %v4269 = vpack.c.b16 %v4225, %v4223
        %v4270 = vpack.c.b16 %v4226, %v4224
        %v4271 = vpack.c.b16 %v4229, %v4227
        %v4272 = vpack.c.b16 %v4230, %v4228
        %v4273 = vpack.c.b16 %v4233, %v4231
        %v4274 = vpack.c.b16 %v4234, %v4232
        %v4315 = vsel %vm4029, %v3724, 0
        %4317 = vmatprep.subr.bf16.mxu0 %v4236
        %4318 = vmatpush1.bf16.msra.mxu0 %v4235
        %4319 = vmatprep.subr.bf16.mxu0 %v4238
        %4320 = vmatpush1.bf16.msra.mxu0 %v4237
        %4321 = vmatprep.subr.bf16.mxu0 %v4240
        %4322 = vmatpush1.bf16.msra.mxu0 %v4239
        %4323 = vmatprep.subr.bf16.mxu0 %v4242
        %4324 = vmatpush1.bf16.msra.mxu0 %v4241
        %4325 = vmatprep.subr.bf16.mxu0 %v4244
        %4326 = vmatpush1.bf16.msra.mxu0 %v4243
        %4327 = vmatprep.subr.bf16.mxu0 %v4246
        %4328 = vmatpush1.bf16.msra.mxu0 %v4245
        %4329 = vmatprep.subr.bf16.mxu0 %v4248
        %4330 = vmatpush1.bf16.msra.mxu0 %v4247
        %4331 = vmatprep.subr.bf16.mxu0 %v4250
        %4332 = vmatpush1.bf16.msra.mxu0 %v4249
        %4333 = vmatprep.subr.bf16.mxu0 %v4252
        %4334 = vmatpush1.bf16.msra.mxu0 %v4251
        %4335 = vmatprep.subr.bf16.mxu0 %v4254
        %4336 = vmatpush1.bf16.msra.mxu0 %v4253
        %4337 = vmatprep.subr.bf16.mxu0 %v4256
        %4338 = vmatpush1.bf16.msra.mxu0 %v4255
        %4339 = vmatprep.subr.bf16.mxu0 %v4258
        %4340 = vmatpush1.bf16.msra.mxu0 %v4257
        %4341 = vmatprep.subr.bf16.mxu0 %v4260
        %4342 = vmatpush1.bf16.msra.mxu0 %v4259
        %4343 = vmatprep.subr.bf16.mxu0 %v4262
        %4344 = vmatpush1.bf16.msra.mxu0 %v4261
        %4345 = vmatprep.subr.bf16.mxu0 %v4264
        %4346 = vmatpush1.bf16.msra.mxu0 %v4263
        %4347 = vmatprep.subr.bf16.mxu0 %v4266
        %4348 = vmatpush1.bf16.msra.mxu0 %v4265
        %4349 = vmatprep.mubr.bf16.mxu0 %v3723
        %4350 = vmatmul.mubr.bf16.gmra.mrb[0].mxu0 %v3722
        %v4351 = vpop.f32.mrb[0].mxu0
        %v4352 = vadd.f32 %v4109, %v4351
        %v4353 = vpop.f32.mrb[0].mxu0
        %v4354 = vadd.f32 %v4111, %v4353
        %v4355 = vpop.f32.mrb[0].mxu0
        %v4356 = vpop.f32.mrb[0].mxu0
        %4357 = vdwg.mxu0
        %4358 = vmatprep.subr.bf16.mxu0 %v4268
        %4359 = vmatpush1.bf16.msra.mxu0 %v4267
        %4360 = vmatprep.subr.bf16.mxu0 %v4270
        %4361 = vmatpush1.bf16.msra.mxu0 %v4269
        %4362 = vmatprep.subr.bf16.mxu0 %v4272
        %4363 = vmatpush1.bf16.msra.mxu0 %v4271
        %4364 = vmatprep.subr.bf16.mxu0 %v4274
        %4365 = vmatpush1.bf16.msra.mxu0 %v4273
        %4366 = vmatprep.subr.bf16.mxu0 0
        %4367 = vmatpush1.bf16.msra.mxu0 0
        %4368 = vmatprep.subr.bf16.mxu0 0
        %4369 = vmatpush1.bf16.msra.mxu0 0
        %4370 = vmatprep.subr.bf16.mxu0 0
        %4371 = vmatpush1.bf16.msra.mxu0 0
        %4372 = vmatprep.subr.bf16.mxu0 0
        %4373 = vmatpush1.bf16.msra.mxu0 0
        %4374 = vmatprep.subr.bf16.mxu0 0
        %4375 = vmatpush1.bf16.msra.mxu0 0
        %4376 = vmatprep.subr.bf16.mxu0 0
        %4377 = vmatpush1.bf16.msra.mxu0 0
        %4378 = vmatprep.subr.bf16.mxu0 0
        %4379 = vmatpush1.bf16.msra.mxu0 0
        %4380 = vmatprep.subr.bf16.mxu0 0
        %4381 = vmatpush1.bf16.msra.mxu0 0
        %4382 = vmatprep.subr.bf16.mxu0 0
        %4383 = vmatpush1.bf16.msra.mxu0 0
        %4384 = vmatprep.subr.bf16.mxu0 0
        %4385 = vmatpush1.bf16.msra.mxu0 0
        %4386 = vmatprep.subr.bf16.mxu0 0
        %4387 = vmatpush1.bf16.msra.mxu0 0
        %4388 = vmatprep.subr.bf16.mxu0 0
        %4389 = vmatpush1.bf16.msra.mxu0 0
        %4390 = vmatprep.mubr.bf16.mxu0 0
        %4391 = vmatmul.mubr.bf16.gmra.mrb[0].mxu0 %v4315
        %v4392 = vpop.f32.mrb[0].mxu0
        %v4393 = vadd.f32 %v4352, %v4392
        %v4394 = vpop.f32.mrb[0].mxu0
        %v4395 = vadd.f32 %v4354, %v4394
        %v4396 = vpop.f32.mrb[0].mxu0
        %v4397 = vpop.f32.mrb[0].mxu0
        %4398 = vdwg.mxu0
        %s4399 = scalar_lea.vmem [#allocation7], 640
        %v4400 = vld [vmem:[%s4399] sm:$0xff]
        %v4401 = vld [vmem:[%s4399 + $0x8] sm:$0xff]
        %v4402 = vld [vmem:[%s4399 + $0x10] sm:$0xff]
        %v4403 = vld [vmem:[%s4399 + $0x18] sm:$0xff]
        %v4404 = vld [vmem:[%s4399 + $0x20] sm:$0xff]
        %v4405 = vld [vmem:[%s4399 + $0x28] sm:$0xff]
        %v4406 = vld [vmem:[%s4399 + $0x30] sm:$0xff]
        %v4407 = vld [vmem:[%s4399 + $0x38] sm:$0xff]
        %v4408 = vld [vmem:[%s4399 + $0x40] sm:$0xff]
        %v4409 = vld [vmem:[%s4399 + $0x48] sm:$0xff]
        %v4410 = vld [vmem:[%s4399 + $0x50] sm:$0xff]
        %v4411 = vld [vmem:[%s4399 + $0x58] sm:$0xff]
        %v4412 = vld [vmem:[%s4399 + $0x60] sm:$0xff]
        %v4413 = vld [vmem:[%s4399 + $0x68] sm:$0xff]
        %v4414 = vld [vmem:[%s4399 + $0x70] sm:$0xff]
        %v4415 = vld [vmem:[%s4399 + $0x78] sm:$0xff]
        %v4416 = vld [vmem:[%s4399 + $0x80] sm:$0xff]
        %v4417 = vld [vmem:[%s4399 + $0x88] sm:$0xff]
        %v4418 = vld [vmem:[%s4399 + $0x90] sm:$0xff]
        %v4419 = vld [vmem:[%s4399 + $0x98] sm:$0xff]
        %v4420 = vld [vmem:[%s4399 + $0xa0] sm:$0xff]
        %v4421 = vld [vmem:[%s4399 + $0xa8] sm:$0xff]
        %v4422 = vld [vmem:[%s4399 + $0xb0] sm:$0xff]
        %v4423 = vld [vmem:[%s4399 + $0xb8] sm:$0xff]
        %v4424 = vld [vmem:[%s4399 + $0xc0] sm:$0xff]
        %v4425 = vld [vmem:[%s4399 + $0xc8] sm:$0xff]
        %v4426 = vld [vmem:[%s4399 + $0xd0] sm:$0xff]
        %v4427 = vld [vmem:[%s4399 + $0xd8] sm:$0xff]
        %v4428 = vld [vmem:[%s4399 + $0xe0] sm:$0xff]
        %v4429 = vld [vmem:[%s4399 + $0xe8] sm:$0xff]
        %v4430 = vld [vmem:[%s4399 + $0xf0] sm:$0xff]
        %v4431 = vld [vmem:[%s4399 + $0xf8] sm:$0xff]
        %v4432 = vld [vmem:[%s4399 + $0x100] sm:$0xff]
        %v4433 = vld [vmem:[%s4399 + $0x108] sm:$0xff]
        %v4434 = vld [vmem:[%s4399 + $0x110] sm:$0xff]
        %v4435 = vld [vmem:[%s4399 + $0x118] sm:$0xff]
        %v4436 = vld [vmem:[%s4399 + $0x120] sm:$0xff]
        %v4437 = vld [vmem:[%s4399 + $0x128] sm:$0xff]
        %v4438 = vld [vmem:[%s4399 + $0x130] sm:$0xff]
        %v4439 = vld [vmem:[%s4399 + $0x138] sm:$0xff]
        %v4443 = vrot.slane %v3722, 1
        %v4444 = vrot.slane %v3723, 1
        %v4445 = vrot.slane %v3724, 1
        %v4488 = vunpack.c.l.b16 %v4400
        %v4489 = vunpack.c.h.b16 %v4400
        %v4490 = vunpack.c.l.b16 %v4401
        %v4491 = vunpack.c.h.b16 %v4401
        %v4492 = vunpack.c.l.b16 %v4402
        %v4493 = vunpack.c.h.b16 %v4402
        %v4494 = vunpack.c.l.b16 %v4403
        %v4495 = vunpack.c.h.b16 %v4403
        %v4496 = vunpack.c.l.b16 %v4404
        %v4497 = vunpack.c.h.b16 %v4404
        %v4498 = vunpack.c.l.b16 %v4405
        %v4499 = vunpack.c.h.b16 %v4405
        %v4500 = vunpack.c.l.b16 %v4406
        %v4501 = vunpack.c.h.b16 %v4406
        %v4502 = vunpack.c.l.b16 %v4407
        %v4503 = vunpack.c.h.b16 %v4407
        %v4504 = vunpack.c.l.b16 %v4408
        %v4505 = vunpack.c.h.b16 %v4408
        %v4506 = vunpack.c.l.b16 %v4409
        %v4507 = vunpack.c.h.b16 %v4409
        %v4508 = vunpack.c.l.b16 %v4410
        %v4509 = vunpack.c.h.b16 %v4410
        %v4510 = vunpack.c.l.b16 %v4411
        %v4511 = vunpack.c.h.b16 %v4411
        %v4512 = vunpack.c.l.b16 %v4412
        %v4513 = vunpack.c.h.b16 %v4412
        %v4514 = vunpack.c.l.b16 %v4413
        %v4515 = vunpack.c.h.b16 %v4413
        %v4516 = vunpack.c.l.b16 %v4414
        %v4517 = vunpack.c.h.b16 %v4414
        %v4518 = vunpack.c.l.b16 %v4415
        %v4519 = vunpack.c.h.b16 %v4415
        %v4520 = vunpack.c.l.b16 %v4416
        %v4521 = vunpack.c.h.b16 %v4416
        %v4522 = vunpack.c.l.b16 %v4417
        %v4523 = vunpack.c.h.b16 %v4417
        %v4524 = vunpack.c.l.b16 %v4418
        %v4525 = vunpack.c.h.b16 %v4418
        %v4526 = vunpack.c.l.b16 %v4419
        %v4527 = vunpack.c.h.b16 %v4419
        %v4528 = vunpack.c.l.b16 %v4420
        %v4529 = vunpack.c.h.b16 %v4420
        %v4530 = vunpack.c.l.b16 %v4421
        %v4531 = vunpack.c.h.b16 %v4421
        %v4532 = vunpack.c.l.b16 %v4422
        %v4533 = vunpack.c.h.b16 %v4422
        %v4534 = vunpack.c.l.b16 %v4423
        %v4535 = vunpack.c.h.b16 %v4423
        %v4536 = vunpack.c.l.b16 %v4424
        %v4537 = vunpack.c.h.b16 %v4424
        %v4538 = vunpack.c.l.b16 %v4425
        %v4539 = vunpack.c.h.b16 %v4425
        %v4540 = vunpack.c.l.b16 %v4426
        %v4541 = vunpack.c.h.b16 %v4426
        %v4542 = vunpack.c.l.b16 %v4427
        %v4543 = vunpack.c.h.b16 %v4427
        %v4544 = vunpack.c.l.b16 %v4428
        %v4545 = vunpack.c.h.b16 %v4428
        %v4546 = vunpack.c.l.b16 %v4429
        %v4547 = vunpack.c.h.b16 %v4429
        %v4548 = vunpack.c.l.b16 %v4430
        %v4549 = vunpack.c.h.b16 %v4430
        %v4550 = vunpack.c.l.b16 %v4431
        %v4551 = vunpack.c.h.b16 %v4431
        %v4552 = vunpack.c.l.b16 %v4432
        %v4553 = vunpack.c.h.b16 %v4432
        %v4554 = vunpack.c.l.b16 %v4433
        %v4555 = vunpack.c.h.b16 %v4433
        %v4556 = vunpack.c.l.b16 %v4434
        %v4557 = vunpack.c.h.b16 %v4434
        %v4558 = vunpack.c.l.b16 %v4435
        %v4559 = vunpack.c.h.b16 %v4435
        %v4560 = vunpack.c.l.b16 %v4436
        %v4561 = vunpack.c.h.b16 %v4436
        %v4562 = vunpack.c.l.b16 %v4437
        %v4563 = vunpack.c.h.b16 %v4437
        %v4564 = vunpack.c.l.b16 %v4438
        %v4565 = vunpack.c.h.b16 %v4438
        %v4566 = vunpack.c.l.b16 %v4439
        %v4567 = vunpack.c.h.b16 %v4439
        %v4568 = vpack.c.b16 %v4490, %v4488
        %v4569 = vpack.c.b16 %v4491, %v4489
        %v4570 = vpack.c.b16 %v4494, %v4492
        %v4571 = vpack.c.b16 %v4495, %v4493
        %v4572 = vpack.c.b16 %v4498, %v4496
        %v4573 = vpack.c.b16 %v4499, %v4497
        %v4574 = vpack.c.b16 %v4502, %v4500
        %v4575 = vpack.c.b16 %v4503, %v4501
        %v4576 = vpack.c.b16 %v4506, %v4504
        %v4577 = vpack.c.b16 %v4507, %v4505
        %v4578 = vpack.c.b16 %v4510, %v4508
        %v4579 = vpack.c.b16 %v4511, %v4509
        %v4580 = vpack.c.b16 %v4514, %v4512
        %v4581 = vpack.c.b16 %v4515, %v4513
        %v4582 = vpack.c.b16 %v4518, %v4516
        %v4583 = vpack.c.b16 %v4519, %v4517
        %v4584 = vpack.c.b16 %v4522, %v4520
        %v4585 = vpack.c.b16 %v4523, %v4521
        %v4586 = vpack.c.b16 %v4526, %v4524
        %v4587 = vpack.c.b16 %v4527, %v4525
        %v4588 = vpack.c.b16 %v4530, %v4528
        %v4589 = vpack.c.b16 %v4531, %v4529
        %v4590 = vpack.c.b16 %v4534, %v4532
        %v4591 = vpack.c.b16 %v4535, %v4533
        %v4592 = vpack.c.b16 %v4538, %v4536
        %v4593 = vpack.c.b16 %v4539, %v4537
        %v4594 = vpack.c.b16 %v4542, %v4540
        %v4595 = vpack.c.b16 %v4543, %v4541
        %v4596 = vpack.c.b16 %v4546, %v4544
        %v4597 = vpack.c.b16 %v4547, %v4545
        %v4598 = vpack.c.b16 %v4550, %v4548
        %v4599 = vpack.c.b16 %v4551, %v4549
        %v4600 = vpack.c.b16 %v4554, %v4552
        %v4601 = vpack.c.b16 %v4555, %v4553
        %v4602 = vpack.c.b16 %v4558, %v4556
        %v4603 = vpack.c.b16 %v4559, %v4557
        %v4604 = vpack.c.b16 %v4562, %v4560
        %v4605 = vpack.c.b16 %v4563, %v4561
        %v4606 = vpack.c.b16 %v4566, %v4564
        %v4607 = vpack.c.b16 %v4567, %v4565
        %v4649 = vsel %vm4029, %v4445, 0
        %4651 = vmatprep.subr.bf16.mxu0 %v4569
        %4652 = vmatpush1.bf16.msra.mxu0 %v4568
        %4653 = vmatprep.subr.bf16.mxu0 %v4571
        %4654 = vmatpush1.bf16.msra.mxu0 %v4570
        %4655 = vmatprep.subr.bf16.mxu0 %v4573
        %4656 = vmatpush1.bf16.msra.mxu0 %v4572
        %4657 = vmatprep.subr.bf16.mxu0 %v4575
        %4658 = vmatpush1.bf16.msra.mxu0 %v4574
        %4659 = vmatprep.subr.bf16.mxu0 %v4577
        %4660 = vmatpush1.bf16.msra.mxu0 %v4576
        %4661 = vmatprep.subr.bf16.mxu0 %v4579
        %4662 = vmatpush1.bf16.msra.mxu0 %v4578
        %4663 = vmatprep.subr.bf16.mxu0 %v4581
        %4664 = vmatpush1.bf16.msra.mxu0 %v4580
        %4665 = vmatprep.subr.bf16.mxu0 %v4583
        %4666 = vmatpush1.bf16.msra.mxu0 %v4582
        %4667 = vmatprep.subr.bf16.mxu0 %v4585
        %4668 = vmatpush1.bf16.msra.mxu0 %v4584
        %4669 = vmatprep.subr.bf16.mxu0 %v4587
        %4670 = vmatpush1.bf16.msra.mxu0 %v4586
        %4671 = vmatprep.subr.bf16.mxu0 %v4589
        %4672 = vmatpush1.bf16.msra.mxu0 %v4588
        %4673 = vmatprep.subr.bf16.mxu0 %v4591
        %4674 = vmatpush1.bf16.msra.mxu0 %v4590
        %4675 = vmatprep.subr.bf16.mxu0 %v4593
        %4676 = vmatpush1.bf16.msra.mxu0 %v4592
        %4677 = vmatprep.subr.bf16.mxu0 %v4595
        %4678 = vmatpush1.bf16.msra.mxu0 %v4594
        %4679 = vmatprep.subr.bf16.mxu0 %v4597
        %4680 = vmatpush1.bf16.msra.mxu0 %v4596
        %4681 = vmatprep.subr.bf16.mxu0 %v4599
        %4682 = vmatpush1.bf16.msra.mxu0 %v4598
        %4683 = vmatprep.mubr.bf16.mxu0 %v4444
        %4684 = vmatmul.mubr.bf16.gmra.mrb[0].mxu0 %v4443
        %v4685 = vpop.f32.mrb[0].mxu0
        %v4686 = vadd.f32 0.0, %v4685
        %v4687 = vpop.f32.mrb[0].mxu0
        %v4688 = vadd.f32 0.0, %v4687
        %v4689 = vpop.f32.mrb[0].mxu0
        %v4690 = vpop.f32.mrb[0].mxu0
        %4691 = vdwg.mxu0
        %4692 = vmatprep.subr.bf16.mxu0 %v4601
        %4693 = vmatpush1.bf16.msra.mxu0 %v4600
        %4694 = vmatprep.subr.bf16.mxu0 %v4603
        %4695 = vmatpush1.bf16.msra.mxu0 %v4602
        %4696 = vmatprep.subr.bf16.mxu0 %v4605
        %4697 = vmatpush1.bf16.msra.mxu0 %v4604
        %4698 = vmatprep.subr.bf16.mxu0 %v4607
        %4699 = vmatpush1.bf16.msra.mxu0 %v4606
        %4700 = vmatprep.subr.bf16.mxu0 0
        %4701 = vmatpush1.bf16.msra.mxu0 0
        %4702 = vmatprep.subr.bf16.mxu0 0
        %4703 = vmatpush1.bf16.msra.mxu0 0
        %4704 = vmatprep.subr.bf16.mxu0 0
        %4705 = vmatpush1.bf16.msra.mxu0 0
        %4706 = vmatprep.subr.bf16.mxu0 0
        %4707 = vmatpush1.bf16.msra.mxu0 0
        %4708 = vmatprep.subr.bf16.mxu0 0
        %4709 = vmatpush1.bf16.msra.mxu0 0
        %4710 = vmatprep.subr.bf16.mxu0 0
        %4711 = vmatpush1.bf16.msra.mxu0 0
        %4712 = vmatprep.subr.bf16.mxu0 0
        %4713 = vmatpush1.bf16.msra.mxu0 0
        %4714 = vmatprep.subr.bf16.mxu0 0
        %4715 = vmatpush1.bf16.msra.mxu0 0
        %4716 = vmatprep.subr.bf16.mxu0 0
        %4717 = vmatpush1.bf16.msra.mxu0 0
        %4718 = vmatprep.subr.bf16.mxu0 0
        %4719 = vmatpush1.bf16.msra.mxu0 0
        %4720 = vmatprep.subr.bf16.mxu0 0
        %4721 = vmatpush1.bf16.msra.mxu0 0
        %4722 = vmatprep.subr.bf16.mxu0 0
        %4723 = vmatpush1.bf16.msra.mxu0 0
        %4724 = vmatprep.mubr.bf16.mxu0 0
        %4725 = vmatmul.mubr.bf16.gmra.mrb[0].mxu0 %v4649
        %v4726 = vpop.f32.mrb[0].mxu0
        %v4727 = vadd.f32 %v4686, %v4726
        %v4728 = vpop.f32.mrb[0].mxu0
        %v4729 = vadd.f32 %v4688, %v4728
        %v4730 = vpop.f32.mrb[0].mxu0
        %v4731 = vpop.f32.mrb[0].mxu0
        %4732 = vdwg.mxu0
        %v4733 = vadd.f32 %v4393, %v4727
        %v4734 = vadd.f32 %v4395, %v4729
        %s4735 = scalar_lea.vmem [#allocation7], 960
        %v4736 = vld [vmem:[%s4735] sm:$0xff]
        %v4737 = vld [vmem:[%s4735 + $0x8] sm:$0xff]
        %v4738 = vld [vmem:[%s4735 + $0x10] sm:$0xff]
        %v4739 = vld [vmem:[%s4735 + $0x18] sm:$0xff]
        %v4740 = vld [vmem:[%s4735 + $0x20] sm:$0xff]
        %v4741 = vld [vmem:[%s4735 + $0x28] sm:$0xff]
        %v4742 = vld [vmem:[%s4735 + $0x30] sm:$0xff]
        %v4743 = vld [vmem:[%s4735 + $0x38] sm:$0xff]
        %v4744 = vld [vmem:[%s4735 + $0x40] sm:$0xff]
        %v4745 = vld [vmem:[%s4735 + $0x48] sm:$0xff]
        %v4746 = vld [vmem:[%s4735 + $0x50] sm:$0xff]
        %v4747 = vld [vmem:[%s4735 + $0x58] sm:$0xff]
        %v4748 = vld [vmem:[%s4735 + $0x60] sm:$0xff]
        %v4749 = vld [vmem:[%s4735 + $0x68] sm:$0xff]
        %v4750 = vld [vmem:[%s4735 + $0x70] sm:$0xff]
        %v4751 = vld [vmem:[%s4735 + $0x78] sm:$0xff]
        %v4752 = vld [vmem:[%s4735 + $0x80] sm:$0xff]
        %v4753 = vld [vmem:[%s4735 + $0x88] sm:$0xff]
        %v4754 = vld [vmem:[%s4735 + $0x90] sm:$0xff]
        %v4755 = vld [vmem:[%s4735 + $0x98] sm:$0xff]
        %v4756 = vld [vmem:[%s4735 + $0xa0] sm:$0xff]
        %v4757 = vld [vmem:[%s4735 + $0xa8] sm:$0xff]
        %v4758 = vld [vmem:[%s4735 + $0xb0] sm:$0xff]
        %v4759 = vld [vmem:[%s4735 + $0xb8] sm:$0xff]
        %v4760 = vld [vmem:[%s4735 + $0xc0] sm:$0xff]
        %v4761 = vld [vmem:[%s4735 + $0xc8] sm:$0xff]
        %v4762 = vld [vmem:[%s4735 + $0xd0] sm:$0xff]
        %v4763 = vld [vmem:[%s4735 + $0xd8] sm:$0xff]
        %v4764 = vld [vmem:[%s4735 + $0xe0] sm:$0xff]
        %v4765 = vld [vmem:[%s4735 + $0xe8] sm:$0xff]
        %v4766 = vld [vmem:[%s4735 + $0xf0] sm:$0xff]
        %v4767 = vld [vmem:[%s4735 + $0xf8] sm:$0xff]
        %v4768 = vld [vmem:[%s4735 + $0x100] sm:$0xff]
        %v4769 = vld [vmem:[%s4735 + $0x108] sm:$0xff]
        %v4770 = vld [vmem:[%s4735 + $0x110] sm:$0xff]
        %v4771 = vld [vmem:[%s4735 + $0x118] sm:$0xff]
        %v4772 = vld [vmem:[%s4735 + $0x120] sm:$0xff]
        %v4773 = vld [vmem:[%s4735 + $0x128] sm:$0xff]
        %v4774 = vld [vmem:[%s4735 + $0x130] sm:$0xff]
        %v4775 = vld [vmem:[%s4735 + $0x138] sm:$0xff]
        %v4776 = vrot.slane %v3807, 1
        %v4777 = vrot.slane %v3809, 2
        %v4778 = vor.u32 %v4776, %v4777
        %v4779 = vrot.slane %v3814, 1
        %v4780 = vrot.slane %v3816, 2
        %v4781 = vor.u32 %v4779, %v4780
        %v4782 = vrot.slane %v3821, 1
        %v4783 = vrot.slane %v3823, 2
        %v4784 = vor.u32 %v4782, %v4783
        %v4827 = vunpack.c.l.b16 %v4736
        %v4828 = vunpack.c.h.b16 %v4736
        %v4829 = vunpack.c.l.b16 %v4737
        %v4830 = vunpack.c.h.b16 %v4737
        %v4831 = vunpack.c.l.b16 %v4738
        %v4832 = vunpack.c.h.b16 %v4738
        %v4833 = vunpack.c.l.b16 %v4739
        %v4834 = vunpack.c.h.b16 %v4739
        %v4835 = vunpack.c.l.b16 %v4740
        %v4836 = vunpack.c.h.b16 %v4740
        %v4837 = vunpack.c.l.b16 %v4741
        %v4838 = vunpack.c.h.b16 %v4741
        %v4839 = vunpack.c.l.b16 %v4742
        %v4840 = vunpack.c.h.b16 %v4742
        %v4841 = vunpack.c.l.b16 %v4743
        %v4842 = vunpack.c.h.b16 %v4743
        %v4843 = vunpack.c.l.b16 %v4744
        %v4844 = vunpack.c.h.b16 %v4744
        %v4845 = vunpack.c.l.b16 %v4745
        %v4846 = vunpack.c.h.b16 %v4745
        %v4847 = vunpack.c.l.b16 %v4746
        %v4848 = vunpack.c.h.b16 %v4746
        %v4849 = vunpack.c.l.b16 %v4747
        %v4850 = vunpack.c.h.b16 %v4747
        %v4851 = vunpack.c.l.b16 %v4748
        %v4852 = vunpack.c.h.b16 %v4748
        %v4853 = vunpack.c.l.b16 %v4749
        %v4854 = vunpack.c.h.b16 %v4749
        %v4855 = vunpack.c.l.b16 %v4750
        %v4856 = vunpack.c.h.b16 %v4750
        %v4857 = vunpack.c.l.b16 %v4751
        %v4858 = vunpack.c.h.b16 %v4751
        %v4859 = vunpack.c.l.b16 %v4752
        %v4860 = vunpack.c.h.b16 %v4752
        %v4861 = vunpack.c.l.b16 %v4753
        %v4862 = vunpack.c.h.b16 %v4753
        %v4863 = vunpack.c.l.b16 %v4754
        %v4864 = vunpack.c.h.b16 %v4754
        %v4865 = vunpack.c.l.b16 %v4755
        %v4866 = vunpack.c.h.b16 %v4755
        %v4867 = vunpack.c.l.b16 %v4756
        %v4868 = vunpack.c.h.b16 %v4756
        %v4869 = vunpack.c.l.b16 %v4757
        %v4870 = vunpack.c.h.b16 %v4757
        %v4871 = vunpack.c.l.b16 %v4758
        %v4872 = vunpack.c.h.b16 %v4758
        %v4873 = vunpack.c.l.b16 %v4759
        %v4874 = vunpack.c.h.b16 %v4759
        %v4875 = vunpack.c.l.b16 %v4760
        %v4876 = vunpack.c.h.b16 %v4760
        %v4877 = vunpack.c.l.b16 %v4761
        %v4878 = vunpack.c.h.b16 %v4761
        %v4879 = vunpack.c.l.b16 %v4762
        %v4880 = vunpack.c.h.b16 %v4762
        %v4881 = vunpack.c.l.b16 %v4763
        %v4882 = vunpack.c.h.b16 %v4763
        %v4883 = vunpack.c.l.b16 %v4764
        %v4884 = vunpack.c.h.b16 %v4764
        %v4885 = vunpack.c.l.b16 %v4765
        %v4886 = vunpack.c.h.b16 %v4765
        %v4887 = vunpack.c.l.b16 %v4766
        %v4888 = vunpack.c.h.b16 %v4766
        %v4889 = vunpack.c.l.b16 %v4767
        %v4890 = vunpack.c.h.b16 %v4767
        %v4891 = vunpack.c.l.b16 %v4768
        %v4892 = vunpack.c.h.b16 %v4768
        %v4893 = vunpack.c.l.b16 %v4769
        %v4894 = vunpack.c.h.b16 %v4769
        %v4895 = vunpack.c.l.b16 %v4770
        %v4896 = vunpack.c.h.b16 %v4770
        %v4897 = vunpack.c.l.b16 %v4771
        %v4898 = vunpack.c.h.b16 %v4771
        %v4899 = vunpack.c.l.b16 %v4772
        %v4900 = vunpack.c.h.b16 %v4772
        %v4901 = vunpack.c.l.b16 %v4773
        %v4902 = vunpack.c.h.b16 %v4773
        %v4903 = vunpack.c.l.b16 %v4774
        %v4904 = vunpack.c.h.b16 %v4774
        %v4905 = vunpack.c.l.b16 %v4775
        %v4906 = vunpack.c.h.b16 %v4775
        %v4907 = vpack.c.b16 %v4829, %v4827
        %v4908 = vpack.c.b16 %v4830, %v4828
        %v4909 = vpack.c.b16 %v4833, %v4831
        %v4910 = vpack.c.b16 %v4834, %v4832
        %v4911 = vpack.c.b16 %v4837, %v4835
        %v4912 = vpack.c.b16 %v4838, %v4836
        %v4913 = vpack.c.b16 %v4841, %v4839
        %v4914 = vpack.c.b16 %v4842, %v4840
        %v4915 = vpack.c.b16 %v4845, %v4843
        %v4916 = vpack.c.b16 %v4846, %v4844
        %v4917 = vpack.c.b16 %v4849, %v4847
        %v4918 = vpack.c.b16 %v4850, %v4848
        %v4919 = vpack.c.b16 %v4853, %v4851
        %v4920 = vpack.c.b16 %v4854, %v4852
        %v4921 = vpack.c.b16 %v4857, %v4855
        %v4922 = vpack.c.b16 %v4858, %v4856
        %v4923 = vpack.c.b16 %v4861, %v4859
        %v4924 = vpack.c.b16 %v4862, %v4860
        %v4925 = vpack.c.b16 %v4865, %v4863
        %v4926 = vpack.c.b16 %v4866, %v4864
        %v4927 = vpack.c.b16 %v4869, %v4867
        %v4928 = vpack.c.b16 %v4870, %v4868
        %v4929 = vpack.c.b16 %v4873, %v4871
        %v4930 = vpack.c.b16 %v4874, %v4872
        %v4931 = vpack.c.b16 %v4877, %v4875
        %v4932 = vpack.c.b16 %v4878, %v4876
        %v4933 = vpack.c.b16 %v4881, %v4879
        %v4934 = vpack.c.b16 %v4882, %v4880
        %v4935 = vpack.c.b16 %v4885, %v4883
        %v4936 = vpack.c.b16 %v4886, %v4884
        %v4937 = vpack.c.b16 %v4889, %v4887
        %v4938 = vpack.c.b16 %v4890, %v4888
        %v4939 = vpack.c.b16 %v4893, %v4891
        %v4940 = vpack.c.b16 %v4894, %v4892
        %v4941 = vpack.c.b16 %v4897, %v4895
        %v4942 = vpack.c.b16 %v4898, %v4896
        %v4943 = vpack.c.b16 %v4901, %v4899
        %v4944 = vpack.c.b16 %v4902, %v4900
        %v4945 = vpack.c.b16 %v4905, %v4903
        %v4946 = vpack.c.b16 %v4906, %v4904
        %v4988 = vsel %vm4029, %v4784, 0
        %4990 = vmatprep.subr.bf16.mxu0 %v4908
        %4991 = vmatpush1.bf16.msra.mxu0 %v4907
        %4992 = vmatprep.subr.bf16.mxu0 %v4910
        %4993 = vmatpush1.bf16.msra.mxu0 %v4909
        %4994 = vmatprep.subr.bf16.mxu0 %v4912
        %4995 = vmatpush1.bf16.msra.mxu0 %v4911
        %4996 = vmatprep.subr.bf16.mxu0 %v4914
        %4997 = vmatpush1.bf16.msra.mxu0 %v4913
        %4998 = vmatprep.subr.bf16.mxu0 %v4916
        %4999 = vmatpush1.bf16.msra.mxu0 %v4915
        %5000 = vmatprep.subr.bf16.mxu0 %v4918
        %5001 = vmatpush1.bf16.msra.mxu0 %v4917
        %5002 = vmatprep.subr.bf16.mxu0 %v4920
        %5003 = vmatpush1.bf16.msra.mxu0 %v4919
        %5004 = vmatprep.subr.bf16.mxu0 %v4922
        %5005 = vmatpush1.bf16.msra.mxu0 %v4921
        %5006 = vmatprep.subr.bf16.mxu0 %v4924
        %5007 = vmatpush1.bf16.msra.mxu0 %v4923
        %5008 = vmatprep.subr.bf16.mxu0 %v4926
        %5009 = vmatpush1.bf16.msra.mxu0 %v4925
        %5010 = vmatprep.subr.bf16.mxu0 %v4928
        %5011 = vmatpush1.bf16.msra.mxu0 %v4927
        %5012 = vmatprep.subr.bf16.mxu0 %v4930
        %5013 = vmatpush1.bf16.msra.mxu0 %v4929
        %5014 = vmatprep.subr.bf16.mxu0 %v4932
        %5015 = vmatpush1.bf16.msra.mxu0 %v4931
        %5016 = vmatprep.subr.bf16.mxu0 %v4934
        %5017 = vmatpush1.bf16.msra.mxu0 %v4933
        %5018 = vmatprep.subr.bf16.mxu0 %v4936
        %5019 = vmatpush1.bf16.msra.mxu0 %v4935
        %5020 = vmatprep.subr.bf16.mxu0 %v4938
        %5021 = vmatpush1.bf16.msra.mxu0 %v4937
        %5022 = vmatprep.mubr.bf16.mxu0 %v4781
        %5023 = vmatmul.mubr.bf16.gmra.mrb[0].mxu0 %v4778
        %v5024 = vpop.f32.mrb[0].mxu0
        %v5025 = vadd.f32 0.0, %v5024
        %v5026 = vpop.f32.mrb[0].mxu0
        %v5027 = vadd.f32 0.0, %v5026
        %v5028 = vpop.f32.mrb[0].mxu0
        %v5029 = vpop.f32.mrb[0].mxu0
        %5030 = vdwg.mxu0
        %5031 = vmatprep.subr.bf16.mxu0 %v4940
        %5032 = vmatpush1.bf16.msra.mxu0 %v4939
        %5033 = vmatprep.subr.bf16.mxu0 %v4942
        %5034 = vmatpush1.bf16.msra.mxu0 %v4941
        %5035 = vmatprep.subr.bf16.mxu0 %v4944
        %5036 = vmatpush1.bf16.msra.mxu0 %v4943
        %5037 = vmatprep.subr.bf16.mxu0 %v4946
        %5038 = vmatpush1.bf16.msra.mxu0 %v4945
        %5039 = vmatprep.subr.bf16.mxu0 0
        %5040 = vmatpush1.bf16.msra.mxu0 0
        %5041 = vmatprep.subr.bf16.mxu0 0
        %5042 = vmatpush1.bf16.msra.mxu0 0
        %5043 = vmatprep.subr.bf16.mxu0 0
        %5044 = vmatpush1.bf16.msra.mxu0 0
        %5045 = vmatprep.subr.bf16.mxu0 0
        %5046 = vmatpush1.bf16.msra.mxu0 0
        %5047 = vmatprep.subr.bf16.mxu0 0
        %5048 = vmatpush1.bf16.msra.mxu0 0
        %5049 = vmatprep.subr.bf16.mxu0 0
        %5050 = vmatpush1.bf16.msra.mxu0 0
        %5051 = vmatprep.subr.bf16.mxu0 0
        %5052 = vmatpush1.bf16.msra.mxu0 0
        %5053 = vmatprep.subr.bf16.mxu0 0
        %5054 = vmatpush1.bf16.msra.mxu0 0
        %5055 = vmatprep.subr.bf16.mxu0 0
        %5056 = vmatpush1.bf16.msra.mxu0 0
        %5057 = vmatprep.subr.bf16.mxu0 0
        %5058 = vmatpush1.bf16.msra.mxu0 0
        %5059 = vmatprep.subr.bf16.mxu0 0
        %5060 = vmatpush1.bf16.msra.mxu0 0
        %5061 = vmatprep.subr.bf16.mxu0 0
        %5062 = vmatpush1.bf16.msra.mxu0 0
        %5063 = vmatprep.mubr.bf16.mxu0 0
        %5064 = vmatmul.mubr.bf16.gmra.mrb[0].mxu0 %v4988
        %v5065 = vpop.f32.mrb[0].mxu0
        %v5066 = vadd.f32 %v5025, %v5065
        %v5067 = vpop.f32.mrb[0].mxu0
        %v5068 = vadd.f32 %v5027, %v5067
        %v5069 = vpop.f32.mrb[0].mxu0
        %v5070 = vpop.f32.mrb[0].mxu0
        %5071 = vdwg.mxu0
        %v5072 = vadd.f32 %v4733, %v5066
        %v5073 = vadd.f32 %v4734, %v5068
        %v5076 = vrot.slane %v5072, 1
        %v5077 = vrot.slane %v5073, 1
        %v5080 = vrot.slane %v5072, 2
        %v5081 = vrot.slane %v5073, 2
        %v5084 = vrot.slane %v5072, 3
        %v5085 = vrot.slane %v5073, 3
        %v5088 = vsel %vm3662, %v5072, %v5076
        %v5089 = vsel %vm3662, %v5073, %v5077
        %v5090 = vsel %vm3666, %v5088, %v5080
        %v5091 = vsel %vm3666, %v5089, %v5081
        %v5092 = vsel %vm3670, %v5090, %v5084
        %v5093 = vsel %vm3670, %v5091, %v5085
        %v5094 = vld [vmem:[#allocation8] sm:$0x3]
        %v5096 = vlaneseq
        %v5097 = vshrl.u32 %v5096, 7
        %v5098 = vsub.s32 0, %v5097
        %v5099 = vrot.slane %v5094, %v5098
        %v5100 = vlaneseq
        %v5101 = vshrl.u32 %v5100, 7
        %v5102 = vsub.s32 1, %v5101
        %v5103 = vrot.slane %v5094, %v5102
        %v5106 = vadd.f32 %v5092, %v5099
        %v5107 = vadd.f32 %v5093, %v5103
        %v5108 = vmax.f32 %v5106, 0.0
        %v5109 = vmax.f32 %v5107, 0.0
        %v5110 = vpack.c.bf16 %v5108, %v5108
        %v5111 = vpack.c.bf16 %v5109, %v5109
        %v5112 = vld [vmem:[#allocation10] sm:$0xf]
        %v5113 = vld [vmem:[#allocation10 + $0x4] sm:$0xf]
        %v5114 = vld [vmem:[#allocation10 + $0x8] sm:$0xf]
        %v5115 = vld [vmem:[#allocation10 + $0xc] sm:$0xf]
        %v5116 = vld [vmem:[#allocation10 + $0x10] sm:$0xf]
        %v5117 = vld [vmem:[#allocation10 + $0x14] sm:$0xf]
        %v5118 = vld [vmem:[#allocation10 + $0x18] sm:$0xf]
        %v5119 = vld [vmem:[#allocation10 + $0x1c] sm:$0xf]
        %v5120 = vld [vmem:[#allocation10 + $0x20] sm:$0xf]
        %v5121 = vld [vmem:[#allocation10 + $0x24] sm:$0xf]
        %v5122 = vld [vmem:[#allocation10 + $0x28] sm:$0xf]
        %v5123 = vld [vmem:[#allocation10 + $0x2c] sm:$0xf]
        %v5124 = vld [vmem:[#allocation10 + $0x30] sm:$0xf]
        %v5125 = vld [vmem:[#allocation10 + $0x34] sm:$0xf]
        %v5126 = vld [vmem:[#allocation10 + $0x38] sm:$0xf]
        %v5127 = vld [vmem:[#allocation10 + $0x3c] sm:$0xf]
        %v5128 = vld [vmem:[#allocation10 + $0x40] sm:$0xf]
        %v5129 = vld [vmem:[#allocation10 + $0x44] sm:$0xf]
        %v5130 = vld [vmem:[#allocation10 + $0x48] sm:$0xf]
        %v5131 = vld [vmem:[#allocation10 + $0x4c] sm:$0xf]
        %v5132 = vld [vmem:[#allocation10 + $0x50] sm:$0xf]
        %v5133 = vld [vmem:[#allocation10 + $0x54] sm:$0xf]
        %v5134 = vld [vmem:[#allocation10 + $0x58] sm:$0xf]
        %v5135 = vld [vmem:[#allocation10 + $0x5c] sm:$0xf]
        %v5136 = vld [vmem:[#allocation10 + $0x60] sm:$0xf]
        %v5137 = vld [vmem:[#allocation10 + $0x64] sm:$0xf]
        %v5138 = vld [vmem:[#allocation10 + $0x68] sm:$0xf]
        %v5139 = vld [vmem:[#allocation10 + $0x6c] sm:$0xf]
        %v5140 = vld [vmem:[#allocation10 + $0x70] sm:$0xf]
        %v5141 = vld [vmem:[#allocation10 + $0x74] sm:$0xf]
        %v5142 = vld [vmem:[#allocation10 + $0x78] sm:$0xf]
        %v5143 = vld [vmem:[#allocation10 + $0x7c] sm:$0xf]
        %s5144 = scalar_lea.vmem [#allocation10], 128
        %v5145 = vld [vmem:[%s5144] sm:$0xf]
        %v5146 = vld [vmem:[%s5144 + $0x4] sm:$0xf]
        %v5147 = vld [vmem:[%s5144 + $0x8] sm:$0xf]
        %v5148 = vld [vmem:[%s5144 + $0xc] sm:$0xf]
        %v5149 = vld [vmem:[%s5144 + $0x10] sm:$0xf]
        %v5150 = vld [vmem:[%s5144 + $0x14] sm:$0xf]
        %v5151 = vld [vmem:[%s5144 + $0x18] sm:$0xf]
        %v5152 = vld [vmem:[%s5144 + $0x1c] sm:$0xf]
        %v5153 = vld [vmem:[%s5144 + $0x20] sm:$0xf]
        %v5154 = vld [vmem:[%s5144 + $0x24] sm:$0xf]
        %v5155 = vld [vmem:[%s5144 + $0x28] sm:$0xf]
        %v5156 = vld [vmem:[%s5144 + $0x2c] sm:$0xf]
        %v5157 = vld [vmem:[%s5144 + $0x30] sm:$0xf]
        %v5158 = vld [vmem:[%s5144 + $0x34] sm:$0xf]
        %v5159 = vld [vmem:[%s5144 + $0x38] sm:$0xf]
        %v5160 = vld [vmem:[%s5144 + $0x3c] sm:$0xf]
        %v5161 = vld [vmem:[%s5144 + $0x40] sm:$0xf]
        %v5162 = vld [vmem:[%s5144 + $0x44] sm:$0xf]
        %v5163 = vld [vmem:[%s5144 + $0x48] sm:$0xf]
        %v5164 = vld [vmem:[%s5144 + $0x4c] sm:$0xf]
        %v5165 = vld [vmem:[%s5144 + $0x50] sm:$0xf]
        %v5166 = vld [vmem:[%s5144 + $0x54] sm:$0xf]
        %v5167 = vld [vmem:[%s5144 + $0x58] sm:$0xf]
        %v5168 = vld [vmem:[%s5144 + $0x5c] sm:$0xf]
        %v5169 = vld [vmem:[%s5144 + $0x60] sm:$0xf]
        %v5170 = vld [vmem:[%s5144 + $0x64] sm:$0xf]
        %v5171 = vld [vmem:[%s5144 + $0x68] sm:$0xf]
        %v5172 = vld [vmem:[%s5144 + $0x6c] sm:$0xf]
        %v5173 = vld [vmem:[%s5144 + $0x70] sm:$0xf]
        %v5174 = vld [vmem:[%s5144 + $0x74] sm:$0xf]
        %v5175 = vld [vmem:[%s5144 + $0x78] sm:$0xf]
        %v5176 = vld [vmem:[%s5144 + $0x7c] sm:$0xf]
        %v5178 = vshrl.u32 %v5110, 16
        %v5180 = vshll.u32 %v5110, 16
        %v5182 = vrot.slane %v5180, 1
        %v5183 = vor.u32 %v5178, %v5182
        %v5185 = vshrl.u32 %v5111, 16
        %v5187 = vshll.u32 %v5111, 16
        %v5189 = vrot.slane %v5187, 1
        %v5190 = vor.u32 %v5185, %v5189
        %v5225 = vunpack.c.l.b16 %v5145
        %v5226 = vunpack.c.l.b16 %v5146
        %v5227 = vunpack.c.l.b16 %v5147
        %v5228 = vunpack.c.l.b16 %v5148
        %v5229 = vunpack.c.l.b16 %v5149
        %v5230 = vunpack.c.l.b16 %v5150
        %v5231 = vunpack.c.l.b16 %v5151
        %v5232 = vunpack.c.l.b16 %v5152
        %v5233 = vunpack.c.l.b16 %v5153
        %v5234 = vunpack.c.l.b16 %v5154
        %v5235 = vunpack.c.l.b16 %v5155
        %v5236 = vunpack.c.l.b16 %v5156
        %v5237 = vunpack.c.l.b16 %v5157
        %v5238 = vunpack.c.l.b16 %v5158
        %v5239 = vunpack.c.l.b16 %v5159
        %v5240 = vunpack.c.l.b16 %v5160
        %v5241 = vunpack.c.l.b16 %v5161
        %v5242 = vunpack.c.l.b16 %v5162
        %v5243 = vunpack.c.l.b16 %v5163
        %v5244 = vunpack.c.l.b16 %v5164
        %v5245 = vunpack.c.l.b16 %v5165
        %v5246 = vunpack.c.l.b16 %v5166
        %v5247 = vunpack.c.l.b16 %v5167
        %v5248 = vunpack.c.l.b16 %v5168
        %v5249 = vunpack.c.l.b16 %v5169
        %v5250 = vunpack.c.l.b16 %v5170
        %v5251 = vunpack.c.l.b16 %v5171
        %v5252 = vunpack.c.l.b16 %v5172
        %v5253 = vunpack.c.l.b16 %v5173
        %v5254 = vunpack.c.l.b16 %v5174
        %v5255 = vunpack.c.l.b16 %v5175
        %v5256 = vunpack.c.l.b16 %v5176
        %v5257 = vpack.c.b16 %v5226, %v5225
        %v5258 = vpack.c.b16 %v5228, %v5227
        %v5259 = vpack.c.b16 %v5230, %v5229
        %v5260 = vpack.c.b16 %v5232, %v5231
        %v5261 = vpack.c.b16 %v5234, %v5233
        %v5262 = vpack.c.b16 %v5236, %v5235
        %v5263 = vpack.c.b16 %v5238, %v5237
        %v5264 = vpack.c.b16 %v5240, %v5239
        %v5265 = vpack.c.b16 %v5242, %v5241
        %v5266 = vpack.c.b16 %v5244, %v5243
        %v5267 = vpack.c.b16 %v5246, %v5245
        %v5268 = vpack.c.b16 %v5248, %v5247
        %v5269 = vpack.c.b16 %v5250, %v5249
        %v5270 = vpack.c.b16 %v5252, %v5251
        %v5271 = vpack.c.b16 %v5254, %v5253
        %v5272 = vpack.c.b16 %v5256, %v5255
        %5289 = vmatprep.subr.bf16.mxu0 0
        %5290 = vmatpush1.bf16.msra.mxu0 %v5257
        %5291 = vmatprep.subr.bf16.mxu0 0
        %5292 = vmatpush1.bf16.msra.mxu0 %v5258
        %5293 = vmatprep.subr.bf16.mxu0 0
        %5294 = vmatpush1.bf16.msra.mxu0 %v5259
        %5295 = vmatprep.subr.bf16.mxu0 0
        %5296 = vmatpush1.bf16.msra.mxu0 %v5260
        %5297 = vmatprep.subr.bf16.mxu0 0
        %5298 = vmatpush1.bf16.msra.mxu0 %v5261
        %5299 = vmatprep.subr.bf16.mxu0 0
        %5300 = vmatpush1.bf16.msra.mxu0 %v5262
        %5301 = vmatprep.subr.bf16.mxu0 0
        %5302 = vmatpush1.bf16.msra.mxu0 %v5263
        %5303 = vmatprep.subr.bf16.mxu0 0
        %5304 = vmatpush1.bf16.msra.mxu0 %v5264
        %5305 = vmatprep.subr.bf16.mxu0 0
        %5306 = vmatpush1.bf16.msra.mxu0 %v5265
        %5307 = vmatprep.subr.bf16.mxu0 0
        %5308 = vmatpush1.bf16.msra.mxu0 %v5266
        %5309 = vmatprep.subr.bf16.mxu0 0
        %5310 = vmatpush1.bf16.msra.mxu0 %v5267
        %5311 = vmatprep.subr.bf16.mxu0 0
        %5312 = vmatpush1.bf16.msra.mxu0 %v5268
        %5313 = vmatprep.subr.bf16.mxu0 0
        %5314 = vmatpush1.bf16.msra.mxu0 %v5269
        %5315 = vmatprep.subr.bf16.mxu0 0
        %5316 = vmatpush1.bf16.msra.mxu0 %v5270
        %5317 = vmatprep.subr.bf16.mxu0 0
        %5318 = vmatpush1.bf16.msra.mxu0 %v5271
        %5319 = vmatprep.subr.bf16.mxu0 0
        %5320 = vmatpush1.bf16.msra.mxu0 %v5272
        %5321 = vmatprep.mubr.bf16.mxu0 %v5190
        %5322 = vmatmul.mubr.bf16.gmra.mrb[0].mxu0 %v5183
        %v5323 = vpop.f32.mrb[0].mxu0
        %v5324 = vadd.f32 0.0, %v5323
        %v5325 = vpop.f32.mrb[0].mxu0
        %v5326 = vpop.f32.mrb[0].mxu0
        %v5327 = vpop.f32.mrb[0].mxu0
        %5328 = vdwg.mxu0
        %v5361 = vunpack.c.l.b16 %v5112
        %v5362 = vunpack.c.l.b16 %v5113
        %v5363 = vunpack.c.l.b16 %v5114
        %v5364 = vunpack.c.l.b16 %v5115
        %v5365 = vunpack.c.l.b16 %v5116
        %v5366 = vunpack.c.l.b16 %v5117
        %v5367 = vunpack.c.l.b16 %v5118
        %v5368 = vunpack.c.l.b16 %v5119
        %v5369 = vunpack.c.l.b16 %v5120
        %v5370 = vunpack.c.l.b16 %v5121
        %v5371 = vunpack.c.l.b16 %v5122
        %v5372 = vunpack.c.l.b16 %v5123
        %v5373 = vunpack.c.l.b16 %v5124
        %v5374 = vunpack.c.l.b16 %v5125
        %v5375 = vunpack.c.l.b16 %v5126
        %v5376 = vunpack.c.l.b16 %v5127
        %v5377 = vunpack.c.l.b16 %v5128
        %v5378 = vunpack.c.l.b16 %v5129
        %v5379 = vunpack.c.l.b16 %v5130
        %v5380 = vunpack.c.l.b16 %v5131
        %v5381 = vunpack.c.l.b16 %v5132
        %v5382 = vunpack.c.l.b16 %v5133
        %v5383 = vunpack.c.l.b16 %v5134
        %v5384 = vunpack.c.l.b16 %v5135
        %v5385 = vunpack.c.l.b16 %v5136
        %v5386 = vunpack.c.l.b16 %v5137
        %v5387 = vunpack.c.l.b16 %v5138
        %v5388 = vunpack.c.l.b16 %v5139
        %v5389 = vunpack.c.l.b16 %v5140
        %v5390 = vunpack.c.l.b16 %v5141
        %v5391 = vunpack.c.l.b16 %v5142
        %v5392 = vunpack.c.l.b16 %v5143
        %v5393 = vpack.c.b16 %v5362, %v5361
        %v5394 = vpack.c.b16 %v5364, %v5363
        %v5395 = vpack.c.b16 %v5366, %v5365
        %v5396 = vpack.c.b16 %v5368, %v5367
        %v5397 = vpack.c.b16 %v5370, %v5369
        %v5398 = vpack.c.b16 %v5372, %v5371
        %v5399 = vpack.c.b16 %v5374, %v5373
        %v5400 = vpack.c.b16 %v5376, %v5375
        %v5401 = vpack.c.b16 %v5378, %v5377
        %v5402 = vpack.c.b16 %v5380, %v5379
        %v5403 = vpack.c.b16 %v5382, %v5381
        %v5404 = vpack.c.b16 %v5384, %v5383
        %v5405 = vpack.c.b16 %v5386, %v5385
        %v5406 = vpack.c.b16 %v5388, %v5387
        %v5407 = vpack.c.b16 %v5390, %v5389
        %v5408 = vpack.c.b16 %v5392, %v5391
        %5425 = vmatprep.subr.bf16.mxu0 0
        %5426 = vmatpush1.bf16.msra.mxu0 %v5393
        %5427 = vmatprep.subr.bf16.mxu0 0
        %5428 = vmatpush1.bf16.msra.mxu0 %v5394
        %5429 = vmatprep.subr.bf16.mxu0 0
        %5430 = vmatpush1.bf16.msra.mxu0 %v5395
        %5431 = vmatprep.subr.bf16.mxu0 0
        %5432 = vmatpush1.bf16.msra.mxu0 %v5396
        %5433 = vmatprep.subr.bf16.mxu0 0
        %5434 = vmatpush1.bf16.msra.mxu0 %v5397
        %5435 = vmatprep.subr.bf16.mxu0 0
        %5436 = vmatpush1.bf16.msra.mxu0 %v5398
        %5437 = vmatprep.subr.bf16.mxu0 0
        %5438 = vmatpush1.bf16.msra.mxu0 %v5399
        %5439 = vmatprep.subr.bf16.mxu0 0
        %5440 = vmatpush1.bf16.msra.mxu0 %v5400
        %5441 = vmatprep.subr.bf16.mxu0 0
        %5442 = vmatpush1.bf16.msra.mxu0 %v5401
        %5443 = vmatprep.subr.bf16.mxu0 0
        %5444 = vmatpush1.bf16.msra.mxu0 %v5402
        %5445 = vmatprep.subr.bf16.mxu0 0
        %5446 = vmatpush1.bf16.msra.mxu0 %v5403
        %5447 = vmatprep.subr.bf16.mxu0 0
        %5448 = vmatpush1.bf16.msra.mxu0 %v5404
        %5449 = vmatprep.subr.bf16.mxu0 0
        %5450 = vmatpush1.bf16.msra.mxu0 %v5405
        %5451 = vmatprep.subr.bf16.mxu0 0
        %5452 = vmatpush1.bf16.msra.mxu0 %v5406
        %5453 = vmatprep.subr.bf16.mxu0 0
        %5454 = vmatpush1.bf16.msra.mxu0 %v5407
        %5455 = vmatprep.subr.bf16.mxu0 0
        %5456 = vmatpush1.bf16.msra.mxu0 %v5408
        %5457 = vmatprep.mubr.bf16.mxu0 %v5111
        %5458 = vmatmul.mubr.bf16.gmra.mrb[0].mxu0 %v5110
        %v5459 = vpop.f32.mrb[0].mxu0
        %v5460 = vadd.f32 %v5324, %v5459
        %v5461 = vpop.f32.mrb[0].mxu0
        %v5462 = vpop.f32.mrb[0].mxu0
        %v5463 = vpop.f32.mrb[0].mxu0
        %5464 = vdwg.mxu0
        %s5465 = scalar_lea.vmem [#allocation10], 256
        %v5466 = vld [vmem:[%s5465] sm:$0xf]
        %v5467 = vld [vmem:[%s5465 + $0x4] sm:$0xf]
        %v5468 = vld [vmem:[%s5465 + $0x8] sm:$0xf]
        %v5469 = vld [vmem:[%s5465 + $0xc] sm:$0xf]
        %v5470 = vld [vmem:[%s5465 + $0x10] sm:$0xf]
        %v5471 = vld [vmem:[%s5465 + $0x14] sm:$0xf]
        %v5472 = vld [vmem:[%s5465 + $0x18] sm:$0xf]
        %v5473 = vld [vmem:[%s5465 + $0x1c] sm:$0xf]
        %v5474 = vld [vmem:[%s5465 + $0x20] sm:$0xf]
        %v5475 = vld [vmem:[%s5465 + $0x24] sm:$0xf]
        %v5476 = vld [vmem:[%s5465 + $0x28] sm:$0xf]
        %v5477 = vld [vmem:[%s5465 + $0x2c] sm:$0xf]
        %v5478 = vld [vmem:[%s5465 + $0x30] sm:$0xf]
        %v5479 = vld [vmem:[%s5465 + $0x34] sm:$0xf]
        %v5480 = vld [vmem:[%s5465 + $0x38] sm:$0xf]
        %v5481 = vld [vmem:[%s5465 + $0x3c] sm:$0xf]
        %v5482 = vld [vmem:[%s5465 + $0x40] sm:$0xf]
        %v5483 = vld [vmem:[%s5465 + $0x44] sm:$0xf]
        %v5484 = vld [vmem:[%s5465 + $0x48] sm:$0xf]
        %v5485 = vld [vmem:[%s5465 + $0x4c] sm:$0xf]
        %v5486 = vld [vmem:[%s5465 + $0x50] sm:$0xf]
        %v5487 = vld [vmem:[%s5465 + $0x54] sm:$0xf]
        %v5488 = vld [vmem:[%s5465 + $0x58] sm:$0xf]
        %v5489 = vld [vmem:[%s5465 + $0x5c] sm:$0xf]
        %v5490 = vld [vmem:[%s5465 + $0x60] sm:$0xf]
        %v5491 = vld [vmem:[%s5465 + $0x64] sm:$0xf]
        %v5492 = vld [vmem:[%s5465 + $0x68] sm:$0xf]
        %v5493 = vld [vmem:[%s5465 + $0x6c] sm:$0xf]
        %v5494 = vld [vmem:[%s5465 + $0x70] sm:$0xf]
        %v5495 = vld [vmem:[%s5465 + $0x74] sm:$0xf]
        %v5496 = vld [vmem:[%s5465 + $0x78] sm:$0xf]
        %v5497 = vld [vmem:[%s5465 + $0x7c] sm:$0xf]
        %v5500 = vrot.slane %v5110, 1
        %v5501 = vrot.slane %v5111, 1
        %v5536 = vunpack.c.l.b16 %v5466
        %v5537 = vunpack.c.l.b16 %v5467
        %v5538 = vunpack.c.l.b16 %v5468
        %v5539 = vunpack.c.l.b16 %v5469
        %v5540 = vunpack.c.l.b16 %v5470
        %v5541 = vunpack.c.l.b16 %v5471
        %v5542 = vunpack.c.l.b16 %v5472
        %v5543 = vunpack.c.l.b16 %v5473
        %v5544 = vunpack.c.l.b16 %v5474
        %v5545 = vunpack.c.l.b16 %v5475
        %v5546 = vunpack.c.l.b16 %v5476
        %v5547 = vunpack.c.l.b16 %v5477
        %v5548 = vunpack.c.l.b16 %v5478
        %v5549 = vunpack.c.l.b16 %v5479
        %v5550 = vunpack.c.l.b16 %v5480
        %v5551 = vunpack.c.l.b16 %v5481
        %v5552 = vunpack.c.l.b16 %v5482
        %v5553 = vunpack.c.l.b16 %v5483
        %v5554 = vunpack.c.l.b16 %v5484
        %v5555 = vunpack.c.l.b16 %v5485
        %v5556 = vunpack.c.l.b16 %v5486
        %v5557 = vunpack.c.l.b16 %v5487
        %v5558 = vunpack.c.l.b16 %v5488
        %v5559 = vunpack.c.l.b16 %v5489
        %v5560 = vunpack.c.l.b16 %v5490
        %v5561 = vunpack.c.l.b16 %v5491
        %v5562 = vunpack.c.l.b16 %v5492
        %v5563 = vunpack.c.l.b16 %v5493
        %v5564 = vunpack.c.l.b16 %v5494
        %v5565 = vunpack.c.l.b16 %v5495
        %v5566 = vunpack.c.l.b16 %v5496
        %v5567 = vunpack.c.l.b16 %v5497
        %v5568 = vpack.c.b16 %v5537, %v5536
        %v5569 = vpack.c.b16 %v5539, %v5538
        %v5570 = vpack.c.b16 %v5541, %v5540
        %v5571 = vpack.c.b16 %v5543, %v5542
        %v5572 = vpack.c.b16 %v5545, %v5544
        %v5573 = vpack.c.b16 %v5547, %v5546
        %v5574 = vpack.c.b16 %v5549, %v5548
        %v5575 = vpack.c.b16 %v5551, %v5550
        %v5576 = vpack.c.b16 %v5553, %v5552
        %v5577 = vpack.c.b16 %v5555, %v5554
        %v5578 = vpack.c.b16 %v5557, %v5556
        %v5579 = vpack.c.b16 %v5559, %v5558
        %v5580 = vpack.c.b16 %v5561, %v5560
        %v5581 = vpack.c.b16 %v5563, %v5562
        %v5582 = vpack.c.b16 %v5565, %v5564
        %v5583 = vpack.c.b16 %v5567, %v5566
        %5600 = vmatprep.subr.bf16.mxu0 0
        %5601 = vmatpush1.bf16.msra.mxu0 %v5568
        %5602 = vmatprep.subr.bf16.mxu0 0
        %5603 = vmatpush1.bf16.msra.mxu0 %v5569
        %5604 = vmatprep.subr.bf16.mxu0 0
        %5605 = vmatpush1.bf16.msra.mxu0 %v5570
        %5606 = vmatprep.subr.bf16.mxu0 0
        %5607 = vmatpush1.bf16.msra.mxu0 %v5571
        %5608 = vmatprep.subr.bf16.mxu0 0
        %5609 = vmatpush1.bf16.msra.mxu0 %v5572
        %5610 = vmatprep.subr.bf16.mxu0 0
        %5611 = vmatpush1.bf16.msra.mxu0 %v5573
        %5612 = vmatprep.subr.bf16.mxu0 0
        %5613 = vmatpush1.bf16.msra.mxu0 %v5574
        %5614 = vmatprep.subr.bf16.mxu0 0
        %5615 = vmatpush1.bf16.msra.mxu0 %v5575
        %5616 = vmatprep.subr.bf16.mxu0 0
        %5617 = vmatpush1.bf16.msra.mxu0 %v5576
        %5618 = vmatprep.subr.bf16.mxu0 0
        %5619 = vmatpush1.bf16.msra.mxu0 %v5577
        %5620 = vmatprep.subr.bf16.mxu0 0
        %5621 = vmatpush1.bf16.msra.mxu0 %v5578
        %5622 = vmatprep.subr.bf16.mxu0 0
        %5623 = vmatpush1.bf16.msra.mxu0 %v5579
        %5624 = vmatprep.subr.bf16.mxu0 0
        %5625 = vmatpush1.bf16.msra.mxu0 %v5580
        %5626 = vmatprep.subr.bf16.mxu0 0
        %5627 = vmatpush1.bf16.msra.mxu0 %v5581
        %5628 = vmatprep.subr.bf16.mxu0 0
        %5629 = vmatpush1.bf16.msra.mxu0 %v5582
        %5630 = vmatprep.subr.bf16.mxu0 0
        %5631 = vmatpush1.bf16.msra.mxu0 %v5583
        %5632 = vmatprep.mubr.bf16.mxu0 %v5501
        %5633 = vmatmul.mubr.bf16.gmra.mrb[0].mxu0 %v5500
        %v5634 = vpop.f32.mrb[0].mxu0
        %v5635 = vadd.f32 0.0, %v5634
        %v5636 = vpop.f32.mrb[0].mxu0
        %v5637 = vpop.f32.mrb[0].mxu0
        %v5638 = vpop.f32.mrb[0].mxu0
        %5639 = vdwg.mxu0
        %v5640 = vadd.f32 %v5460, %v5635
        %v5641 = vld [vmem:[#allocation11] sm:$0x1]
        %v5643 = vlaneseq
        %v5644 = vshrl.u32 %v5643, 7
        %v5645 = vsub.s32 0, %v5644
        %v5646 = vrot.slane %v5641, %v5645
        %v5648 = vadd.f32 %v5640, %v5646
        %v5649 = vmax.f32 %v5648, 0.0
        %v5650 = vpack.c.bf16 %v5649, %v5649
        %v5651 = vld [vmem:[#allocation13] sm:$0xff]
        %v5652 = vld [vmem:[#allocation13 + $0x8] sm:$0xff]
        %v5653 = vld [vmem:[#allocation13 + $0x10] sm:$0xff]
        %v5654 = vld [vmem:[#allocation13 + $0x18] sm:$0xff]
        %v5655 = vld [vmem:[#allocation13 + $0x20] sm:$0xff]
        %v5656 = vld [vmem:[#allocation13 + $0x28] sm:$0xff]
        %v5657 = vld [vmem:[#allocation13 + $0x30] sm:$0xff]
        %v5658 = vld [vmem:[#allocation13 + $0x38] sm:$0xff]
        %v5659 = vld [vmem:[#allocation13 + $0x40] sm:$0xff]
        %v5660 = vld [vmem:[#allocation13 + $0x48] sm:$0xff]
        %v5661 = vld [vmem:[#allocation13 + $0x50] sm:$0xff]
        %v5662 = vld [vmem:[#allocation13 + $0x58] sm:$0xff]
        %v5663 = vld [vmem:[#allocation13 + $0x60] sm:$0xff]
        %v5664 = vld [vmem:[#allocation13 + $0x68] sm:$0xff]
        %v5665 = vld [vmem:[#allocation13 + $0x70] sm:$0xff]
        %v5666 = vld [vmem:[#allocation13 + $0x78] sm:$0xff]
        %v5667 = vld [vmem:[#allocation13 + $0x80] sm:$0xff]
        %v5668 = vld [vmem:[#allocation13 + $0x88] sm:$0xff]
        %v5669 = vld [vmem:[#allocation13 + $0x90] sm:$0xff]
        %v5670 = vld [vmem:[#allocation13 + $0x98] sm:$0xff]
        %v5671 = vld [vmem:[#allocation13 + $0xa0] sm:$0xff]
        %v5672 = vld [vmem:[#allocation13 + $0xa8] sm:$0xff]
        %v5673 = vld [vmem:[#allocation13 + $0xb0] sm:$0xff]
        %v5674 = vld [vmem:[#allocation13 + $0xb8] sm:$0xff]
        %v5675 = vld [vmem:[#allocation13 + $0xc0] sm:$0xff]
        %v5676 = vld [vmem:[#allocation13 + $0xc8] sm:$0xff]
        %v5677 = vld [vmem:[#allocation13 + $0xd0] sm:$0xff]
        %v5678 = vld [vmem:[#allocation13 + $0xd8] sm:$0xff]
        %v5679 = vld [vmem:[#allocation13 + $0xe0] sm:$0xff]
        %v5680 = vld [vmem:[#allocation13 + $0xe8] sm:$0xff]
        %v5681 = vld [vmem:[#allocation13 + $0xf0] sm:$0xff]
        %v5682 = vld [vmem:[#allocation13 + $0xf8] sm:$0xff]
        %s5683 = scalar_lea.vmem [#allocation13], 256
        %v5684 = vld [vmem:[%s5683] sm:$0xff]
        %v5685 = vld [vmem:[%s5683 + $0x8] sm:$0xff]
        %v5686 = vld [vmem:[%s5683 + $0x10] sm:$0xff]
        %v5687 = vld [vmem:[%s5683 + $0x18] sm:$0xff]
        %v5688 = vld [vmem:[%s5683 + $0x20] sm:$0xff]
        %v5689 = vld [vmem:[%s5683 + $0x28] sm:$0xff]
        %v5690 = vld [vmem:[%s5683 + $0x30] sm:$0xff]
        %v5691 = vld [vmem:[%s5683 + $0x38] sm:$0xff]
        %v5692 = vld [vmem:[%s5683 + $0x40] sm:$0xff]
        %v5693 = vld [vmem:[%s5683 + $0x48] sm:$0xff]
        %v5694 = vld [vmem:[%s5683 + $0x50] sm:$0xff]
        %v5695 = vld [vmem:[%s5683 + $0x58] sm:$0xff]
        %v5696 = vld [vmem:[%s5683 + $0x60] sm:$0xff]
        %v5697 = vld [vmem:[%s5683 + $0x68] sm:$0xff]
        %v5698 = vld [vmem:[%s5683 + $0x70] sm:$0xff]
        %v5699 = vld [vmem:[%s5683 + $0x78] sm:$0xff]
        %v5700 = vld [vmem:[%s5683 + $0x80] sm:$0xff]
        %v5701 = vld [vmem:[%s5683 + $0x88] sm:$0xff]
        %v5702 = vld [vmem:[%s5683 + $0x90] sm:$0xff]
        %v5703 = vld [vmem:[%s5683 + $0x98] sm:$0xff]
        %v5704 = vld [vmem:[%s5683 + $0xa0] sm:$0xff]
        %v5705 = vld [vmem:[%s5683 + $0xa8] sm:$0xff]
        %v5706 = vld [vmem:[%s5683 + $0xb0] sm:$0xff]
        %v5707 = vld [vmem:[%s5683 + $0xb8] sm:$0xff]
        %v5708 = vld [vmem:[%s5683 + $0xc0] sm:$0xff]
        %v5709 = vld [vmem:[%s5683 + $0xc8] sm:$0xff]
        %v5710 = vld [vmem:[%s5683 + $0xd0] sm:$0xff]
        %v5711 = vld [vmem:[%s5683 + $0xd8] sm:$0xff]
        %v5712 = vld [vmem:[%s5683 + $0xe0] sm:$0xff]
        %v5713 = vld [vmem:[%s5683 + $0xe8] sm:$0xff]
        %v5714 = vld [vmem:[%s5683 + $0xf0] sm:$0xff]
        %v5715 = vld [vmem:[%s5683 + $0xf8] sm:$0xff]
        %v5717 = vshrl.u32 %v5650, 16
        %v5752 = vunpack.c.l.b16 %v5684
        %v5753 = vunpack.c.h.b16 %v5684
        %v5754 = vunpack.c.l.b16 %v5685
        %v5755 = vunpack.c.h.b16 %v5685
        %v5756 = vunpack.c.l.b16 %v5686
        %v5757 = vunpack.c.h.b16 %v5686
        %v5758 = vunpack.c.l.b16 %v5687
        %v5759 = vunpack.c.h.b16 %v5687
        %v5760 = vunpack.c.l.b16 %v5688
        %v5761 = vunpack.c.h.b16 %v5688
        %v5762 = vunpack.c.l.b16 %v5689
        %v5763 = vunpack.c.h.b16 %v5689
        %v5764 = vunpack.c.l.b16 %v5690
        %v5765 = vunpack.c.h.b16 %v5690
        %v5766 = vunpack.c.l.b16 %v5691
        %v5767 = vunpack.c.h.b16 %v5691
        %v5768 = vunpack.c.l.b16 %v5692
        %v5769 = vunpack.c.h.b16 %v5692
        %v5770 = vunpack.c.l.b16 %v5693
        %v5771 = vunpack.c.h.b16 %v5693
        %v5772 = vunpack.c.l.b16 %v5694
        %v5773 = vunpack.c.h.b16 %v5694
        %v5774 = vunpack.c.l.b16 %v5695
        %v5775 = vunpack.c.h.b16 %v5695
        %v5776 = vunpack.c.l.b16 %v5696
        %v5777 = vunpack.c.h.b16 %v5696
        %v5778 = vunpack.c.l.b16 %v5697
        %v5779 = vunpack.c.h.b16 %v5697
        %v5780 = vunpack.c.l.b16 %v5698
        %v5781 = vunpack.c.h.b16 %v5698
        %v5782 = vunpack.c.l.b16 %v5699
        %v5783 = vunpack.c.h.b16 %v5699
        %v5784 = vunpack.c.l.b16 %v5700
        %v5785 = vunpack.c.h.b16 %v5700
        %v5786 = vunpack.c.l.b16 %v5701
        %v5787 = vunpack.c.h.b16 %v5701
        %v5788 = vunpack.c.l.b16 %v5702
        %v5789 = vunpack.c.h.b16 %v5702
        %v5790 = vunpack.c.l.b16 %v5703
        %v5791 = vunpack.c.h.b16 %v5703
        %v5792 = vunpack.c.l.b16 %v5704
        %v5793 = vunpack.c.h.b16 %v5704
        %v5794 = vunpack.c.l.b16 %v5705
        %v5795 = vunpack.c.h.b16 %v5705
        %v5796 = vunpack.c.l.b16 %v5706
        %v5797 = vunpack.c.h.b16 %v5706
        %v5798 = vunpack.c.l.b16 %v5707
        %v5799 = vunpack.c.h.b16 %v5707
        %v5800 = vunpack.c.l.b16 %v5708
        %v5801 = vunpack.c.h.b16 %v5708
        %v5802 = vunpack.c.l.b16 %v5709
        %v5803 = vunpack.c.h.b16 %v5709
        %v5804 = vunpack.c.l.b16 %v5710
        %v5805 = vunpack.c.h.b16 %v5710
        %v5806 = vunpack.c.l.b16 %v5711
        %v5807 = vunpack.c.h.b16 %v5711
        %v5808 = vunpack.c.l.b16 %v5712
        %v5809 = vunpack.c.h.b16 %v5712
        %v5810 = vunpack.c.l.b16 %v5713
        %v5811 = vunpack.c.h.b16 %v5713
        %v5812 = vunpack.c.l.b16 %v5714
        %v5813 = vunpack.c.h.b16 %v5714
        %v5814 = vunpack.c.l.b16 %v5715
        %v5815 = vunpack.c.h.b16 %v5715
        %v5816 = vpack.c.b16 %v5756, %v5752
        %v5817 = vpack.c.b16 %v5757, %v5753
        %v5818 = vpack.c.b16 %v5758, %v5754
        %v5819 = vpack.c.b16 %v5759, %v5755
        %v5820 = vpack.c.b16 %v5764, %v5760
        %v5821 = vpack.c.b16 %v5765, %v5761
        %v5822 = vpack.c.b16 %v5766, %v5762
        %v5823 = vpack.c.b16 %v5767, %v5763
        %v5824 = vpack.c.b16 %v5772, %v5768
        %v5825 = vpack.c.b16 %v5773, %v5769
        %v5826 = vpack.c.b16 %v5774, %v5770
        %v5827 = vpack.c.b16 %v5775, %v5771
        %v5828 = vpack.c.b16 %v5780, %v5776
        %v5829 = vpack.c.b16 %v5781, %v5777
        %v5830 = vpack.c.b16 %v5782, %v5778
        %v5831 = vpack.c.b16 %v5783, %v5779
        %v5832 = vpack.c.b16 %v5788, %v5784
        %v5833 = vpack.c.b16 %v5789, %v5785
        %v5834 = vpack.c.b16 %v5790, %v5786
        %v5835 = vpack.c.b16 %v5791, %v5787
        %v5836 = vpack.c.b16 %v5796, %v5792
        %v5837 = vpack.c.b16 %v5797, %v5793
        %v5838 = vpack.c.b16 %v5798, %v5794
        %v5839 = vpack.c.b16 %v5799, %v5795
        %v5840 = vpack.c.b16 %v5804, %v5800
        %v5841 = vpack.c.b16 %v5805, %v5801
        %v5842 = vpack.c.b16 %v5806, %v5802
        %v5843 = vpack.c.b16 %v5807, %v5803
        %v5844 = vpack.c.b16 %v5812, %v5808
        %v5845 = vpack.c.b16 %v5813, %v5809
        %v5846 = vpack.c.b16 %v5814, %v5810
        %v5847 = vpack.c.b16 %v5815, %v5811
        %5880 = vmatprep.subr.bf16.mxu0 %v5817
        %5881 = vmatpush1.bf16.msra.mxu0 %v5816
        %5882 = vmatprep.subr.bf16.mxu0 %v5821
        %5883 = vmatpush1.bf16.msra.mxu0 %v5820
        %5884 = vmatprep.subr.bf16.mxu0 %v5825
        %5885 = vmatpush1.bf16.msra.mxu0 %v5824
        %5886 = vmatprep.subr.bf16.mxu0 %v5829
        %5887 = vmatpush1.bf16.msra.mxu0 %v5828
        %5888 = vmatprep.subr.bf16.mxu0 %v5833
        %5889 = vmatpush1.bf16.msra.mxu0 %v5832
        %5890 = vmatprep.subr.bf16.mxu0 %v5837
        %5891 = vmatpush1.bf16.msra.mxu0 %v5836
        %5892 = vmatprep.subr.bf16.mxu0 %v5841
        %5893 = vmatpush1.bf16.msra.mxu0 %v5840
        %5894 = vmatprep.subr.bf16.mxu0 %v5845
        %5895 = vmatpush1.bf16.msra.mxu0 %v5844
        %5896 = vmatprep.subr.bf16.mxu0 0
        %5897 = vmatpush1.bf16.msra.mxu0 0
        %5898 = vmatprep.subr.bf16.mxu0 0
        %5899 = vmatpush1.bf16.msra.mxu0 0
        %5900 = vmatprep.subr.bf16.mxu0 0
        %5901 = vmatpush1.bf16.msra.mxu0 0
        %5902 = vmatprep.subr.bf16.mxu0 0
        %5903 = vmatpush1.bf16.msra.mxu0 0
        %5904 = vmatprep.subr.bf16.mxu0 0
        %5905 = vmatpush1.bf16.msra.mxu0 0
        %5906 = vmatprep.subr.bf16.mxu0 0
        %5907 = vmatpush1.bf16.msra.mxu0 0
        %5908 = vmatprep.subr.bf16.mxu0 0
        %5909 = vmatpush1.bf16.msra.mxu0 0
        %5910 = vmatprep.subr.bf16.mxu0 0
        %5911 = vmatpush1.bf16.msra.mxu0 0
        %5912 = vmatprep.mubr.bf16.mxu0 0
        %5913 = vmatmul.mubr.bf16.gmra.mrb[0].mxu0 %v5717
        %v5914 = vpop.f32.mrb[0].mxu0
        %v5915 = vadd.f32 0.0, %v5914
        %v5916 = vpop.f32.mrb[0].mxu0
        %v5917 = vadd.f32 0.0, %v5916
        %v5918 = vpop.f32.mrb[0].mxu0
        %v5919 = vpop.f32.mrb[0].mxu0
        %5920 = vdwg.mxu0
        %5921 = vmatprep.subr.bf16.mxu0 %v5819
        %5922 = vmatpush1.bf16.msra.mxu0 %v5818
        %5923 = vmatprep.subr.bf16.mxu0 %v5823
        %5924 = vmatpush1.bf16.msra.mxu0 %v5822
        %5925 = vmatprep.subr.bf16.mxu0 %v5827
        %5926 = vmatpush1.bf16.msra.mxu0 %v5826
        %5927 = vmatprep.subr.bf16.mxu0 %v5831
        %5928 = vmatpush1.bf16.msra.mxu0 %v5830
        %5929 = vmatprep.subr.bf16.mxu0 %v5835
        %5930 = vmatpush1.bf16.msra.mxu0 %v5834
        %5931 = vmatprep.subr.bf16.mxu0 %v5839
        %5932 = vmatpush1.bf16.msra.mxu0 %v5838
        %5933 = vmatprep.subr.bf16.mxu0 %v5843
        %5934 = vmatpush1.bf16.msra.mxu0 %v5842
        %5935 = vmatprep.subr.bf16.mxu0 %v5847
        %5936 = vmatpush1.bf16.msra.mxu0 %v5846
        %5937 = vmatprep.subr.bf16.mxu0 0
        %5938 = vmatpush1.bf16.msra.mxu0 0
        %5939 = vmatprep.subr.bf16.mxu0 0
        %5940 = vmatpush1.bf16.msra.mxu0 0
        %5941 = vmatprep.subr.bf16.mxu0 0
        %5942 = vmatpush1.bf16.msra.mxu0 0
        %5943 = vmatprep.subr.bf16.mxu0 0
        %5944 = vmatpush1.bf16.msra.mxu0 0
        %5945 = vmatprep.subr.bf16.mxu0 0
        %5946 = vmatpush1.bf16.msra.mxu0 0
        %5947 = vmatprep.subr.bf16.mxu0 0
        %5948 = vmatpush1.bf16.msra.mxu0 0
        %5949 = vmatprep.subr.bf16.mxu0 0
        %5950 = vmatpush1.bf16.msra.mxu0 0
        %5951 = vmatprep.subr.bf16.mxu0 0
        %5952 = vmatpush1.bf16.msra.mxu0 0
        %5953 = vmatprep.mubr.bf16.mxu0 0
        %5954 = vmatmul.mubr.bf16.gmra.mrb[0].mxu0 %v5717
        %v5955 = vpop.f32.mrb[0].mxu0
        %v5956 = vadd.f32 0.0, %v5955
        %v5957 = vpop.f32.mrb[0].mxu0
        %v5958 = vadd.f32 0.0, %v5957
        %v5959 = vpop.f32.mrb[0].mxu0
        %v5960 = vpop.f32.mrb[0].mxu0
        %5961 = vdwg.mxu0
        %v5994 = vunpack.c.l.b16 %v5651
        %v5995 = vunpack.c.h.b16 %v5651
        %v5996 = vunpack.c.l.b16 %v5652
        %v5997 = vunpack.c.h.b16 %v5652
        %v5998 = vunpack.c.l.b16 %v5653
        %v5999 = vunpack.c.h.b16 %v5653
        %v6000 = vunpack.c.l.b16 %v5654
        %v6001 = vunpack.c.h.b16 %v5654
        %v6002 = vunpack.c.l.b16 %v5655
        %v6003 = vunpack.c.h.b16 %v5655
        %v6004 = vunpack.c.l.b16 %v5656
        %v6005 = vunpack.c.h.b16 %v5656
        %v6006 = vunpack.c.l.b16 %v5657
        %v6007 = vunpack.c.h.b16 %v5657
        %v6008 = vunpack.c.l.b16 %v5658
        %v6009 = vunpack.c.h.b16 %v5658
        %v6010 = vunpack.c.l.b16 %v5659
        %v6011 = vunpack.c.h.b16 %v5659
        %v6012 = vunpack.c.l.b16 %v5660
        %v6013 = vunpack.c.h.b16 %v5660
        %v6014 = vunpack.c.l.b16 %v5661
        %v6015 = vunpack.c.h.b16 %v5661
        %v6016 = vunpack.c.l.b16 %v5662
        %v6017 = vunpack.c.h.b16 %v5662
        %v6018 = vunpack.c.l.b16 %v5663
        %v6019 = vunpack.c.h.b16 %v5663
        %v6020 = vunpack.c.l.b16 %v5664
        %v6021 = vunpack.c.h.b16 %v5664
        %v6022 = vunpack.c.l.b16 %v5665
        %v6023 = vunpack.c.h.b16 %v5665
        %v6024 = vunpack.c.l.b16 %v5666
        %v6025 = vunpack.c.h.b16 %v5666
        %v6026 = vunpack.c.l.b16 %v5667
        %v6027 = vunpack.c.h.b16 %v5667
        %v6028 = vunpack.c.l.b16 %v5668
        %v6029 = vunpack.c.h.b16 %v5668
        %v6030 = vunpack.c.l.b16 %v5669
        %v6031 = vunpack.c.h.b16 %v5669
        %v6032 = vunpack.c.l.b16 %v5670
        %v6033 = vunpack.c.h.b16 %v5670
        %v6034 = vunpack.c.l.b16 %v5671
        %v6035 = vunpack.c.h.b16 %v5671
        %v6036 = vunpack.c.l.b16 %v5672
        %v6037 = vunpack.c.h.b16 %v5672
        %v6038 = vunpack.c.l.b16 %v5673
        %v6039 = vunpack.c.h.b16 %v5673
        %v6040 = vunpack.c.l.b16 %v5674
        %v6041 = vunpack.c.h.b16 %v5674
        %v6042 = vunpack.c.l.b16 %v5675
        %v6043 = vunpack.c.h.b16 %v5675
        %v6044 = vunpack.c.l.b16 %v5676
        %v6045 = vunpack.c.h.b16 %v5676
        %v6046 = vunpack.c.l.b16 %v5677
        %v6047 = vunpack.c.h.b16 %v5677
        %v6048 = vunpack.c.l.b16 %v5678
        %v6049 = vunpack.c.h.b16 %v5678
        %v6050 = vunpack.c.l.b16 %v5679
        %v6051 = vunpack.c.h.b16 %v5679
        %v6052 = vunpack.c.l.b16 %v5680
        %v6053 = vunpack.c.h.b16 %v5680
        %v6054 = vunpack.c.l.b16 %v5681
        %v6055 = vunpack.c.h.b16 %v5681
        %v6056 = vunpack.c.l.b16 %v5682
        %v6057 = vunpack.c.h.b16 %v5682
        %v6058 = vpack.c.b16 %v5998, %v5994
        %v6059 = vpack.c.b16 %v5999, %v5995
        %v6060 = vpack.c.b16 %v6000, %v5996
        %v6061 = vpack.c.b16 %v6001, %v5997
        %v6062 = vpack.c.b16 %v6006, %v6002
        %v6063 = vpack.c.b16 %v6007, %v6003
        %v6064 = vpack.c.b16 %v6008, %v6004
        %v6065 = vpack.c.b16 %v6009, %v6005
        %v6066 = vpack.c.b16 %v6014, %v6010
        %v6067 = vpack.c.b16 %v6015, %v6011
        %v6068 = vpack.c.b16 %v6016, %v6012
        %v6069 = vpack.c.b16 %v6017, %v6013
        %v6070 = vpack.c.b16 %v6022, %v6018
        %v6071 = vpack.c.b16 %v6023, %v6019
        %v6072 = vpack.c.b16 %v6024, %v6020
        %v6073 = vpack.c.b16 %v6025, %v6021
        %v6074 = vpack.c.b16 %v6030, %v6026
        %v6075 = vpack.c.b16 %v6031, %v6027
        %v6076 = vpack.c.b16 %v6032, %v6028
        %v6077 = vpack.c.b16 %v6033, %v6029
        %v6078 = vpack.c.b16 %v6038, %v6034
        %v6079 = vpack.c.b16 %v6039, %v6035
        %v6080 = vpack.c.b16 %v6040, %v6036
        %v6081 = vpack.c.b16 %v6041, %v6037
        %v6082 = vpack.c.b16 %v6046, %v6042
        %v6083 = vpack.c.b16 %v6047, %v6043
        %v6084 = vpack.c.b16 %v6048, %v6044
        %v6085 = vpack.c.b16 %v6049, %v6045
        %v6086 = vpack.c.b16 %v6054, %v6050
        %v6087 = vpack.c.b16 %v6055, %v6051
        %v6088 = vpack.c.b16 %v6056, %v6052
        %v6089 = vpack.c.b16 %v6057, %v6053
        %6122 = vmatprep.subr.bf16.mxu0 %v6059
        %6123 = vmatpush1.bf16.msra.mxu0 %v6058
        %6124 = vmatprep.subr.bf16.mxu0 %v6063
        %6125 = vmatpush1.bf16.msra.mxu0 %v6062
        %6126 = vmatprep.subr.bf16.mxu0 %v6067
        %6127 = vmatpush1.bf16.msra.mxu0 %v6066
        %6128 = vmatprep.subr.bf16.mxu0 %v6071
        %6129 = vmatpush1.bf16.msra.mxu0 %v6070
        %6130 = vmatprep.subr.bf16.mxu0 %v6075
        %6131 = vmatpush1.bf16.msra.mxu0 %v6074
        %6132 = vmatprep.subr.bf16.mxu0 %v6079
        %6133 = vmatpush1.bf16.msra.mxu0 %v6078
        %6134 = vmatprep.subr.bf16.mxu0 %v6083
        %6135 = vmatpush1.bf16.msra.mxu0 %v6082
        %6136 = vmatprep.subr.bf16.mxu0 %v6087
        %6137 = vmatpush1.bf16.msra.mxu0 %v6086
        %6138 = vmatprep.subr.bf16.mxu0 0
        %6139 = vmatpush1.bf16.msra.mxu0 0
        %6140 = vmatprep.subr.bf16.mxu0 0
        %6141 = vmatpush1.bf16.msra.mxu0 0
        %6142 = vmatprep.subr.bf16.mxu0 0
        %6143 = vmatpush1.bf16.msra.mxu0 0
        %6144 = vmatprep.subr.bf16.mxu0 0
        %6145 = vmatpush1.bf16.msra.mxu0 0
        %6146 = vmatprep.subr.bf16.mxu0 0
        %6147 = vmatpush1.bf16.msra.mxu0 0
        %6148 = vmatprep.subr.bf16.mxu0 0
        %6149 = vmatpush1.bf16.msra.mxu0 0
        %6150 = vmatprep.subr.bf16.mxu0 0
        %6151 = vmatpush1.bf16.msra.mxu0 0
        %6152 = vmatprep.subr.bf16.mxu0 0
        %6153 = vmatpush1.bf16.msra.mxu0 0
        %6154 = vmatprep.mubr.bf16.mxu0 0
        %6155 = vmatmul.mubr.bf16.gmra.mrb[0].mxu0 %v5650
        %v6156 = vpop.f32.mrb[0].mxu0
        %v6157 = vadd.f32 %v5915, %v6156
        %v6158 = vpop.f32.mrb[0].mxu0
        %v6159 = vadd.f32 %v5917, %v6158
        %v6160 = vpop.f32.mrb[0].mxu0
        %v6161 = vpop.f32.mrb[0].mxu0
        %6162 = vdwg.mxu0
        %6163 = vmatprep.subr.bf16.mxu0 %v6061
        %6164 = vmatpush1.bf16.msra.mxu0 %v6060
        %6165 = vmatprep.subr.bf16.mxu0 %v6065
        %6166 = vmatpush1.bf16.msra.mxu0 %v6064
        %6167 = vmatprep.subr.bf16.mxu0 %v6069
        %6168 = vmatpush1.bf16.msra.mxu0 %v6068
        %6169 = vmatprep.subr.bf16.mxu0 %v6073
        %6170 = vmatpush1.bf16.msra.mxu0 %v6072
        %6171 = vmatprep.subr.bf16.mxu0 %v6077
        %6172 = vmatpush1.bf16.msra.mxu0 %v6076
        %6173 = vmatprep.subr.bf16.mxu0 %v6081
        %6174 = vmatpush1.bf16.msra.mxu0 %v6080
        %6175 = vmatprep.subr.bf16.mxu0 %v6085
        %6176 = vmatpush1.bf16.msra.mxu0 %v6084
        %6177 = vmatprep.subr.bf16.mxu0 %v6089
        %6178 = vmatpush1.bf16.msra.mxu0 %v6088
        %6179 = vmatprep.subr.bf16.mxu0 0
        %6180 = vmatpush1.bf16.msra.mxu0 0
        %6181 = vmatprep.subr.bf16.mxu0 0
        %6182 = vmatpush1.bf16.msra.mxu0 0
        %6183 = vmatprep.subr.bf16.mxu0 0
        %6184 = vmatpush1.bf16.msra.mxu0 0
        %6185 = vmatprep.subr.bf16.mxu0 0
        %6186 = vmatpush1.bf16.msra.mxu0 0
        %6187 = vmatprep.subr.bf16.mxu0 0
        %6188 = vmatpush1.bf16.msra.mxu0 0
        %6189 = vmatprep.subr.bf16.mxu0 0
        %6190 = vmatpush1.bf16.msra.mxu0 0
        %6191 = vmatprep.subr.bf16.mxu0 0
        %6192 = vmatpush1.bf16.msra.mxu0 0
        %6193 = vmatprep.subr.bf16.mxu0 0
        %6194 = vmatpush1.bf16.msra.mxu0 0
        %6195 = vmatprep.mubr.bf16.mxu0 0
        %6196 = vmatmul.mubr.bf16.gmra.mrb[0].mxu0 %v5650
        %v6197 = vpop.f32.mrb[0].mxu0
        %v6198 = vadd.f32 %v5956, %v6197
        %v6199 = vpop.f32.mrb[0].mxu0
        %v6200 = vadd.f32 %v5958, %v6199
        %v6201 = vpop.f32.mrb[0].mxu0
        %v6202 = vpop.f32.mrb[0].mxu0
        %6203 = vdwg.mxu0
        %v6204 = vld [vmem:[#allocation14] sm:$0xf]
        %v6206 = vlaneseq
        %v6207 = vshrl.u32 %v6206, 7
        %v6208 = vsub.s32 0, %v6207
        %v6209 = vrot.slane %v6204, %v6208
        %v6210 = vlaneseq
        %v6211 = vshrl.u32 %v6210, 7
        %v6212 = vsub.s32 1, %v6211
        %v6213 = vrot.slane %v6204, %v6212
        %v6214 = vlaneseq
        %v6215 = vshrl.u32 %v6214, 7
        %v6216 = vsub.s32 2, %v6215
        %v6217 = vrot.slane %v6204, %v6216
        %v6218 = vlaneseq
        %v6219 = vshrl.u32 %v6218, 7
        %v6220 = vsub.s32 3, %v6219
        %v6221 = vrot.slane %v6204, %v6220
        %v6226 = vadd.f32 %v6157, %v6209
        %v6227 = vadd.f32 %v6159, %v6213
        %v6228 = vadd.f32 %v6198, %v6217
        %v6229 = vadd.f32 %v6200, %v6221
        %v6230 = vmax.f32 %v6226, 0.0
        %v6231 = vmax.f32 %v6227, 0.0
        %v6232 = vmax.f32 %v6228, 0.0
        %v6233 = vmax.f32 %v6229, 0.0
        %v6234 = vld [vmem:[#allocation16] sm:$0xf]
        %v6235 = vld [vmem:[#allocation16 + $0x4] sm:$0xf]
        %v6236 = vld [vmem:[#allocation16 + $0x8] sm:$0xf]
        %v6237 = vld [vmem:[#allocation16 + $0xc] sm:$0xf]
        %v6238 = vld [vmem:[#allocation16 + $0x10] sm:$0xf]
        %v6239 = vld [vmem:[#allocation16 + $0x14] sm:$0xf]
        %v6240 = vld [vmem:[#allocation16 + $0x18] sm:$0xf]
        %v6241 = vld [vmem:[#allocation16 + $0x1c] sm:$0xf]
        %v6242 = vld [vmem:[#allocation16 + $0x20] sm:$0xf]
        %v6243 = vld [vmem:[#allocation16 + $0x24] sm:$0xf]
        %v6244 = vld [vmem:[#allocation16 + $0x28] sm:$0xf]
        %v6245 = vld [vmem:[#allocation16 + $0x2c] sm:$0xf]
        %v6246 = vld [vmem:[#allocation16 + $0x30] sm:$0xf]
        %v6247 = vld [vmem:[#allocation16 + $0x34] sm:$0xf]
        %v6248 = vld [vmem:[#allocation16 + $0x38] sm:$0xf]
        %v6249 = vld [vmem:[#allocation16 + $0x3c] sm:$0xf]
        %v6250 = vld [vmem:[#allocation16 + $0x40] sm:$0xf]
        %v6251 = vld [vmem:[#allocation16 + $0x44] sm:$0xf]
        %v6252 = vld [vmem:[#allocation16 + $0x48] sm:$0xf]
        %v6253 = vld [vmem:[#allocation16 + $0x4c] sm:$0xf]
        %v6254 = vld [vmem:[#allocation16 + $0x50] sm:$0xf]
        %v6255 = vld [vmem:[#allocation16 + $0x54] sm:$0xf]
        %v6256 = vld [vmem:[#allocation16 + $0x58] sm:$0xf]
        %v6257 = vld [vmem:[#allocation16 + $0x5c] sm:$0xf]
        %v6258 = vld [vmem:[#allocation16 + $0x60] sm:$0xf]
        %v6259 = vld [vmem:[#allocation16 + $0x64] sm:$0xf]
        %v6260 = vld [vmem:[#allocation16 + $0x68] sm:$0xf]
        %v6261 = vld [vmem:[#allocation16 + $0x6c] sm:$0xf]
        %v6262 = vld [vmem:[#allocation16 + $0x70] sm:$0xf]
        %v6263 = vld [vmem:[#allocation16 + $0x74] sm:$0xf]
        %v6264 = vld [vmem:[#allocation16 + $0x78] sm:$0xf]
        %v6265 = vld [vmem:[#allocation16 + $0x7c] sm:$0xf]
        %v6266 = vld [vmem:[#allocation16 + $0x80] sm:$0xf]
        %v6267 = vld [vmem:[#allocation16 + $0x84] sm:$0xf]
        %v6268 = vld [vmem:[#allocation16 + $0x88] sm:$0xf]
        %v6269 = vld [vmem:[#allocation16 + $0x8c] sm:$0xf]
        %v6270 = vld [vmem:[#allocation16 + $0x90] sm:$0xf]
        %v6271 = vld [vmem:[#allocation16 + $0x94] sm:$0xf]
        %v6272 = vld [vmem:[#allocation16 + $0x98] sm:$0xf]
        %v6273 = vld [vmem:[#allocation16 + $0x9c] sm:$0xf]
        %v6274 = vld [vmem:[#allocation16 + $0xa0] sm:$0xf]
        %v6275 = vld [vmem:[#allocation16 + $0xa4] sm:$0xf]
        %v6276 = vld [vmem:[#allocation16 + $0xa8] sm:$0xf]
        %v6277 = vld [vmem:[#allocation16 + $0xac] sm:$0xf]
        %v6278 = vld [vmem:[#allocation16 + $0xb0] sm:$0xf]
        %v6279 = vld [vmem:[#allocation16 + $0xb4] sm:$0xf]
        %v6280 = vld [vmem:[#allocation16 + $0xb8] sm:$0xf]
        %v6281 = vld [vmem:[#allocation16 + $0xbc] sm:$0xf]
        %v6282 = vld [vmem:[#allocation16 + $0xc0] sm:$0xf]
        %v6283 = vld [vmem:[#allocation16 + $0xc4] sm:$0xf]
        %v6284 = vld [vmem:[#allocation16 + $0xc8] sm:$0xf]
        %v6285 = vld [vmem:[#allocation16 + $0xcc] sm:$0xf]
        %v6286 = vld [vmem:[#allocation16 + $0xd0] sm:$0xf]
        %v6287 = vld [vmem:[#allocation16 + $0xd4] sm:$0xf]
        %v6288 = vld [vmem:[#allocation16 + $0xd8] sm:$0xf]
        %v6289 = vld [vmem:[#allocation16 + $0xdc] sm:$0xf]
        %v6290 = vld [vmem:[#allocation16 + $0xe0] sm:$0xf]
        %v6291 = vld [vmem:[#allocation16 + $0xe4] sm:$0xf]
        %v6292 = vld [vmem:[#allocation16 + $0xe8] sm:$0xf]
        %v6293 = vld [vmem:[#allocation16 + $0xec] sm:$0xf]
        %v6294 = vld [vmem:[#allocation16 + $0xf0] sm:$0xf]
        %v6295 = vld [vmem:[#allocation16 + $0xf4] sm:$0xf]
        %v6296 = vld [vmem:[#allocation16 + $0xf8] sm:$0xf]
        %v6297 = vld [vmem:[#allocation16 + $0xfc] sm:$0xf]
        %v6298 = vunpack.c.l.bf16 %v6234
        %v6299 = vunpack.c.l.bf16 %v6235
        %v6300 = vunpack.c.l.bf16 %v6236
        %v6301 = vunpack.c.l.bf16 %v6237
        %v6302 = vunpack.c.l.bf16 %v6238
        %v6303 = vunpack.c.l.bf16 %v6239
        %v6304 = vunpack.c.l.bf16 %v6240
        %v6305 = vunpack.c.l.bf16 %v6241
        %v6306 = vunpack.c.l.bf16 %v6242
        %v6307 = vunpack.c.l.bf16 %v6243
        %v6308 = vunpack.c.l.bf16 %v6244
        %v6309 = vunpack.c.l.bf16 %v6245
        %v6310 = vunpack.c.l.bf16 %v6246
        %v6311 = vunpack.c.l.bf16 %v6247
        %v6312 = vunpack.c.l.bf16 %v6248
        %v6313 = vunpack.c.l.bf16 %v6249
        %v6314 = vunpack.c.l.bf16 %v6250
        %v6315 = vunpack.c.l.bf16 %v6251
        %v6316 = vunpack.c.l.bf16 %v6252
        %v6317 = vunpack.c.l.bf16 %v6253
        %v6318 = vunpack.c.l.bf16 %v6254
        %v6319 = vunpack.c.l.bf16 %v6255
        %v6320 = vunpack.c.l.bf16 %v6256
        %v6321 = vunpack.c.l.bf16 %v6257
        %v6322 = vunpack.c.l.bf16 %v6258
        %v6323 = vunpack.c.l.bf16 %v6259
        %v6324 = vunpack.c.l.bf16 %v6260
        %v6325 = vunpack.c.l.bf16 %v6261
        %v6326 = vunpack.c.l.bf16 %v6262
        %v6327 = vunpack.c.l.bf16 %v6263
        %v6328 = vunpack.c.l.bf16 %v6264
        %v6329 = vunpack.c.l.bf16 %v6265
        %v6330 = vunpack.c.l.bf16 %v6266
        %v6331 = vunpack.c.l.bf16 %v6267
        %v6332 = vunpack.c.l.bf16 %v6268
        %v6333 = vunpack.c.l.bf16 %v6269
        %v6334 = vunpack.c.l.bf16 %v6270
        %v6335 = vunpack.c.l.bf16 %v6271
        %v6336 = vunpack.c.l.bf16 %v6272
        %v6337 = vunpack.c.l.bf16 %v6273
        %v6338 = vunpack.c.l.bf16 %v6274
        %v6339 = vunpack.c.l.bf16 %v6275
        %v6340 = vunpack.c.l.bf16 %v6276
        %v6341 = vunpack.c.l.bf16 %v6277
        %v6342 = vunpack.c.l.bf16 %v6278
        %v6343 = vunpack.c.l.bf16 %v6279
        %v6344 = vunpack.c.l.bf16 %v6280
        %v6345 = vunpack.c.l.bf16 %v6281
        %v6346 = vunpack.c.l.bf16 %v6282
        %v6347 = vunpack.c.l.bf16 %v6283
        %v6348 = vunpack.c.l.bf16 %v6284
        %v6349 = vunpack.c.l.bf16 %v6285
        %v6350 = vunpack.c.l.bf16 %v6286
        %v6351 = vunpack.c.l.bf16 %v6287
        %v6352 = vunpack.c.l.bf16 %v6288
        %v6353 = vunpack.c.l.bf16 %v6289
        %v6354 = vunpack.c.l.bf16 %v6290
        %v6355 = vunpack.c.l.bf16 %v6291
        %v6356 = vunpack.c.l.bf16 %v6292
        %v6357 = vunpack.c.l.bf16 %v6293
        %v6358 = vunpack.c.l.bf16 %v6294
        %v6359 = vunpack.c.l.bf16 %v6295
        %v6360 = vunpack.c.l.bf16 %v6296
        %v6361 = vunpack.c.l.bf16 %v6297
        %v6362 = vld [vmem:[#allocation17] sm:$0x1]
        %6363 = vmatprep.subr.mxu0 0.0
        %6364 = vmatpush1.msra.mxu0 %v6298
        %6365 = vmatprep.subr.mxu0 0.0
        %6366 = vmatpush1.msra.mxu0 %v6299
        %6367 = vmatprep.subr.mxu0 0.0
        %6368 = vmatpush1.msra.mxu0 %v6300
        %6369 = vmatprep.subr.mxu0 0.0
        %6370 = vmatpush1.msra.mxu0 %v6301
        %6371 = vmatprep.subr.mxu0 0.0
        %6372 = vmatpush1.msra.mxu0 %v6302
        %6373 = vmatprep.subr.mxu0 0.0
        %6374 = vmatpush1.msra.mxu0 %v6303
        %6375 = vmatprep.subr.mxu0 0.0
        %6376 = vmatpush1.msra.mxu0 %v6304
        %6377 = vmatprep.subr.mxu0 0.0
        %6378 = vmatpush1.msra.mxu0 %v6305
        %6379 = vmatprep.subr.mxu0 0.0
        %6380 = vmatpush1.msra.mxu0 %v6306
        %6381 = vmatprep.subr.mxu0 0.0
        %6382 = vmatpush1.msra.mxu0 %v6307
        %6383 = vmatprep.subr.mxu0 0.0
        %6384 = vmatpush1.msra.mxu0 %v6308
        %6385 = vmatprep.subr.mxu0 0.0
        %6386 = vmatpush1.msra.mxu0 %v6309
        %6387 = vmatprep.subr.mxu0 0.0
        %6388 = vmatpush1.msra.mxu0 %v6310
        %6389 = vmatprep.subr.mxu0 0.0
        %6390 = vmatpush1.msra.mxu0 %v6311
        %6391 = vmatprep.subr.mxu0 0.0
        %6392 = vmatpush1.msra.mxu0 %v6312
        %6393 = vmatprep.subr.mxu0 0.0
        %6394 = vmatpush1.msra.mxu0 %v6313
        %6395 = vmatprep.subr.mxu0 0.0
        %6396 = vmatpush1.msra.mxu0 %v6314
        %6397 = vmatprep.subr.mxu0 0.0
        %6398 = vmatpush1.msra.mxu0 %v6315
        %6399 = vmatprep.subr.mxu0 0.0
        %6400 = vmatpush1.msra.mxu0 %v6316
        %6401 = vmatprep.subr.mxu0 0.0
        %6402 = vmatpush1.msra.mxu0 %v6317
        %6403 = vmatprep.subr.mxu0 0.0
        %6404 = vmatpush1.msra.mxu0 %v6318
        %6405 = vmatprep.subr.mxu0 0.0
        %6406 = vmatpush1.msra.mxu0 %v6319
        %6407 = vmatprep.subr.mxu0 0.0
        %6408 = vmatpush1.msra.mxu0 %v6320
        %6409 = vmatprep.subr.mxu0 0.0
        %6410 = vmatpush1.msra.mxu0 %v6321
        %6411 = vmatprep.subr.mxu0 0.0
        %6412 = vmatpush1.msra.mxu0 %v6322
        %6413 = vmatprep.subr.mxu0 0.0
        %6414 = vmatpush1.msra.mxu0 %v6323
        %6415 = vmatprep.subr.mxu0 0.0
        %6416 = vmatpush1.msra.mxu0 %v6324
        %6417 = vmatprep.subr.mxu0 0.0
        %6418 = vmatpush1.msra.mxu0 %v6325
        %6419 = vmatprep.subr.mxu0 0.0
        %6420 = vmatpush1.msra.mxu0 %v6326
        %6421 = vmatprep.subr.mxu0 0.0
        %6422 = vmatpush1.msra.mxu0 %v6327
        %6423 = vmatprep.subr.mxu0 0.0
        %6424 = vmatpush1.msra.mxu0 %v6328
        %6425 = vmatprep.subr.mxu0 0.0
        %6426 = vmatpush1.msra.mxu0 %v6329
        %6427 = vmatprep.mubr.f32.mxu0 %v6231
        %6428 = vmatmul.mubr.f32.gmra.mrb[0].mxu0 %v6230
        %v6429 = vpop.f32.mrb[0].mxu0
        %v6430 = vadd.f32 %v6362, %v6429
        %v6431 = vpop.f32.mrb[0].mxu0
        %6432 = vdwg.mxu0
        %6433 = vmatprep.subr.mxu0 0.0
        %6434 = vmatpush1.msra.mxu0 %v6330
        %6435 = vmatprep.subr.mxu0 0.0
        %6436 = vmatpush1.msra.mxu0 %v6331
        %6437 = vmatprep.subr.mxu0 0.0
        %6438 = vmatpush1.msra.mxu0 %v6332
        %6439 = vmatprep.subr.mxu0 0.0
        %6440 = vmatpush1.msra.mxu0 %v6333
        %6441 = vmatprep.subr.mxu0 0.0
        %6442 = vmatpush1.msra.mxu0 %v6334
        %6443 = vmatprep.subr.mxu0 0.0
        %6444 = vmatpush1.msra.mxu0 %v6335
        %6445 = vmatprep.subr.mxu0 0.0
        %6446 = vmatpush1.msra.mxu0 %v6336
        %6447 = vmatprep.subr.mxu0 0.0
        %6448 = vmatpush1.msra.mxu0 %v6337
        %6449 = vmatprep.subr.mxu0 0.0
        %6450 = vmatpush1.msra.mxu0 %v6338
        %6451 = vmatprep.subr.mxu0 0.0
        %6452 = vmatpush1.msra.mxu0 %v6339
        %6453 = vmatprep.subr.mxu0 0.0
        %6454 = vmatpush1.msra.mxu0 %v6340
        %6455 = vmatprep.subr.mxu0 0.0
        %6456 = vmatpush1.msra.mxu0 %v6341
        %6457 = vmatprep.subr.mxu0 0.0
        %6458 = vmatpush1.msra.mxu0 %v6342
        %6459 = vmatprep.subr.mxu0 0.0
        %6460 = vmatpush1.msra.mxu0 %v6343
        %6461 = vmatprep.subr.mxu0 0.0
        %6462 = vmatpush1.msra.mxu0 %v6344
        %6463 = vmatprep.subr.mxu0 0.0
        %6464 = vmatpush1.msra.mxu0 %v6345
        %6465 = vmatprep.subr.mxu0 0.0
        %6466 = vmatpush1.msra.mxu0 %v6346
        %6467 = vmatprep.subr.mxu0 0.0
        %6468 = vmatpush1.msra.mxu0 %v6347
        %6469 = vmatprep.subr.mxu0 0.0
        %6470 = vmatpush1.msra.mxu0 %v6348
        %6471 = vmatprep.subr.mxu0 0.0
        %6472 = vmatpush1.msra.mxu0 %v6349
        %6473 = vmatprep.subr.mxu0 0.0
        %6474 = vmatpush1.msra.mxu0 %v6350
        %6475 = vmatprep.subr.mxu0 0.0
        %6476 = vmatpush1.msra.mxu0 %v6351
        %6477 = vmatprep.subr.mxu0 0.0
        %6478 = vmatpush1.msra.mxu0 %v6352
        %6479 = vmatprep.subr.mxu0 0.0
        %6480 = vmatpush1.msra.mxu0 %v6353
        %6481 = vmatprep.subr.mxu0 0.0
        %6482 = vmatpush1.msra.mxu0 %v6354
        %6483 = vmatprep.subr.mxu0 0.0
        %6484 = vmatpush1.msra.mxu0 %v6355
        %6485 = vmatprep.subr.mxu0 0.0
        %6486 = vmatpush1.msra.mxu0 %v6356
        %6487 = vmatprep.subr.mxu0 0.0
        %6488 = vmatpush1.msra.mxu0 %v6357
        %6489 = vmatprep.subr.mxu0 0.0
        %6490 = vmatpush1.msra.mxu0 %v6358
        %6491 = vmatprep.subr.mxu0 0.0
        %6492 = vmatpush1.msra.mxu0 %v6359
        %6493 = vmatprep.subr.mxu0 0.0
        %6494 = vmatpush1.msra.mxu0 %v6360
        %6495 = vmatprep.subr.mxu0 0.0
        %6496 = vmatpush1.msra.mxu0 %v6361
        %6497 = vmatprep.mubr.f32.mxu0 %v6233
        %6498 = vmatmul.mubr.f32.gmra.mrb[0].mxu0 %v6232
        %v6499 = vpop.f32.mrb[0].mxu0
        %v6500 = vadd.f32 %v6430, %v6499
        %v6501 = vpop.f32.mrb[0].mxu0
        %6502 = vdwg.mxu0
        %6503 = vst [vmem:[%s514] sm:$0x1] %v6500
        %s6504 = sand.u32 %s275, 1
        %s6505 = scalar_lea.sflag [#allocation4], %s6504
        %s6506 = sand.u32 %s275, 1
        %s6507 = scalar_lea.vmem [#allocation19], %s6506
        // Predicated region
        $region105: #{dqn_forward.1} parent=63 // pred_check
          %p6508 = pneg %p285
        $region106: #{dqn_forward.1} parent=63 // pred_check_branch
          %6510 = sbr.rel (%p6508) target = $region108
        $region107: #{dqn_forward.1} parent=63 // pred_region
          %s6512 = ssub.s32 16, 16
          %6513 = vsyncadd %s6505, %s6512
          %s6514 = smul.addr %s31, 16
          %s6515 = scalar_lea.hbm %s11, %s6514
          %s6517 = sshll.u32 %s6507, 4
          %s6518 = int_to_ptr.vmem [resolvable:$true] %s6517
          %6520 = dma.vmem_to_hbm [thread:$0]  %s6518, 16, %s6515, %s6505
        $region108: #{dqn_forward.1} parent=63 // pred_fallthru
          _
      $region64: #{dqn_forward.1} parent=5 // pred_fallthru
        _
      %p6521 = scmp.le.s32.totalorder 2, %s26
      // Predicated region
      $region109: #{dqn_forward.1} parent=5 // pred_check
        %p6522 = pneg %p6521
      $region110: #{dqn_forward.1} parent=5 // pred_check_branch
        %6524 = sbr.rel (%p6522) target = $region112
      $region111: #{dqn_forward.1} parent=5 // pred_region
        %s6525 = ssub.s32 %s26, 2
        // Predicated region
        $region113: #{dqn_forward.1} parent=111 // pred_check
          %p6526 = pneg %p291
        $region114: #{dqn_forward.1} parent=111 // pred_check_branch
          %6528 = sbr.rel (%p6526) target = $region116
        $region115: #{dqn_forward.1} parent=111 // pred_region
          %s6529 = sand.u32 %s276, 1
          %s6530 = scalar_lea.sflag [#allocation4], %s6529
          %s6531 = sand.u32 %s276, 1
          %s6532 = scalar_lea.vmem [#allocation19], %s6531
          %6533 = dma.done %s6530, 16
        $region116: #{dqn_forward.1} parent=111 // pred_fallthru
          _
      $region112: #{dqn_forward.1} parent=5 // pred_fallthru
        _
    $region6: #{dqn_forward.1} parent=1 // loop_footer
      %s30 = sadd.s32 1, %s26
    $region7: #{dqn_forward.1} parent=1 // loop_footer_branch
      %25 = sbr.rel target = $region3
    $region8: #{dqn_forward.1} parent=1 // loop_exit
      _
    %6534 = vsyncpa [#allocation3], 1
    %s6535 = scalar_lea.sflag [#allocation3], 1
    %6536 = vsyncpa %s6535, 1
    %6537 = vsyncpa [#allocation6], 1
    %6538 = vsyncpa [#allocation9], 1
    %6539 = vsyncpa [#allocation12], 1
    %6540 = vsyncpa [#allocation15], 1
    %6541 = vsyncpa [#allocation18], 1
    %6542 = vsyncpa [#allocation4], 1
    %s6543 = scalar_lea.sflag [#allocation4], 1
    %6544 = vsyncpa %s6543, 1

</llo_original>
